<compile_context>
chip_gen: v5e
topology: v5e:2x2
jax: 0.10.0
libtpu: 0.0.40
codegen_flags: <defaults>
</compile_context>

<pallas_src>
import functools

import jax
import jax.numpy as jnp
from jax import lax
from jax.experimental import pallas as pl
from jax.experimental.pallas import tpu as pltpu


def _round_up(x, m):
    return ((x + m - 1) // m) * m


def _choose_t_tile(T, B_pad, E, H_pad, V_t, tile_budget_bytes=24 * 1024 * 1024):
    """Pick the time tile from a VMEM budget (conservative for v7x's 64 MiB/TC),
    aiming for >= 256 MXU rows per batched push (v6e/v7x 2x256^2 array)."""
    def tile_bytes(tt):
        rows = tt * B_pad
        return (2 * rows * E * 2            # x tile, bf16, double-buffered
                + 2 * rows * V_t * 4        # out tile, f32, double-buffered
                + rows * H_pad * 2          # h_all scratch (bf16)
                + rows * 3 * H_pad * 4)     # fused gate pre-activations (f32)

    target_rows = 256
    tt = max(1, min(T, -(-target_rows // B_pad)))
    while tt > 1 and tile_bytes(tt) > tile_budget_bytes:
        tt = (tt + 1) // 2
    return tt


def gru_dense_kernel(x_ref, h0_ref, wi_ref, wh_ref, bi_ref, bhn_ref,
                     wd_ref, bd_ref,
                     out_ref, ht_ref,
                     h_state, h_all, gi_s,
                     *, t_total):
    """Grid = (time tiles [arbitrary], vocab tiles [arbitrary]).

    x_ref  : (t_tile*B_pad, E)      bf16 time-major slab (row = t*B_pad + b)
    h0_ref : (B_pad, H_pad)         f32 initial hidden state
    wi_ref : (E, 3*H_pad)           bf16 fused input weights [r | z | n]
    wh_ref : (H_pad, 3*H_pad)       f32 fused hidden weights [r | z | n]
    bi_ref : (1, 3*H_pad)           f32 fused biases [b_ir+b_hr | b_iz+b_hz | b_in]
    bhn_ref: (1, H_pad)             f32 (stays inside r * (.))
    wd_ref : (H_pad, V_t)  bf16, bd_ref: (1, V_t) f32  -- dense head V-tile
    out_ref: (t_tile*B_pad, V_t)    f32 logits slab tile
    ht_ref : (B_pad, H_pad)         f32 final hidden state (resident output)
    """
    rows, _ = x_ref.shape
    B, Hp = h0_ref.shape
    Tt = rows // B

    t_idx = pl.program_id(0)
    v_idx = pl.program_id(1)

    # The serial recurrence runs once per time tile (vocab tile 0); the hidden
    # states for the whole tile persist in h_all for the remaining vocab tiles.
    @pl.when(v_idx == 0)
    def _recurrence():
        @pl.when(t_idx == 0)
        def _init():
            h_state[...] = h0_ref[...]

        # Fused batched input projection for the whole tile (hoisted out of the
        # recurrence): bf16 x bf16 -> f32 on the MXU, biases pre-folded.
        gi_s[...] = (jnp.dot(x_ref[...], wi_ref[...],
                             preferred_element_type=jnp.float32)
                     + bi_ref[...])

        wh = wh_ref[...]
        b_hn = jnp.broadcast_to(bhn_ref[...], (B, Hp))   # hoisted broadcast

        def step(t, h):
            r0 = pl.multiple_of(t * B, B)
            gi = gi_s[pl.ds(r0, B), :]
            # One fused (B, Hp) x (Hp, 3*Hp) MXU push per step; gate slices are
            # 128-lane aligned because Hp % 128 == 0.
            gh = jnp.dot(h, wh, preferred_element_type=jnp.float32)
            r = jax.nn.sigmoid(gi[:, 0:Hp] + gh[:, 0:Hp])
            z = jax.nn.sigmoid(gi[:, Hp:2 * Hp] + gh[:, Hp:2 * Hp])
            n = jnp.tanh(gi[:, 2 * Hp:3 * Hp] + r * (gh[:, 2 * Hp:3 * Hp] + b_hn))
            h_new = (1.0 - z) * n + z * h
            h_all[pl.ds(r0, B), :] = h_new.astype(h_all.dtype)

            # Exact (f32) final hidden state, robust to time padding.
            @pl.when(t_idx * Tt + t == t_total - 1)
            def _capture():
                ht_ref[...] = h_new

            return h_new

        unroll = Tt if Tt <= 8 else 8
        h_final = lax.fori_loop(0, Tt, step, h_state[...], unroll=unroll)
        h_state[...] = h_final

    # Dense head for this (time tile, vocab tile): batched over the whole time
    # tile, bf16 x bf16 -> f32, single lane-dense 2-D store.
    out_ref[...] = (jnp.dot(h_all[...], wd_ref[...],
                            preferred_element_type=jnp.float32)
                    + bd_ref[...])


def _spec(shape, index_map, *, single_buffer=False):
    if single_buffer:
        return pl.BlockSpec(shape, index_map, pipeline_mode=pl.Buffered(1))
    return pl.BlockSpec(shape, index_map)


@functools.partial(jax.jit, static_argnames=("single_buffer_weights",))
def text_generator_forward(sentence, state, params, *, single_buffer_weights=True):
    """Mirrors TextGenerator.forward(sentence, state) for mode='gru', num_layers=1.

    sentence: int32 (B, T)
    state   : float32 (1, B, H)
    returns : (logits (B, V, T), new_state (1, B, H))
    """
    embed = params["embed"].astype(jnp.bfloat16)
    B, T = sentence.shape
    E = embed.shape[1]
    H = params["w_hr"].shape[0]
    V = params["w_dense"].shape[1]

    # Pad to TPU-friendly shapes.  Zero padding is exact: padded hidden columns
    # stay 0 through the GRU update (their z gate is sigmoid(0)=0.5 applied to
    # a zero state / zero candidate) and padded dense rows contribute 0.
    B_pad = _round_up(B, 8)
    H_pad = _round_up(H, 128)
    V_pad = _round_up(V, 128)
    V_t = min(V_pad, 1024)                 # V-tiled dense head
    V_pad = _round_up(V_pad, V_t)

    t_tile = _choose_t_tile(T, B_pad, E, H_pad, V_t)
    T_pad = _round_up(T, t_tile)

    # Embedding gather directly into the time-major 2-D slab (row = t*B_pad+b).
    sent_p = jnp.zeros((B_pad, T_pad), sentence.dtype).at[:B, :T].set(sentence)
    x_slab = jnp.take(embed, sent_p.T.reshape(T_pad * B_pad), axis=0)

    h0 = jnp.zeros((B_pad, H_pad), jnp.float32).at[:B, :H].set(state[0])

    # Fused per-gate weights [r | z | n], each gate padded to H_pad lanes.
    wi = jnp.zeros((E, 3 * H_pad), jnp.float32)
    wh = jnp.zeros((H_pad, 3 * H_pad), jnp.float32)
    bi = jnp.zeros((1, 3 * H_pad), jnp.float32)
    gates = (
        (params["w_ir"], params["w_hr"], params["b_ir"] + params["b_hr"]),
        (params["w_iz"], params["w_hz"], params["b_iz"] + params["b_hz"]),
        (params["w_in"], params["w_hn"], params["b_in"]),
    )
    for g, (wig, whg, big) in enumerate(gates):
        wi = wi.at[:, g * H_pad:g * H_pad + H].set(wig)
        wh = wh.at[:H, g * H_pad:g * H_pad + H].set(whg)
        bi = bi.at[:, g * H_pad:g * H_pad + H].set(big)
    wi = wi.astype(jnp.bfloat16)   # big, streamed through the MXU in bf16
    # wh stays f32: it is small and keeps the serial f32 hidden-state carry exact.

    b_hn = jnp.zeros((1, H_pad), jnp.float32).at[:, :H].set(params["b_hn"])
    wd = (jnp.zeros((H_pad, V_pad), jnp.float32)
          .at[:H, :V].set(params["w_dense"]).astype(jnp.bfloat16))
    bd = jnp.zeros((1, V_pad), jnp.float32).at[:, :V].set(params["b_dense"])

    rows_t = t_tile * B_pad
    grid = (T_pad // t_tile, V_pad // V_t)
    single_head = single_buffer_weights and grid[1] == 1
    const2 = lambda t, v: (0, 0)

    out_slab, h_t = pl.pallas_call(
        functools.partial(gru_dense_kernel, t_total=T),
        out_shape=(
            jax.ShapeDtypeStruct((T_pad * B_pad, V_pad), jnp.float32),
            jax.ShapeDtypeStruct((B_pad, H_pad), jnp.float32),
        ),
        grid_spec=pltpu.PrefetchScalarGridSpec(
            num_scalar_prefetch=0,
            grid=grid,
            in_specs=[
                pl.BlockSpec((rows_t, E), lambda t, v: (t, 0)),      # x slab
                _spec((B_pad, H_pad), const2, single_buffer=single_buffer_weights),
                _spec((E, 3 * H_pad), const2, single_buffer=single_buffer_weights),
                _spec((H_pad, 3 * H_pad), const2, single_buffer=single_buffer_weights),
                _spec((1, 3 * H_pad), const2, single_buffer=single_buffer_weights),
                _spec((1, H_pad), const2, single_buffer=single_buffer_weights),
                _spec((H_pad, V_t), lambda t, v: (0, v), single_buffer=single_head),
                _spec((1, V_t), lambda t, v: (0, v), single_buffer=single_head),
            ],
            out_specs=(
                pl.BlockSpec((rows_t, V_t), lambda t, v: (t, v)),    # logits slab
                pl.BlockSpec((B_pad, H_pad), const2),                # final hidden
            ),
            scratch_shapes=[
                pltpu.VMEM((B_pad, H_pad), jnp.float32),             # hidden carry
                pltpu.VMEM((rows_t, H_pad), jnp.bfloat16),           # h_all (head LHS)
                pltpu.VMEM((rows_t, 3 * H_pad), jnp.float32),        # fused gate pre-acts
            ],
        ),
        compiler_params=pltpu.CompilerParams(
            # T carries the hidden state, V revisits it -> both "arbitrary".
            dimension_semantics=("arbitrary", "arbitrary"),
            vmem_limit_bytes=48 * 1024 * 1024,
        ),
    )(x_slab, h0, wi, wh, bi, b_hn, wd, bd)

    logits = jnp.transpose(
        out_slab.reshape(T_pad, B_pad, V_pad)[:T, :B, :V], (1, 2, 0))   # (B, V, T)
    new_state = h_t[:B, :H][None, :, :]                                 # (1, B, H)
    return logits, new_state


def reference_forward(sentence, state, params):
    """Pure-JAX reference (matches PyTorch GRU [r,z,n] gate math)."""
    x = jnp.take(params["embed"], sentence, axis=0)                  # (B, T, E)
    h0 = state[0]

    def step(h, x_t):
        r = jax.nn.sigmoid(x_t @ params["w_ir"] + params["b_ir"]
                           + h @ params["w_hr"] + params["b_hr"])
        z = jax.nn.sigmoid(x_t @ params["w_iz"] + params["b_iz"]
                           + h @ params["w_hz"] + params["b_hz"])
        n = jnp.tanh(x_t @ params["w_in"] + params["b_in"]
                     + r * (h @ params["w_hn"] + params["b_hn"]))
        h_new = (1.0 - z) * n + z * h
        return h_new, h_new

    h_final, hs = lax.scan(step, h0, jnp.transpose(x, (1, 0, 2)))    # hs: (T, B, H)
    logits = hs @ params["w_dense"] + params["b_dense"]              # (T, B, V)
    return jnp.transpose(logits, (1, 2, 0)), h_final[None]


def init_params(key, vocab_size, embedding_size, hidden_size):
    """Deterministic synthetic parameters matching the nn.Module's shapes."""
    H = hidden_size
    ks = jax.random.split(key, 15)
    bound = 1.0 / float(H) ** 0.5
    u = lambda k, shape: jax.random.uniform(k, shape, jnp.float32, -bound, bound)
    return {
        "embed": jax.random.normal(ks[0], (vocab_size, embedding_size), jnp.float32),
        "w_ir": u(ks[1], (embedding_size, H)),
        "w_iz": u(ks[2], (embedding_size, H)),
        "w_in": u(ks[3], (embedding_size, H)),
        "w_hr": u(ks[4], (H, H)),
        "w_hz": u(ks[5], (H, H)),
        "w_hn": u(ks[6], (H, H)),
        "b_ir": u(ks[7], (1, H)),
        "b_iz": u(ks[8], (1, H)),
        "b_in": u(ks[9], (1, H)),
        "b_hr": u(ks[10], (1, H)),
        "b_hz": u(ks[11], (1, H)),
        "b_hn": u(ks[12], (1, H)),
        "w_dense": u(ks[13], (H, vocab_size)),
        "b_dense": u(ks[14], (1, vocab_size)),
    }


if __name__ == "__main__":
    batch = 2
    seq = 8
    embedding_size = 16
    hidden_size = 32
    vocab_size = 64
    num_layers = 1

    key = jax.random.PRNGKey(0)
    k_param, k_tok = jax.random.split(key)
    params = init_params(k_param, vocab_size, embedding_size, hidden_size)

    sentence = jax.random.randint(k_tok, (batch, seq), 0, vocab_size, dtype=jnp.int32)
    state = jnp.zeros((num_layers, batch, hidden_size), jnp.float32)  # begin_state()

    try:
        logits, new_state = text_generator_forward(
            sentence, state, params, single_buffer_weights=True)
        jax.block_until_ready((logits, new_state))
    except Exception:
        # Fallback if single-buffered (pl.Buffered(1)) weight specs are not
        # supported by the installed Pallas version.
        logits, new_state = text_generator_forward(
            sentence, state, params, single_buffer_weights=False)
        jax.block_until_ready((logits, new_state))

    assert logits.shape == (batch, vocab_size, seq)
    assert new_state.shape == (num_layers, batch, hidden_size)

    # Compare against an f32 reference using bf16-rounded large weights (the
    # kernel keeps those weights in bf16 for the MXU).
    ref_params = dict(params)
    for k in ("embed", "w_ir", "w_iz", "w_in", "w_dense"):
        ref_params[k] = params[k].astype(jnp.bfloat16).astype(jnp.float32)
    ref_logits, ref_state = reference_forward(sentence, state, ref_params)

    assert jnp.allclose(logits, ref_logits, atol=2e-2, rtol=2e-2)
    assert jnp.allclose(new_state, ref_state, atol=2e-2, rtol=2e-2)

    print("KERNEL_OK")
</pallas_src>

<mosaic_0001>
module attributes {stable_mosaic.version = 11 : i64} {
  func.func @gru_dense_kernel(%arg0: i32, %arg1: i32, %arg2: memref<64x16xbf16, #tpu.memory_space<vmem>>, %arg3: memref<8x128xf32, #tpu.memory_space<vmem>>, %arg4: memref<16x384xbf16, #tpu.memory_space<vmem>>, %arg5: memref<128x384xf32, #tpu.memory_space<vmem>>, %arg6: memref<1x384xf32, #tpu.memory_space<vmem>>, %arg7: memref<1x128xf32, #tpu.memory_space<vmem>>, %arg8: memref<128x128xbf16, #tpu.memory_space<vmem>>, %arg9: memref<1x128xf32, #tpu.memory_space<vmem>>, %arg10: memref<64x128xf32, #tpu.memory_space<vmem>>, %arg11: memref<8x128xf32, #tpu.memory_space<vmem>>, %arg12: memref<8x128xf32, #tpu.memory_space<vmem>>, %arg13: memref<64x128xbf16, #tpu.memory_space<vmem>>, %arg14: memref<64x384xf32, #tpu.memory_space<vmem>>) attributes {dimension_semantics = [#tpu.dimension_semantics<arbitrary>, #tpu.dimension_semantics<arbitrary>], iteration_bounds = array<i64: 1, 1>, scalar_prefetch = 0 : i64, scratch_operands = 3 : i64, tpu.core_type = #tpu.core_type<tc>, window_params = [{transform_indices = @transform_0, window_bounds = array<i64: 64, 16>}, {pipeline_mode = #tpu.pipeline_mode<synchronous>, transform_indices = @transform_1, window_bounds = array<i64: 8, 128>}, {pipeline_mode = #tpu.pipeline_mode<synchronous>, transform_indices = @transform_2, window_bounds = array<i64: 16, 384>}, {pipeline_mode = #tpu.pipeline_mode<synchronous>, transform_indices = @transform_3, window_bounds = array<i64: 128, 384>}, {pipeline_mode = #tpu.pipeline_mode<synchronous>, transform_indices = @transform_4, window_bounds = array<i64: 1, 384>}, {pipeline_mode = #tpu.pipeline_mode<synchronous>, transform_indices = @transform_5, window_bounds = array<i64: 1, 128>}, {pipeline_mode = #tpu.pipeline_mode<synchronous>, transform_indices = @transform_6, window_bounds = array<i64: 128, 128>}, {pipeline_mode = #tpu.pipeline_mode<synchronous>, transform_indices = @transform_7, window_bounds = array<i64: 1, 128>}, {transform_indices = @transform_8, window_bounds = array<i64: 64, 128>}, {pipeline_mode = #tpu.pipeline_mode<synchronous>, transform_indices = @transform_9, window_bounds = array<i64: 8, 128>}]} {
    %c0_i32 = arith.constant 0 : i32
    %0 = arith.cmpi eq, %arg1, %c0_i32 : i32
    %1 = arith.extui %0 : i1 to i32
    %c0_i32_0 = arith.constant 0 : i32
    %2 = arith.cmpi ne, %1, %c0_i32_0 : i32
    scf.if %2 {
      %c0_i32_8 = arith.constant 0 : i32
      %10 = arith.cmpi eq, %arg0, %c0_i32_8 : i32
      %11 = arith.extui %10 : i1 to i32
      %c0_i32_9 = arith.constant 0 : i32
      %12 = arith.cmpi ne, %11, %c0_i32_9 : i32
      scf.if %12 {
        %c0_108 = arith.constant 0 : index
        %c0_109 = arith.constant 0 : index
        %346 = vector.load %arg3[%c0_108, %c0_109] : memref<8x128xf32, #tpu.memory_space<vmem>>, vector<8x128xf32>
        %c0_110 = arith.constant 0 : index
        %c0_111 = arith.constant 0 : index
        %347 = vector.load %arg12[%c0_110, %c0_111] : memref<8x128xf32, #tpu.memory_space<vmem>>, vector<8x128xf32>
        tpu.vector_store %arg12[%c0_110, %c0_111], %346 {strides = array<i32>} : memref<8x128xf32, #tpu.memory_space<vmem>>, vector<8x128xf32>,
      } else {
      }
      %c0_10 = arith.constant 0 : index
      %c0_11 = arith.constant 0 : index
      %13 = vector.load %arg2[%c0_10, %c0_11] : memref<64x16xbf16, #tpu.memory_space<vmem>>, vector<64x16xbf16>
      %c0_12 = arith.constant 0 : index
      %c0_13 = arith.constant 0 : index
      %14 = vector.load %arg4[%c0_12, %c0_13] : memref<16x384xbf16, #tpu.memory_space<vmem>>, vector<16x384xbf16>
      %cst_14 = arith.constant dense<0.000000e+00> : vector<64x384xf32>
      %15 = tpu.matmul %13, %14, %cst_14 {dimension_numbers = #tpu.dot_dimension_numbers<[1], [0], [0], [1], [0, 0, 1, 1], [], []>} : vector<64x16xbf16>, vector<16x384xbf16>, vector<64x384xf32> -> vector<64x384xf32>
      %c0_15 = arith.constant 0 : index
      %c0_16 = arith.constant 0 : index
      %16 = vector.load %arg6[%c0_15, %c0_16] : memref<1x384xf32, #tpu.memory_space<vmem>>, vector<1x384xf32>
      %17 = vector.broadcast %16 : vector<1x384xf32> to vector<64x384xf32>
      %18 = arith.addf %15, %17 : vector<64x384xf32>
      %c0_17 = arith.constant 0 : index
      %c0_18 = arith.constant 0 : index
      %19 = vector.load %arg14[%c0_17, %c0_18] : memref<64x384xf32, #tpu.memory_space<vmem>>, vector<64x384xf32>
      tpu.vector_store %arg14[%c0_17, %c0_18], %18 {strides = array<i32>} : memref<64x384xf32, #tpu.memory_space<vmem>>, vector<64x384xf32>,
      %c0_19 = arith.constant 0 : index
      %c0_20 = arith.constant 0 : index
      %20 = vector.load %arg5[%c0_19, %c0_20] : memref<128x384xf32, #tpu.memory_space<vmem>>, vector<128x384xf32>
      %c0_21 = arith.constant 0 : index
      %c0_22 = arith.constant 0 : index
      %21 = vector.load %arg7[%c0_21, %c0_22] : memref<1x128xf32, #tpu.memory_space<vmem>>, vector<1x128xf32>
      %22 = vector.shape_cast %21 : vector<1x128xf32> to vector<1x128xf32>
      %23 = vector.broadcast %22 : vector<1x128xf32> to vector<8x128xf32>
      %c0_23 = arith.constant 0 : index
      %c0_24 = arith.constant 0 : index
      %24 = vector.load %arg12[%c0_23, %c0_24] : memref<8x128xf32, #tpu.memory_space<vmem>>, vector<8x128xf32>
      %c0_i32_25 = arith.constant 0 : i32
      %c8_i32 = arith.constant 8 : i32
      %25 = arith.muli %c0_i32_25, %c8_i32 : i32
      %26 = tpu.assume_multiple %25, 8 : i32
      %27 = arith.index_cast %26 : i32 to index
      %c0_26 = arith.constant 0 : index
      %28 = vector.load %arg14[%27, %c0_26] : memref<64x384xf32, #tpu.memory_space<vmem>>, vector<8x384xf32>
      %cst_27 = arith.constant dense<0.000000e+00> : vector<8x384xf32>
      %29 = tpu.matmul %24, %20, %cst_27 {dimension_numbers = #tpu.dot_dimension_numbers<[1], [0], [0], [1], [0, 0, 1, 1], [], []>} : vector<8x128xf32>, vector<128x384xf32>, vector<8x384xf32> -> vector<8x384xf32>
      %30 = vector.extract_strided_slice %28 {offsets = [0, 0], sizes = [8, 128], strides = [1, 1]} : vector<8x384xf32> to vector<8x128xf32>
      %31 = vector.extract_strided_slice %29 {offsets = [0, 0], sizes = [8, 128], strides = [1, 1]} : vector<8x384xf32> to vector<8x128xf32>
      %32 = arith.addf %30, %31 : vector<8x128xf32>
      %33 = arith.negf %32 : vector<8x128xf32>
      %34 = math.exp %33 : vector<8x128xf32>
      %cst_28 = arith.constant 1.000000e+00 : f32
      %35 = vector.broadcast %cst_28 : f32 to vector<8x128xf32>
      %36 = arith.addf %35, %34 : vector<8x128xf32>
      %37 = arith.divf %35, %36 : vector<8x128xf32>
      %38 = vector.extract_strided_slice %28 {offsets = [0, 128], sizes = [8, 128], strides = [1, 1]} : vector<8x384xf32> to vector<8x128xf32>
      %39 = vector.extract_strided_slice %29 {offsets = [0, 128], sizes = [8, 128], strides = [1, 1]} : vector<8x384xf32> to vector<8x128xf32>
      %40 = arith.addf %38, %39 : vector<8x128xf32>
      %41 = arith.negf %40 : vector<8x128xf32>
      %42 = math.exp %41 : vector<8x128xf32>
      %cst_29 = arith.constant 1.000000e+00 : f32
      %43 = vector.broadcast %cst_29 : f32 to vector<8x128xf32>
      %44 = arith.addf %43, %42 : vector<8x128xf32>
      %45 = arith.divf %43, %44 : vector<8x128xf32>
      %46 = vector.extract_strided_slice %28 {offsets = [0, 256], sizes = [8, 128], strides = [1, 1]} : vector<8x384xf32> to vector<8x128xf32>
      %47 = vector.extract_strided_slice %29 {offsets = [0, 256], sizes = [8, 128], strides = [1, 1]} : vector<8x384xf32> to vector<8x128xf32>
      %48 = arith.addf %47, %23 : vector<8x128xf32>
      %49 = arith.mulf %37, %48 : vector<8x128xf32>
      %50 = arith.addf %46, %49 : vector<8x128xf32>
      %51 = math.tanh %50 : vector<8x128xf32>
      %cst_30 = arith.constant 1.000000e+00 : f32
      %52 = vector.broadcast %cst_30 : f32 to vector<8x128xf32>
      %53 = arith.subf %52, %45 : vector<8x128xf32>
      %54 = arith.mulf %53, %51 : vector<8x128xf32>
      %55 = arith.mulf %45, %24 : vector<8x128xf32>
      %56 = arith.addf %54, %55 : vector<8x128xf32>
      %57 = arith.truncf %56 : vector<8x128xf32> to vector<8x128xbf16>
      %58 = arith.index_cast %26 : i32 to index
      %c0_31 = arith.constant 0 : index
      %59 = vector.load %arg13[%58, %c0_31] : memref<64x128xbf16, #tpu.memory_space<vmem>>, vector<8x128xbf16>
      tpu.vector_store %arg13[%58, %c0_31], %57 {strides = array<i32>} : memref<64x128xbf16, #tpu.memory_space<vmem>>, vector<8x128xbf16>,
      %c8_i32_32 = arith.constant 8 : i32
      %60 = arith.muli %arg0, %c8_i32_32 : i32
      %61 = arith.addi %60, %c0_i32_25 : i32
      %c7_i32 = arith.constant 7 : i32
      %62 = arith.cmpi eq, %61, %c7_i32 : i32
      %63 = arith.extui %62 : i1 to i32
      %c0_i32_33 = arith.constant 0 : i32
      %64 = arith.cmpi ne, %63, %c0_i32_33 : i32
      scf.if %64 {
        %c0_108 = arith.constant 0 : index
        %c0_109 = arith.constant 0 : index
        %346 = vector.load %arg11[%c0_108, %c0_109] : memref<8x128xf32, #tpu.memory_space<vmem>>, vector<8x128xf32>
        tpu.vector_store %arg11[%c0_108, %c0_109], %56 {strides = array<i32>} : memref<8x128xf32, #tpu.memory_space<vmem>>, vector<8x128xf32>,
      } else {
      }
      %c1_i32 = arith.constant 1 : i32
      %c8_i32_34 = arith.constant 8 : i32
      %65 = arith.muli %c1_i32, %c8_i32_34 : i32
      %66 = tpu.assume_multiple %65, 8 : i32
      %67 = arith.index_cast %66 : i32 to index
      %c0_35 = arith.constant 0 : index
      %68 = vector.load %arg14[%67, %c0_35] : memref<64x384xf32, #tpu.memory_space<vmem>>, vector<8x384xf32>
      %cst_36 = arith.constant dense<0.000000e+00> : vector<8x384xf32>
      %69 = tpu.matmul %56, %20, %cst_36 {dimension_numbers = #tpu.dot_dimension_numbers<[1], [0], [0], [1], [0, 0, 1, 1], [], []>} : vector<8x128xf32>, vector<128x384xf32>, vector<8x384xf32> -> vector<8x384xf32>
      %70 = vector.extract_strided_slice %68 {offsets = [0, 0], sizes = [8, 128], strides = [1, 1]} : vector<8x384xf32> to vector<8x128xf32>
      %71 = vector.extract_strided_slice %69 {offsets = [0, 0], sizes = [8, 128], strides = [1, 1]} : vector<8x384xf32> to vector<8x128xf32>
      %72 = arith.addf %70, %71 : vector<8x128xf32>
      %73 = arith.negf %72 : vector<8x128xf32>
      %74 = math.exp %73 : vector<8x128xf32>
      %cst_37 = arith.constant 1.000000e+00 : f32
      %75 = vector.broadcast %cst_37 : f32 to vector<8x128xf32>
      %76 = arith.addf %75, %74 : vector<8x128xf32>
      %77 = arith.divf %75, %76 : vector<8x128xf32>
      %78 = vector.extract_strided_slice %68 {offsets = [0, 128], sizes = [8, 128], strides = [1, 1]} : vector<8x384xf32> to vector<8x128xf32>
      %79 = vector.extract_strided_slice %69 {offsets = [0, 128], sizes = [8, 128], strides = [1, 1]} : vector<8x384xf32> to vector<8x128xf32>
      %80 = arith.addf %78, %79 : vector<8x128xf32>
      %81 = arith.negf %80 : vector<8x128xf32>
      %82 = math.exp %81 : vector<8x128xf32>
      %cst_38 = arith.constant 1.000000e+00 : f32
      %83 = vector.broadcast %cst_38 : f32 to vector<8x128xf32>
      %84 = arith.addf %83, %82 : vector<8x128xf32>
      %85 = arith.divf %83, %84 : vector<8x128xf32>
      %86 = vector.extract_strided_slice %68 {offsets = [0, 256], sizes = [8, 128], strides = [1, 1]} : vector<8x384xf32> to vector<8x128xf32>
      %87 = vector.extract_strided_slice %69 {offsets = [0, 256], sizes = [8, 128], strides = [1, 1]} : vector<8x384xf32> to vector<8x128xf32>
      %88 = arith.addf %87, %23 : vector<8x128xf32>
      %89 = arith.mulf %77, %88 : vector<8x128xf32>
      %90 = arith.addf %86, %89 : vector<8x128xf32>
      %91 = math.tanh %90 : vector<8x128xf32>
      %cst_39 = arith.constant 1.000000e+00 : f32
      %92 = vector.broadcast %cst_39 : f32 to vector<8x128xf32>
      %93 = arith.subf %92, %85 : vector<8x128xf32>
      %94 = arith.mulf %93, %91 : vector<8x128xf32>
      %95 = arith.mulf %85, %56 : vector<8x128xf32>
      %96 = arith.addf %94, %95 : vector<8x128xf32>
      %97 = arith.truncf %96 : vector<8x128xf32> to vector<8x128xbf16>
      %98 = arith.index_cast %66 : i32 to index
      %c0_40 = arith.constant 0 : index
      %99 = vector.load %arg13[%98, %c0_40] : memref<64x128xbf16, #tpu.memory_space<vmem>>, vector<8x128xbf16>
      tpu.vector_store %arg13[%98, %c0_40], %97 {strides = array<i32>} : memref<64x128xbf16, #tpu.memory_space<vmem>>, vector<8x128xbf16>,
      %c8_i32_41 = arith.constant 8 : i32
      %100 = arith.muli %arg0, %c8_i32_41 : i32
      %101 = arith.addi %100, %c1_i32 : i32
      %c7_i32_42 = arith.constant 7 : i32
      %102 = arith.cmpi eq, %101, %c7_i32_42 : i32
      %103 = arith.extui %102 : i1 to i32
      %c0_i32_43 = arith.constant 0 : i32
      %104 = arith.cmpi ne, %103, %c0_i32_43 : i32
      scf.if %104 {
        %c0_108 = arith.constant 0 : index
        %c0_109 = arith.constant 0 : index
        %346 = vector.load %arg11[%c0_108, %c0_109] : memref<8x128xf32, #tpu.memory_space<vmem>>, vector<8x128xf32>
        tpu.vector_store %arg11[%c0_108, %c0_109], %96 {strides = array<i32>} : memref<8x128xf32, #tpu.memory_space<vmem>>, vector<8x128xf32>,
      } else {
      }
      %c2_i32 = arith.constant 2 : i32
      %c8_i32_44 = arith.constant 8 : i32
      %105 = arith.muli %c2_i32, %c8_i32_44 : i32
      %106 = tpu.assume_multiple %105, 8 : i32
      %107 = arith.index_cast %106 : i32 to index
      %c0_45 = arith.constant 0 : index
      %108 = vector.load %arg14[%107, %c0_45] : memref<64x384xf32, #tpu.memory_space<vmem>>, vector<8x384xf32>
      %cst_46 = arith.constant dense<0.000000e+00> : vector<8x384xf32>
      %109 = tpu.matmul %96, %20, %cst_46 {dimension_numbers = #tpu.dot_dimension_numbers<[1], [0], [0], [1], [0, 0, 1, 1], [], []>} : vector<8x128xf32>, vector<128x384xf32>, vector<8x384xf32> -> vector<8x384xf32>
      %110 = vector.extract_strided_slice %108 {offsets = [0, 0], sizes = [8, 128], strides = [1, 1]} : vector<8x384xf32> to vector<8x128xf32>
      %111 = vector.extract_strided_slice %109 {offsets = [0, 0], sizes = [8, 128], strides = [1, 1]} : vector<8x384xf32> to vector<8x128xf32>
      %112 = arith.addf %110, %111 : vector<8x128xf32>
      %113 = arith.negf %112 : vector<8x128xf32>
      %114 = math.exp %113 : vector<8x128xf32>
      %cst_47 = arith.constant 1.000000e+00 : f32
      %115 = vector.broadcast %cst_47 : f32 to vector<8x128xf32>
      %116 = arith.addf %115, %114 : vector<8x128xf32>
      %117 = arith.divf %115, %116 : vector<8x128xf32>
      %118 = vector.extract_strided_slice %108 {offsets = [0, 128], sizes = [8, 128], strides = [1, 1]} : vector<8x384xf32> to vector<8x128xf32>
      %119 = vector.extract_strided_slice %109 {offsets = [0, 128], sizes = [8, 128], strides = [1, 1]} : vector<8x384xf32> to vector<8x128xf32>
      %120 = arith.addf %118, %119 : vector<8x128xf32>
      %121 = arith.negf %120 : vector<8x128xf32>
      %122 = math.exp %121 : vector<8x128xf32>
      %cst_48 = arith.constant 1.000000e+00 : f32
      %123 = vector.broadcast %cst_48 : f32 to vector<8x128xf32>
      %124 = arith.addf %123, %122 : vector<8x128xf32>
      %125 = arith.divf %123, %124 : vector<8x128xf32>
      %126 = vector.extract_strided_slice %108 {offsets = [0, 256], sizes = [8, 128], strides = [1, 1]} : vector<8x384xf32> to vector<8x128xf32>
      %127 = vector.extract_strided_slice %109 {offsets = [0, 256], sizes = [8, 128], strides = [1, 1]} : vector<8x384xf32> to vector<8x128xf32>
      %128 = arith.addf %127, %23 : vector<8x128xf32>
      %129 = arith.mulf %117, %128 : vector<8x128xf32>
      %130 = arith.addf %126, %129 : vector<8x128xf32>
      %131 = math.tanh %130 : vector<8x128xf32>
      %cst_49 = arith.constant 1.000000e+00 : f32
      %132 = vector.broadcast %cst_49 : f32 to vector<8x128xf32>
      %133 = arith.subf %132, %125 : vector<8x128xf32>
      %134 = arith.mulf %133, %131 : vector<8x128xf32>
      %135 = arith.mulf %125, %96 : vector<8x128xf32>
      %136 = arith.addf %134, %135 : vector<8x128xf32>
      %137 = arith.truncf %136 : vector<8x128xf32> to vector<8x128xbf16>
      %138 = arith.index_cast %106 : i32 to index
      %c0_50 = arith.constant 0 : index
      %139 = vector.load %arg13[%138, %c0_50] : memref<64x128xbf16, #tpu.memory_space<vmem>>, vector<8x128xbf16>
      tpu.vector_store %arg13[%138, %c0_50], %137 {strides = array<i32>} : memref<64x128xbf16, #tpu.memory_space<vmem>>, vector<8x128xbf16>,
      %c8_i32_51 = arith.constant 8 : i32
      %140 = arith.muli %arg0, %c8_i32_51 : i32
      %141 = arith.addi %140, %c2_i32 : i32
      %c7_i32_52 = arith.constant 7 : i32
      %142 = arith.cmpi eq, %141, %c7_i32_52 : i32
      %143 = arith.extui %142 : i1 to i32
      %c0_i32_53 = arith.constant 0 : i32
      %144 = arith.cmpi ne, %143, %c0_i32_53 : i32
      scf.if %144 {
        %c0_108 = arith.constant 0 : index
        %c0_109 = arith.constant 0 : index
        %346 = vector.load %arg11[%c0_108, %c0_109] : memref<8x128xf32, #tpu.memory_space<vmem>>, vector<8x128xf32>
        tpu.vector_store %arg11[%c0_108, %c0_109], %136 {strides = array<i32>} : memref<8x128xf32, #tpu.memory_space<vmem>>, vector<8x128xf32>,
      } else {
      }
      %c3_i32 = arith.constant 3 : i32
      %c8_i32_54 = arith.constant 8 : i32
      %145 = arith.muli %c3_i32, %c8_i32_54 : i32
      %146 = tpu.assume_multiple %145, 8 : i32
      %147 = arith.index_cast %146 : i32 to index
      %c0_55 = arith.constant 0 : index
      %148 = vector.load %arg14[%147, %c0_55] : memref<64x384xf32, #tpu.memory_space<vmem>>, vector<8x384xf32>
      %cst_56 = arith.constant dense<0.000000e+00> : vector<8x384xf32>
      %149 = tpu.matmul %136, %20, %cst_56 {dimension_numbers = #tpu.dot_dimension_numbers<[1], [0], [0], [1], [0, 0, 1, 1], [], []>} : vector<8x128xf32>, vector<128x384xf32>, vector<8x384xf32> -> vector<8x384xf32>
      %150 = vector.extract_strided_slice %148 {offsets = [0, 0], sizes = [8, 128], strides = [1, 1]} : vector<8x384xf32> to vector<8x128xf32>
      %151 = vector.extract_strided_slice %149 {offsets = [0, 0], sizes = [8, 128], strides = [1, 1]} : vector<8x384xf32> to vector<8x128xf32>
      %152 = arith.addf %150, %151 : vector<8x128xf32>
      %153 = arith.negf %152 : vector<8x128xf32>
      %154 = math.exp %153 : vector<8x128xf32>
      %cst_57 = arith.constant 1.000000e+00 : f32
      %155 = vector.broadcast %cst_57 : f32 to vector<8x128xf32>
      %156 = arith.addf %155, %154 : vector<8x128xf32>
      %157 = arith.divf %155, %156 : vector<8x128xf32>
      %158 = vector.extract_strided_slice %148 {offsets = [0, 128], sizes = [8, 128], strides = [1, 1]} : vector<8x384xf32> to vector<8x128xf32>
      %159 = vector.extract_strided_slice %149 {offsets = [0, 128], sizes = [8, 128], strides = [1, 1]} : vector<8x384xf32> to vector<8x128xf32>
      %160 = arith.addf %158, %159 : vector<8x128xf32>
      %161 = arith.negf %160 : vector<8x128xf32>
      %162 = math.exp %161 : vector<8x128xf32>
      %cst_58 = arith.constant 1.000000e+00 : f32
      %163 = vector.broadcast %cst_58 : f32 to vector<8x128xf32>
      %164 = arith.addf %163, %162 : vector<8x128xf32>
      %165 = arith.divf %163, %164 : vector<8x128xf32>
      %166 = vector.extract_strided_slice %148 {offsets = [0, 256], sizes = [8, 128], strides = [1, 1]} : vector<8x384xf32> to vector<8x128xf32>
      %167 = vector.extract_strided_slice %149 {offsets = [0, 256], sizes = [8, 128], strides = [1, 1]} : vector<8x384xf32> to vector<8x128xf32>
      %168 = arith.addf %167, %23 : vector<8x128xf32>
      %169 = arith.mulf %157, %168 : vector<8x128xf32>
      %170 = arith.addf %166, %169 : vector<8x128xf32>
      %171 = math.tanh %170 : vector<8x128xf32>
      %cst_59 = arith.constant 1.000000e+00 : f32
      %172 = vector.broadcast %cst_59 : f32 to vector<8x128xf32>
      %173 = arith.subf %172, %165 : vector<8x128xf32>
      %174 = arith.mulf %173, %171 : vector<8x128xf32>
      %175 = arith.mulf %165, %136 : vector<8x128xf32>
      %176 = arith.addf %174, %175 : vector<8x128xf32>
      %177 = arith.truncf %176 : vector<8x128xf32> to vector<8x128xbf16>
      %178 = arith.index_cast %146 : i32 to index
      %c0_60 = arith.constant 0 : index
      %179 = vector.load %arg13[%178, %c0_60] : memref<64x128xbf16, #tpu.memory_space<vmem>>, vector<8x128xbf16>
      tpu.vector_store %arg13[%178, %c0_60], %177 {strides = array<i32>} : memref<64x128xbf16, #tpu.memory_space<vmem>>, vector<8x128xbf16>,
      %c8_i32_61 = arith.constant 8 : i32
      %180 = arith.muli %arg0, %c8_i32_61 : i32
      %181 = arith.addi %180, %c3_i32 : i32
      %c7_i32_62 = arith.constant 7 : i32
      %182 = arith.cmpi eq, %181, %c7_i32_62 : i32
      %183 = arith.extui %182 : i1 to i32
      %c0_i32_63 = arith.constant 0 : i32
      %184 = arith.cmpi ne, %183, %c0_i32_63 : i32
      scf.if %184 {
        %c0_108 = arith.constant 0 : index
        %c0_109 = arith.constant 0 : index
        %346 = vector.load %arg11[%c0_108, %c0_109] : memref<8x128xf32, #tpu.memory_space<vmem>>, vector<8x128xf32>
        tpu.vector_store %arg11[%c0_108, %c0_109], %176 {strides = array<i32>} : memref<8x128xf32, #tpu.memory_space<vmem>>, vector<8x128xf32>,
      } else {
      }
      %c4_i32 = arith.constant 4 : i32
      %c8_i32_64 = arith.constant 8 : i32
      %185 = arith.muli %c4_i32, %c8_i32_64 : i32
      %186 = tpu.assume_multiple %185, 8 : i32
      %187 = arith.index_cast %186 : i32 to index
      %c0_65 = arith.constant 0 : index
      %188 = vector.load %arg14[%187, %c0_65] : memref<64x384xf32, #tpu.memory_space<vmem>>, vector<8x384xf32>
      %cst_66 = arith.constant dense<0.000000e+00> : vector<8x384xf32>
      %189 = tpu.matmul %176, %20, %cst_66 {dimension_numbers = #tpu.dot_dimension_numbers<[1], [0], [0], [1], [0, 0, 1, 1], [], []>} : vector<8x128xf32>, vector<128x384xf32>, vector<8x384xf32> -> vector<8x384xf32>
      %190 = vector.extract_strided_slice %188 {offsets = [0, 0], sizes = [8, 128], strides = [1, 1]} : vector<8x384xf32> to vector<8x128xf32>
      %191 = vector.extract_strided_slice %189 {offsets = [0, 0], sizes = [8, 128], strides = [1, 1]} : vector<8x384xf32> to vector<8x128xf32>
      %192 = arith.addf %190, %191 : vector<8x128xf32>
      %193 = arith.negf %192 : vector<8x128xf32>
      %194 = math.exp %193 : vector<8x128xf32>
      %cst_67 = arith.constant 1.000000e+00 : f32
      %195 = vector.broadcast %cst_67 : f32 to vector<8x128xf32>
      %196 = arith.addf %195, %194 : vector<8x128xf32>
      %197 = arith.divf %195, %196 : vector<8x128xf32>
      %198 = vector.extract_strided_slice %188 {offsets = [0, 128], sizes = [8, 128], strides = [1, 1]} : vector<8x384xf32> to vector<8x128xf32>
      %199 = vector.extract_strided_slice %189 {offsets = [0, 128], sizes = [8, 128], strides = [1, 1]} : vector<8x384xf32> to vector<8x128xf32>
      %200 = arith.addf %198, %199 : vector<8x128xf32>
      %201 = arith.negf %200 : vector<8x128xf32>
      %202 = math.exp %201 : vector<8x128xf32>
      %cst_68 = arith.constant 1.000000e+00 : f32
      %203 = vector.broadcast %cst_68 : f32 to vector<8x128xf32>
      %204 = arith.addf %203, %202 : vector<8x128xf32>
      %205 = arith.divf %203, %204 : vector<8x128xf32>
      %206 = vector.extract_strided_slice %188 {offsets = [0, 256], sizes = [8, 128], strides = [1, 1]} : vector<8x384xf32> to vector<8x128xf32>
      %207 = vector.extract_strided_slice %189 {offsets = [0, 256], sizes = [8, 128], strides = [1, 1]} : vector<8x384xf32> to vector<8x128xf32>
      %208 = arith.addf %207, %23 : vector<8x128xf32>
      %209 = arith.mulf %197, %208 : vector<8x128xf32>
      %210 = arith.addf %206, %209 : vector<8x128xf32>
      %211 = math.tanh %210 : vector<8x128xf32>
      %cst_69 = arith.constant 1.000000e+00 : f32
      %212 = vector.broadcast %cst_69 : f32 to vector<8x128xf32>
      %213 = arith.subf %212, %205 : vector<8x128xf32>
      %214 = arith.mulf %213, %211 : vector<8x128xf32>
      %215 = arith.mulf %205, %176 : vector<8x128xf32>
      %216 = arith.addf %214, %215 : vector<8x128xf32>
      %217 = arith.truncf %216 : vector<8x128xf32> to vector<8x128xbf16>
      %218 = arith.index_cast %186 : i32 to index
      %c0_70 = arith.constant 0 : index
      %219 = vector.load %arg13[%218, %c0_70] : memref<64x128xbf16, #tpu.memory_space<vmem>>, vector<8x128xbf16>
      tpu.vector_store %arg13[%218, %c0_70], %217 {strides = array<i32>} : memref<64x128xbf16, #tpu.memory_space<vmem>>, vector<8x128xbf16>,
      %c8_i32_71 = arith.constant 8 : i32
      %220 = arith.muli %arg0, %c8_i32_71 : i32
      %221 = arith.addi %220, %c4_i32 : i32
      %c7_i32_72 = arith.constant 7 : i32
      %222 = arith.cmpi eq, %221, %c7_i32_72 : i32
      %223 = arith.extui %222 : i1 to i32
      %c0_i32_73 = arith.constant 0 : i32
      %224 = arith.cmpi ne, %223, %c0_i32_73 : i32
      scf.if %224 {
        %c0_108 = arith.constant 0 : index
        %c0_109 = arith.constant 0 : index
        %346 = vector.load %arg11[%c0_108, %c0_109] : memref<8x128xf32, #tpu.memory_space<vmem>>, vector<8x128xf32>
        tpu.vector_store %arg11[%c0_108, %c0_109], %216 {strides = array<i32>} : memref<8x128xf32, #tpu.memory_space<vmem>>, vector<8x128xf32>,
      } else {
      }
      %c5_i32 = arith.constant 5 : i32
      %c8_i32_74 = arith.constant 8 : i32
      %225 = arith.muli %c5_i32, %c8_i32_74 : i32
      %226 = tpu.assume_multiple %225, 8 : i32
      %227 = arith.index_cast %226 : i32 to index
      %c0_75 = arith.constant 0 : index
      %228 = vector.load %arg14[%227, %c0_75] : memref<64x384xf32, #tpu.memory_space<vmem>>, vector<8x384xf32>
      %cst_76 = arith.constant dense<0.000000e+00> : vector<8x384xf32>
      %229 = tpu.matmul %216, %20, %cst_76 {dimension_numbers = #tpu.dot_dimension_numbers<[1], [0], [0], [1], [0, 0, 1, 1], [], []>} : vector<8x128xf32>, vector<128x384xf32>, vector<8x384xf32> -> vector<8x384xf32>
      %230 = vector.extract_strided_slice %228 {offsets = [0, 0], sizes = [8, 128], strides = [1, 1]} : vector<8x384xf32> to vector<8x128xf32>
      %231 = vector.extract_strided_slice %229 {offsets = [0, 0], sizes = [8, 128], strides = [1, 1]} : vector<8x384xf32> to vector<8x128xf32>
      %232 = arith.addf %230, %231 : vector<8x128xf32>
      %233 = arith.negf %232 : vector<8x128xf32>
      %234 = math.exp %233 : vector<8x128xf32>
      %cst_77 = arith.constant 1.000000e+00 : f32
      %235 = vector.broadcast %cst_77 : f32 to vector<8x128xf32>
      %236 = arith.addf %235, %234 : vector<8x128xf32>
      %237 = arith.divf %235, %236 : vector<8x128xf32>
      %238 = vector.extract_strided_slice %228 {offsets = [0, 128], sizes = [8, 128], strides = [1, 1]} : vector<8x384xf32> to vector<8x128xf32>
      %239 = vector.extract_strided_slice %229 {offsets = [0, 128], sizes = [8, 128], strides = [1, 1]} : vector<8x384xf32> to vector<8x128xf32>
      %240 = arith.addf %238, %239 : vector<8x128xf32>
      %241 = arith.negf %240 : vector<8x128xf32>
      %242 = math.exp %241 : vector<8x128xf32>
      %cst_78 = arith.constant 1.000000e+00 : f32
      %243 = vector.broadcast %cst_78 : f32 to vector<8x128xf32>
      %244 = arith.addf %243, %242 : vector<8x128xf32>
      %245 = arith.divf %243, %244 : vector<8x128xf32>
      %246 = vector.extract_strided_slice %228 {offsets = [0, 256], sizes = [8, 128], strides = [1, 1]} : vector<8x384xf32> to vector<8x128xf32>
      %247 = vector.extract_strided_slice %229 {offsets = [0, 256], sizes = [8, 128], strides = [1, 1]} : vector<8x384xf32> to vector<8x128xf32>
      %248 = arith.addf %247, %23 : vector<8x128xf32>
      %249 = arith.mulf %237, %248 : vector<8x128xf32>
      %250 = arith.addf %246, %249 : vector<8x128xf32>
      %251 = math.tanh %250 : vector<8x128xf32>
      %cst_79 = arith.constant 1.000000e+00 : f32
      %252 = vector.broadcast %cst_79 : f32 to vector<8x128xf32>
      %253 = arith.subf %252, %245 : vector<8x128xf32>
      %254 = arith.mulf %253, %251 : vector<8x128xf32>
      %255 = arith.mulf %245, %216 : vector<8x128xf32>
      %256 = arith.addf %254, %255 : vector<8x128xf32>
      %257 = arith.truncf %256 : vector<8x128xf32> to vector<8x128xbf16>
      %258 = arith.index_cast %226 : i32 to index
      %c0_80 = arith.constant 0 : index
      %259 = vector.load %arg13[%258, %c0_80] : memref<64x128xbf16, #tpu.memory_space<vmem>>, vector<8x128xbf16>
      tpu.vector_store %arg13[%258, %c0_80], %257 {strides = array<i32>} : memref<64x128xbf16, #tpu.memory_space<vmem>>, vector<8x128xbf16>,
      %c8_i32_81 = arith.constant 8 : i32
      %260 = arith.muli %arg0, %c8_i32_81 : i32
      %261 = arith.addi %260, %c5_i32 : i32
      %c7_i32_82 = arith.constant 7 : i32
      %262 = arith.cmpi eq, %261, %c7_i32_82 : i32
      %263 = arith.extui %262 : i1 to i32
      %c0_i32_83 = arith.constant 0 : i32
      %264 = arith.cmpi ne, %263, %c0_i32_83 : i32
      scf.if %264 {
        %c0_108 = arith.constant 0 : index
        %c0_109 = arith.constant 0 : index
        %346 = vector.load %arg11[%c0_108, %c0_109] : memref<8x128xf32, #tpu.memory_space<vmem>>, vector<8x128xf32>
        tpu.vector_store %arg11[%c0_108, %c0_109], %256 {strides = array<i32>} : memref<8x128xf32, #tpu.memory_space<vmem>>, vector<8x128xf32>,
      } else {
      }
      %c6_i32 = arith.constant 6 : i32
      %c8_i32_84 = arith.constant 8 : i32
      %265 = arith.muli %c6_i32, %c8_i32_84 : i32
      %266 = tpu.assume_multiple %265, 8 : i32
      %267 = arith.index_cast %266 : i32 to index
      %c0_85 = arith.constant 0 : index
      %268 = vector.load %arg14[%267, %c0_85] : memref<64x384xf32, #tpu.memory_space<vmem>>, vector<8x384xf32>
      %cst_86 = arith.constant dense<0.000000e+00> : vector<8x384xf32>
      %269 = tpu.matmul %256, %20, %cst_86 {dimension_numbers = #tpu.dot_dimension_numbers<[1], [0], [0], [1], [0, 0, 1, 1], [], []>} : vector<8x128xf32>, vector<128x384xf32>, vector<8x384xf32> -> vector<8x384xf32>
      %270 = vector.extract_strided_slice %268 {offsets = [0, 0], sizes = [8, 128], strides = [1, 1]} : vector<8x384xf32> to vector<8x128xf32>
      %271 = vector.extract_strided_slice %269 {offsets = [0, 0], sizes = [8, 128], strides = [1, 1]} : vector<8x384xf32> to vector<8x128xf32>
      %272 = arith.addf %270, %271 : vector<8x128xf32>
      %273 = arith.negf %272 : vector<8x128xf32>
      %274 = math.exp %273 : vector<8x128xf32>
      %cst_87 = arith.constant 1.000000e+00 : f32
      %275 = vector.broadcast %cst_87 : f32 to vector<8x128xf32>
      %276 = arith.addf %275, %274 : vector<8x128xf32>
      %277 = arith.divf %275, %276 : vector<8x128xf32>
      %278 = vector.extract_strided_slice %268 {offsets = [0, 128], sizes = [8, 128], strides = [1, 1]} : vector<8x384xf32> to vector<8x128xf32>
      %279 = vector.extract_strided_slice %269 {offsets = [0, 128], sizes = [8, 128], strides = [1, 1]} : vector<8x384xf32> to vector<8x128xf32>
      %280 = arith.addf %278, %279 : vector<8x128xf32>
      %281 = arith.negf %280 : vector<8x128xf32>
      %282 = math.exp %281 : vector<8x128xf32>
      %cst_88 = arith.constant 1.000000e+00 : f32
      %283 = vector.broadcast %cst_88 : f32 to vector<8x128xf32>
      %284 = arith.addf %283, %282 : vector<8x128xf32>
      %285 = arith.divf %283, %284 : vector<8x128xf32>
      %286 = vector.extract_strided_slice %268 {offsets = [0, 256], sizes = [8, 128], strides = [1, 1]} : vector<8x384xf32> to vector<8x128xf32>
      %287 = vector.extract_strided_slice %269 {offsets = [0, 256], sizes = [8, 128], strides = [1, 1]} : vector<8x384xf32> to vector<8x128xf32>
      %288 = arith.addf %287, %23 : vector<8x128xf32>
      %289 = arith.mulf %277, %288 : vector<8x128xf32>
      %290 = arith.addf %286, %289 : vector<8x128xf32>
      %291 = math.tanh %290 : vector<8x128xf32>
      %cst_89 = arith.constant 1.000000e+00 : f32
      %292 = vector.broadcast %cst_89 : f32 to vector<8x128xf32>
      %293 = arith.subf %292, %285 : vector<8x128xf32>
      %294 = arith.mulf %293, %291 : vector<8x128xf32>
      %295 = arith.mulf %285, %256 : vector<8x128xf32>
      %296 = arith.addf %294, %295 : vector<8x128xf32>
      %297 = arith.truncf %296 : vector<8x128xf32> to vector<8x128xbf16>
      %298 = arith.index_cast %266 : i32 to index
      %c0_90 = arith.constant 0 : index
      %299 = vector.load %arg13[%298, %c0_90] : memref<64x128xbf16, #tpu.memory_space<vmem>>, vector<8x128xbf16>
      tpu.vector_store %arg13[%298, %c0_90], %297 {strides = array<i32>} : memref<64x128xbf16, #tpu.memory_space<vmem>>, vector<8x128xbf16>,
      %c8_i32_91 = arith.constant 8 : i32
      %300 = arith.muli %arg0, %c8_i32_91 : i32
      %301 = arith.addi %300, %c6_i32 : i32
      %c7_i32_92 = arith.constant 7 : i32
      %302 = arith.cmpi eq, %301, %c7_i32_92 : i32
      %303 = arith.extui %302 : i1 to i32
      %c0_i32_93 = arith.constant 0 : i32
      %304 = arith.cmpi ne, %303, %c0_i32_93 : i32
      scf.if %304 {
        %c0_108 = arith.constant 0 : index
        %c0_109 = arith.constant 0 : index
        %346 = vector.load %arg11[%c0_108, %c0_109] : memref<8x128xf32, #tpu.memory_space<vmem>>, vector<8x128xf32>
        tpu.vector_store %arg11[%c0_108, %c0_109], %296 {strides = array<i32>} : memref<8x128xf32, #tpu.memory_space<vmem>>, vector<8x128xf32>,
      } else {
      }
      %c7_i32_94 = arith.constant 7 : i32
      %c8_i32_95 = arith.constant 8 : i32
      %305 = arith.muli %c7_i32_94, %c8_i32_95 : i32
      %306 = tpu.assume_multiple %305, 8 : i32
      %307 = arith.index_cast %306 : i32 to index
      %c0_96 = arith.constant 0 : index
      %308 = vector.load %arg14[%307, %c0_96] : memref<64x384xf32, #tpu.memory_space<vmem>>, vector<8x384xf32>
      %cst_97 = arith.constant dense<0.000000e+00> : vector<8x384xf32>
      %309 = tpu.matmul %296, %20, %cst_97 {dimension_numbers = #tpu.dot_dimension_numbers<[1], [0], [0], [1], [0, 0, 1, 1], [], []>} : vector<8x128xf32>, vector<128x384xf32>, vector<8x384xf32> -> vector<8x384xf32>
      %310 = vector.extract_strided_slice %308 {offsets = [0, 0], sizes = [8, 128], strides = [1, 1]} : vector<8x384xf32> to vector<8x128xf32>
      %311 = vector.extract_strided_slice %309 {offsets = [0, 0], sizes = [8, 128], strides = [1, 1]} : vector<8x384xf32> to vector<8x128xf32>
      %312 = arith.addf %310, %311 : vector<8x128xf32>
      %313 = arith.negf %312 : vector<8x128xf32>
      %314 = math.exp %313 : vector<8x128xf32>
      %cst_98 = arith.constant 1.000000e+00 : f32
      %315 = vector.broadcast %cst_98 : f32 to vector<8x128xf32>
      %316 = arith.addf %315, %314 : vector<8x128xf32>
      %317 = arith.divf %315, %316 : vector<8x128xf32>
      %318 = vector.extract_strided_slice %308 {offsets = [0, 128], sizes = [8, 128], strides = [1, 1]} : vector<8x384xf32> to vector<8x128xf32>
      %319 = vector.extract_strided_slice %309 {offsets = [0, 128], sizes = [8, 128], strides = [1, 1]} : vector<8x384xf32> to vector<8x128xf32>
      %320 = arith.addf %318, %319 : vector<8x128xf32>
      %321 = arith.negf %320 : vector<8x128xf32>
      %322 = math.exp %321 : vector<8x128xf32>
      %cst_99 = arith.constant 1.000000e+00 : f32
      %323 = vector.broadcast %cst_99 : f32 to vector<8x128xf32>
      %324 = arith.addf %323, %322 : vector<8x128xf32>
      %325 = arith.divf %323, %324 : vector<8x128xf32>
      %326 = vector.extract_strided_slice %308 {offsets = [0, 256], sizes = [8, 128], strides = [1, 1]} : vector<8x384xf32> to vector<8x128xf32>
      %327 = vector.extract_strided_slice %309 {offsets = [0, 256], sizes = [8, 128], strides = [1, 1]} : vector<8x384xf32> to vector<8x128xf32>
      %328 = arith.addf %327, %23 : vector<8x128xf32>
      %329 = arith.mulf %317, %328 : vector<8x128xf32>
      %330 = arith.addf %326, %329 : vector<8x128xf32>
      %331 = math.tanh %330 : vector<8x128xf32>
      %cst_100 = arith.constant 1.000000e+00 : f32
      %332 = vector.broadcast %cst_100 : f32 to vector<8x128xf32>
      %333 = arith.subf %332, %325 : vector<8x128xf32>
      %334 = arith.mulf %333, %331 : vector<8x128xf32>
      %335 = arith.mulf %325, %296 : vector<8x128xf32>
      %336 = arith.addf %334, %335 : vector<8x128xf32>
      %337 = arith.truncf %336 : vector<8x128xf32> to vector<8x128xbf16>
      %338 = arith.index_cast %306 : i32 to index
      %c0_101 = arith.constant 0 : index
      %339 = vector.load %arg13[%338, %c0_101] : memref<64x128xbf16, #tpu.memory_space<vmem>>, vector<8x128xbf16>
      tpu.vector_store %arg13[%338, %c0_101], %337 {strides = array<i32>} : memref<64x128xbf16, #tpu.memory_space<vmem>>, vector<8x128xbf16>,
      %c8_i32_102 = arith.constant 8 : i32
      %340 = arith.muli %arg0, %c8_i32_102 : i32
      %341 = arith.addi %340, %c7_i32_94 : i32
      %c7_i32_103 = arith.constant 7 : i32
      %342 = arith.cmpi eq, %341, %c7_i32_103 : i32
      %343 = arith.extui %342 : i1 to i32
      %c0_i32_104 = arith.constant 0 : i32
      %344 = arith.cmpi ne, %343, %c0_i32_104 : i32
      scf.if %344 {
        %c0_108 = arith.constant 0 : index
        %c0_109 = arith.constant 0 : index
        %346 = vector.load %arg11[%c0_108, %c0_109] : memref<8x128xf32, #tpu.memory_space<vmem>>, vector<8x128xf32>
        tpu.vector_store %arg11[%c0_108, %c0_109], %336 {strides = array<i32>} : memref<8x128xf32, #tpu.memory_space<vmem>>, vector<8x128xf32>,
      } else {
      }
      %c8_i32_105 = arith.constant 8 : i32
      %c0_106 = arith.constant 0 : index
      %c0_107 = arith.constant 0 : index
      %345 = vector.load %arg12[%c0_106, %c0_107] : memref<8x128xf32, #tpu.memory_space<vmem>>, vector<8x128xf32>
      tpu.vector_store %arg12[%c0_106, %c0_107], %336 {strides = array<i32>} : memref<8x128xf32, #tpu.memory_space<vmem>>, vector<8x128xf32>,
    } else {
    }
    %c0 = arith.constant 0 : index
    %c0_1 = arith.constant 0 : index
    %3 = vector.load %arg13[%c0, %c0_1] : memref<64x128xbf16, #tpu.memory_space<vmem>>, vector<64x128xbf16>
    %c0_2 = arith.constant 0 : index
    %c0_3 = arith.constant 0 : index
    %4 = vector.load %arg8[%c0_2, %c0_3] : memref<128x128xbf16, #tpu.memory_space<vmem>>, vector<128x128xbf16>
    %cst = arith.constant dense<0.000000e+00> : vector<64x128xf32>
    %5 = tpu.matmul %3, %4, %cst {dimension_numbers = #tpu.dot_dimension_numbers<[1], [0], [0], [1], [0, 0, 1, 1], [], []>} : vector<64x128xbf16>, vector<128x128xbf16>, vector<64x128xf32> -> vector<64x128xf32>
    %c0_4 = arith.constant 0 : index
    %c0_5 = arith.constant 0 : index
    %6 = vector.load %arg9[%c0_4, %c0_5] : memref<1x128xf32, #tpu.memory_space<vmem>>, vector<1x128xf32>
    %7 = vector.broadcast %6 : vector<1x128xf32> to vector<64x128xf32>
    %8 = arith.addf %5, %7 : vector<64x128xf32>
    %c0_6 = arith.constant 0 : index
    %c0_7 = arith.constant 0 : index
    %9 = vector.load %arg10[%c0_6, %c0_7] : memref<64x128xf32, #tpu.memory_space<vmem>>, vector<64x128xf32>
    tpu.vector_store %arg10[%c0_6, %c0_7], %8 {strides = array<i32>} : memref<64x128xf32, #tpu.memory_space<vmem>>, vector<64x128xf32>,
    return
  }
  func.func @transform_0(%arg0: i32, %arg1: i32) -> (i32, i32) {
    %c0_i32 = arith.constant 0 : i32
    %c0_i32_0 = arith.constant 0 : i32
    return %arg0, %c0_i32 : i32, i32
  }
  func.func @transform_1(%arg0: i32, %arg1: i32) -> (i32, i32) {
    %c0_i32 = arith.constant 0 : i32
    %c0_i32_0 = arith.constant 0 : i32
    %c0_i32_1 = arith.constant 0 : i32
    return %c0_i32, %c0_i32_0 : i32, i32
  }
  func.func @transform_2(%arg0: i32, %arg1: i32) -> (i32, i32) {
    %c0_i32 = arith.constant 0 : i32
    %c0_i32_0 = arith.constant 0 : i32
    %c0_i32_1 = arith.constant 0 : i32
    return %c0_i32, %c0_i32_0 : i32, i32
  }
  func.func @transform_3(%arg0: i32, %arg1: i32) -> (i32, i32) {
    %c0_i32 = arith.constant 0 : i32
    %c0_i32_0 = arith.constant 0 : i32
    %c0_i32_1 = arith.constant 0 : i32
    return %c0_i32, %c0_i32_0 : i32, i32
  }
  func.func @transform_4(%arg0: i32, %arg1: i32) -> (i32, i32) {
    %c0_i32 = arith.constant 0 : i32
    %c0_i32_0 = arith.constant 0 : i32
    %c0_i32_1 = arith.constant 0 : i32
    return %c0_i32, %c0_i32_0 : i32, i32
  }
  func.func @transform_5(%arg0: i32, %arg1: i32) -> (i32, i32) {
    %c0_i32 = arith.constant 0 : i32
    %c0_i32_0 = arith.constant 0 : i32
    %c0_i32_1 = arith.constant 0 : i32
    return %c0_i32, %c0_i32_0 : i32, i32
  }
  func.func @transform_6(%arg0: i32, %arg1: i32) -> (i32, i32) {
    %c0_i32 = arith.constant 0 : i32
    %c0_i32_0 = arith.constant 0 : i32
    return %c0_i32, %arg1 : i32, i32
  }
  func.func @transform_7(%arg0: i32, %arg1: i32) -> (i32, i32) {
    %c0_i32 = arith.constant 0 : i32
    %c0_i32_0 = arith.constant 0 : i32
    return %c0_i32, %arg1 : i32, i32
  }
  func.func @transform_8(%arg0: i32, %arg1: i32) -> (i32, i32) {
    %c0_i32 = arith.constant 0 : i32
    return %arg0, %arg1 : i32, i32
  }
  func.func @transform_9(%arg0: i32, %arg1: i32) -> (i32, i32) {
    %c0_i32 = arith.constant 0 : i32
    %c0_i32_0 = arith.constant 0 : i32
    %c0_i32_1 = arith.constant 0 : i32
    return %c0_i32, %c0_i32_0 : i32, i32
  }
}

module attributes {stable_mosaic.version = 11 : i64} {
  func.func @gru_dense_kernel(%arg0: i32, %arg1: i32, %arg2: memref<64x16xbf16, #tpu.memory_space<vmem>>, %arg3: memref<8x128xf32, #tpu.memory_space<vmem>>, %arg4: memref<16x384xbf16, #tpu.memory_space<vmem>>, %arg5: memref<128x384xf32, #tpu.memory_space<vmem>>, %arg6: memref<1x384xf32, #tpu.memory_space<vmem>>, %arg7: memref<1x128xf32, #tpu.memory_space<vmem>>, %arg8: memref<128x128xbf16, #tpu.memory_space<vmem>>, %arg9: memref<1x128xf32, #tpu.memory_space<vmem>>, %arg10: memref<64x128xf32, #tpu.memory_space<vmem>>, %arg11: memref<8x128xf32, #tpu.memory_space<vmem>>, %arg12: memref<8x128xf32, #tpu.memory_space<vmem>>, %arg13: memref<64x128xbf16, #tpu.memory_space<vmem>>, %arg14: memref<64x384xf32, #tpu.memory_space<vmem>>) attributes {dimension_semantics = [#tpu.dimension_semantics<arbitrary>, #tpu.dimension_semantics<arbitrary>], iteration_bounds = array<i64: 1, 1>, scalar_prefetch = 0 : i64, scratch_operands = 3 : i64, tpu.core_type = #tpu.core_type<tc>, window_params = [{transform_indices = @transform_0, window_bounds = array<i64: 64, 16>}, {pipeline_mode = #tpu.pipeline_mode<synchronous>, transform_indices = @transform_1, window_bounds = array<i64: 8, 128>}, {pipeline_mode = #tpu.pipeline_mode<synchronous>, transform_indices = @transform_2, window_bounds = array<i64: 16, 384>}, {pipeline_mode = #tpu.pipeline_mode<synchronous>, transform_indices = @transform_3, window_bounds = array<i64: 128, 384>}, {pipeline_mode = #tpu.pipeline_mode<synchronous>, transform_indices = @transform_4, window_bounds = array<i64: 1, 384>}, {pipeline_mode = #tpu.pipeline_mode<synchronous>, transform_indices = @transform_5, window_bounds = array<i64: 1, 128>}, {transform_indices = @transform_6, window_bounds = array<i64: 128, 128>}, {transform_indices = @transform_7, window_bounds = array<i64: 1, 128>}, {transform_indices = @transform_8, window_bounds = array<i64: 64, 128>}, {pipeline_mode = #tpu.pipeline_mode<synchronous>, transform_indices = @transform_9, window_bounds = array<i64: 8, 128>}]} {
    %c0_i32 = arith.constant 0 : i32
    %0 = arith.cmpi eq, %arg1, %c0_i32 : i32
    %1 = arith.extui %0 : i1 to i32
    %c0_i32_0 = arith.constant 0 : i32
    %2 = arith.cmpi ne, %1, %c0_i32_0 : i32
    scf.if %2 {
      %c0_i32_8 = arith.constant 0 : i32
      %10 = arith.cmpi eq, %arg0, %c0_i32_8 : i32
      %11 = arith.extui %10 : i1 to i32
      %c0_i32_9 = arith.constant 0 : i32
      %12 = arith.cmpi ne, %11, %c0_i32_9 : i32
      scf.if %12 {
        %c0_108 = arith.constant 0 : index
        %c0_109 = arith.constant 0 : index
        %346 = vector.load %arg3[%c0_108, %c0_109] : memref<8x128xf32, #tpu.memory_space<vmem>>, vector<8x128xf32>
        %c0_110 = arith.constant 0 : index
        %c0_111 = arith.constant 0 : index
        %347 = vector.load %arg12[%c0_110, %c0_111] : memref<8x128xf32, #tpu.memory_space<vmem>>, vector<8x128xf32>
        tpu.vector_store %arg12[%c0_110, %c0_111], %346 {strides = array<i32>} : memref<8x128xf32, #tpu.memory_space<vmem>>, vector<8x128xf32>,
      } else {
      }
      %c0_10 = arith.constant 0 : index
      %c0_11 = arith.constant 0 : index
      %13 = vector.load %arg2[%c0_10, %c0_11] : memref<64x16xbf16, #tpu.memory_space<vmem>>, vector<64x16xbf16>
      %c0_12 = arith.constant 0 : index
      %c0_13 = arith.constant 0 : index
      %14 = vector.load %arg4[%c0_12, %c0_13] : memref<16x384xbf16, #tpu.memory_space<vmem>>, vector<16x384xbf16>
      %cst_14 = arith.constant dense<0.000000e+00> : vector<64x384xf32>
      %15 = tpu.matmul %13, %14, %cst_14 {dimension_numbers = #tpu.dot_dimension_numbers<[1], [0], [0], [1], [0, 0, 1, 1], [], []>} : vector<64x16xbf16>, vector<16x384xbf16>, vector<64x384xf32> -> vector<64x384xf32>
      %c0_15 = arith.constant 0 : index
      %c0_16 = arith.constant 0 : index
      %16 = vector.load %arg6[%c0_15, %c0_16] : memref<1x384xf32, #tpu.memory_space<vmem>>, vector<1x384xf32>
      %17 = vector.broadcast %16 : vector<1x384xf32> to vector<64x384xf32>
      %18 = arith.addf %15, %17 : vector<64x384xf32>
      %c0_17 = arith.constant 0 : index
      %c0_18 = arith.constant 0 : index
      %19 = vector.load %arg14[%c0_17, %c0_18] : memref<64x384xf32, #tpu.memory_space<vmem>>, vector<64x384xf32>
      tpu.vector_store %arg14[%c0_17, %c0_18], %18 {strides = array<i32>} : memref<64x384xf32, #tpu.memory_space<vmem>>, vector<64x384xf32>,
      %c0_19 = arith.constant 0 : index
      %c0_20 = arith.constant 0 : index
      %20 = vector.load %arg5[%c0_19, %c0_20] : memref<128x384xf32, #tpu.memory_space<vmem>>, vector<128x384xf32>
      %c0_21 = arith.constant 0 : index
      %c0_22 = arith.constant 0 : index
      %21 = vector.load %arg7[%c0_21, %c0_22] : memref<1x128xf32, #tpu.memory_space<vmem>>, vector<1x128xf32>
      %22 = vector.shape_cast %21 : vector<1x128xf32> to vector<1x128xf32>
      %23 = vector.broadcast %22 : vector<1x128xf32> to vector<8x128xf32>
      %c0_23 = arith.constant 0 : index
      %c0_24 = arith.constant 0 : index
      %24 = vector.load %arg12[%c0_23, %c0_24] : memref<8x128xf32, #tpu.memory_space<vmem>>, vector<8x128xf32>
      %c0_i32_25 = arith.constant 0 : i32
      %c8_i32 = arith.constant 8 : i32
      %25 = arith.muli %c0_i32_25, %c8_i32 : i32
      %26 = tpu.assume_multiple %25, 8 : i32
      %27 = arith.index_cast %26 : i32 to index
      %c0_26 = arith.constant 0 : index
      %28 = vector.load %arg14[%27, %c0_26] : memref<64x384xf32, #tpu.memory_space<vmem>>, vector<8x384xf32>
      %cst_27 = arith.constant dense<0.000000e+00> : vector<8x384xf32>
      %29 = tpu.matmul %24, %20, %cst_27 {dimension_numbers = #tpu.dot_dimension_numbers<[1], [0], [0], [1], [0, 0, 1, 1], [], []>} : vector<8x128xf32>, vector<128x384xf32>, vector<8x384xf32> -> vector<8x384xf32>
      %30 = vector.extract_strided_slice %28 {offsets = [0, 0], sizes = [8, 128], strides = [1, 1]} : vector<8x384xf32> to vector<8x128xf32>
      %31 = vector.extract_strided_slice %29 {offsets = [0, 0], sizes = [8, 128], strides = [1, 1]} : vector<8x384xf32> to vector<8x128xf32>
      %32 = arith.addf %30, %31 : vector<8x128xf32>
      %33 = arith.negf %32 : vector<8x128xf32>
      %34 = math.exp %33 : vector<8x128xf32>
      %cst_28 = arith.constant 1.000000e+00 : f32
      %35 = vector.broadcast %cst_28 : f32 to vector<8x128xf32>
      %36 = arith.addf %35, %34 : vector<8x128xf32>
      %37 = arith.divf %35, %36 : vector<8x128xf32>
      %38 = vector.extract_strided_slice %28 {offsets = [0, 128], sizes = [8, 128], strides = [1, 1]} : vector<8x384xf32> to vector<8x128xf32>
      %39 = vector.extract_strided_slice %29 {offsets = [0, 128], sizes = [8, 128], strides = [1, 1]} : vector<8x384xf32> to vector<8x128xf32>
      %40 = arith.addf %38, %39 : vector<8x128xf32>
      %41 = arith.negf %40 : vector<8x128xf32>
      %42 = math.exp %41 : vector<8x128xf32>
      %cst_29 = arith.constant 1.000000e+00 : f32
      %43 = vector.broadcast %cst_29 : f32 to vector<8x128xf32>
      %44 = arith.addf %43, %42 : vector<8x128xf32>
      %45 = arith.divf %43, %44 : vector<8x128xf32>
      %46 = vector.extract_strided_slice %28 {offsets = [0, 256], sizes = [8, 128], strides = [1, 1]} : vector<8x384xf32> to vector<8x128xf32>
      %47 = vector.extract_strided_slice %29 {offsets = [0, 256], sizes = [8, 128], strides = [1, 1]} : vector<8x384xf32> to vector<8x128xf32>
      %48 = arith.addf %47, %23 : vector<8x128xf32>
      %49 = arith.mulf %37, %48 : vector<8x128xf32>
      %50 = arith.addf %46, %49 : vector<8x128xf32>
      %51 = math.tanh %50 : vector<8x128xf32>
      %cst_30 = arith.constant 1.000000e+00 : f32
      %52 = vector.broadcast %cst_30 : f32 to vector<8x128xf32>
      %53 = arith.subf %52, %45 : vector<8x128xf32>
      %54 = arith.mulf %53, %51 : vector<8x128xf32>
      %55 = arith.mulf %45, %24 : vector<8x128xf32>
      %56 = arith.addf %54, %55 : vector<8x128xf32>
      %57 = arith.truncf %56 : vector<8x128xf32> to vector<8x128xbf16>
      %58 = arith.index_cast %26 : i32 to index
      %c0_31 = arith.constant 0 : index
      %59 = vector.load %arg13[%58, %c0_31] : memref<64x128xbf16, #tpu.memory_space<vmem>>, vector<8x128xbf16>
      tpu.vector_store %arg13[%58, %c0_31], %57 {strides = array<i32>} : memref<64x128xbf16, #tpu.memory_space<vmem>>, vector<8x128xbf16>,
      %c8_i32_32 = arith.constant 8 : i32
      %60 = arith.muli %arg0, %c8_i32_32 : i32
      %61 = arith.addi %60, %c0_i32_25 : i32
      %c7_i32 = arith.constant 7 : i32
      %62 = arith.cmpi eq, %61, %c7_i32 : i32
      %63 = arith.extui %62 : i1 to i32
      %c0_i32_33 = arith.constant 0 : i32
      %64 = arith.cmpi ne, %63, %c0_i32_33 : i32
      scf.if %64 {
        %c0_108 = arith.constant 0 : index
        %c0_109 = arith.constant 0 : index
        %346 = vector.load %arg11[%c0_108, %c0_109] : memref<8x128xf32, #tpu.memory_space<vmem>>, vector<8x128xf32>
        tpu.vector_store %arg11[%c0_108, %c0_109], %56 {strides = array<i32>} : memref<8x128xf32, #tpu.memory_space<vmem>>, vector<8x128xf32>,
      } else {
      }
      %c1_i32 = arith.constant 1 : i32
      %c8_i32_34 = arith.constant 8 : i32
      %65 = arith.muli %c1_i32, %c8_i32_34 : i32
      %66 = tpu.assume_multiple %65, 8 : i32
      %67 = arith.index_cast %66 : i32 to index
      %c0_35 = arith.constant 0 : index
      %68 = vector.load %arg14[%67, %c0_35] : memref<64x384xf32, #tpu.memory_space<vmem>>, vector<8x384xf32>
      %cst_36 = arith.constant dense<0.000000e+00> : vector<8x384xf32>
      %69 = tpu.matmul %56, %20, %cst_36 {dimension_numbers = #tpu.dot_dimension_numbers<[1], [0], [0], [1], [0, 0, 1, 1], [], []>} : vector<8x128xf32>, vector<128x384xf32>, vector<8x384xf32> -> vector<8x384xf32>
      %70 = vector.extract_strided_slice %68 {offsets = [0, 0], sizes = [8, 128], strides = [1, 1]} : vector<8x384xf32> to vector<8x128xf32>
      %71 = vector.extract_strided_slice %69 {offsets = [0, 0], sizes = [8, 128], strides = [1, 1]} : vector<8x384xf32> to vector<8x128xf32>
      %72 = arith.addf %70, %71 : vector<8x128xf32>
      %73 = arith.negf %72 : vector<8x128xf32>
      %74 = math.exp %73 : vector<8x128xf32>
      %cst_37 = arith.constant 1.000000e+00 : f32
      %75 = vector.broadcast %cst_37 : f32 to vector<8x128xf32>
      %76 = arith.addf %75, %74 : vector<8x128xf32>
      %77 = arith.divf %75, %76 : vector<8x128xf32>
      %78 = vector.extract_strided_slice %68 {offsets = [0, 128], sizes = [8, 128], strides = [1, 1]} : vector<8x384xf32> to vector<8x128xf32>
      %79 = vector.extract_strided_slice %69 {offsets = [0, 128], sizes = [8, 128], strides = [1, 1]} : vector<8x384xf32> to vector<8x128xf32>
      %80 = arith.addf %78, %79 : vector<8x128xf32>
      %81 = arith.negf %80 : vector<8x128xf32>
      %82 = math.exp %81 : vector<8x128xf32>
      %cst_38 = arith.constant 1.000000e+00 : f32
      %83 = vector.broadcast %cst_38 : f32 to vector<8x128xf32>
      %84 = arith.addf %83, %82 : vector<8x128xf32>
      %85 = arith.divf %83, %84 : vector<8x128xf32>
      %86 = vector.extract_strided_slice %68 {offsets = [0, 256], sizes = [8, 128], strides = [1, 1]} : vector<8x384xf32> to vector<8x128xf32>
      %87 = vector.extract_strided_slice %69 {offsets = [0, 256], sizes = [8, 128], strides = [1, 1]} : vector<8x384xf32> to vector<8x128xf32>
      %88 = arith.addf %87, %23 : vector<8x128xf32>
      %89 = arith.mulf %77, %88 : vector<8x128xf32>
      %90 = arith.addf %86, %89 : vector<8x128xf32>
      %91 = math.tanh %90 : vector<8x128xf32>
      %cst_39 = arith.constant 1.000000e+00 : f32
      %92 = vector.broadcast %cst_39 : f32 to vector<8x128xf32>
      %93 = arith.subf %92, %85 : vector<8x128xf32>
      %94 = arith.mulf %93, %91 : vector<8x128xf32>
      %95 = arith.mulf %85, %56 : vector<8x128xf32>
      %96 = arith.addf %94, %95 : vector<8x128xf32>
      %97 = arith.truncf %96 : vector<8x128xf32> to vector<8x128xbf16>
      %98 = arith.index_cast %66 : i32 to index
      %c0_40 = arith.constant 0 : index
      %99 = vector.load %arg13[%98, %c0_40] : memref<64x128xbf16, #tpu.memory_space<vmem>>, vector<8x128xbf16>
      tpu.vector_store %arg13[%98, %c0_40], %97 {strides = array<i32>} : memref<64x128xbf16, #tpu.memory_space<vmem>>, vector<8x128xbf16>,
      %c8_i32_41 = arith.constant 8 : i32
      %100 = arith.muli %arg0, %c8_i32_41 : i32
      %101 = arith.addi %100, %c1_i32 : i32
      %c7_i32_42 = arith.constant 7 : i32
      %102 = arith.cmpi eq, %101, %c7_i32_42 : i32
      %103 = arith.extui %102 : i1 to i32
      %c0_i32_43 = arith.constant 0 : i32
      %104 = arith.cmpi ne, %103, %c0_i32_43 : i32
      scf.if %104 {
        %c0_108 = arith.constant 0 : index
        %c0_109 = arith.constant 0 : index
        %346 = vector.load %arg11[%c0_108, %c0_109] : memref<8x128xf32, #tpu.memory_space<vmem>>, vector<8x128xf32>
        tpu.vector_store %arg11[%c0_108, %c0_109], %96 {strides = array<i32>} : memref<8x128xf32, #tpu.memory_space<vmem>>, vector<8x128xf32>,
      } else {
      }
      %c2_i32 = arith.constant 2 : i32
      %c8_i32_44 = arith.constant 8 : i32
      %105 = arith.muli %c2_i32, %c8_i32_44 : i32
      %106 = tpu.assume_multiple %105, 8 : i32
      %107 = arith.index_cast %106 : i32 to index
      %c0_45 = arith.constant 0 : index
      %108 = vector.load %arg14[%107, %c0_45] : memref<64x384xf32, #tpu.memory_space<vmem>>, vector<8x384xf32>
      %cst_46 = arith.constant dense<0.000000e+00> : vector<8x384xf32>
      %109 = tpu.matmul %96, %20, %cst_46 {dimension_numbers = #tpu.dot_dimension_numbers<[1], [0], [0], [1], [0, 0, 1, 1], [], []>} : vector<8x128xf32>, vector<128x384xf32>, vector<8x384xf32> -> vector<8x384xf32>
      %110 = vector.extract_strided_slice %108 {offsets = [0, 0], sizes = [8, 128], strides = [1, 1]} : vector<8x384xf32> to vector<8x128xf32>
      %111 = vector.extract_strided_slice %109 {offsets = [0, 0], sizes = [8, 128], strides = [1, 1]} : vector<8x384xf32> to vector<8x128xf32>
      %112 = arith.addf %110, %111 : vector<8x128xf32>
      %113 = arith.negf %112 : vector<8x128xf32>
      %114 = math.exp %113 : vector<8x128xf32>
      %cst_47 = arith.constant 1.000000e+00 : f32
      %115 = vector.broadcast %cst_47 : f32 to vector<8x128xf32>
      %116 = arith.addf %115, %114 : vector<8x128xf32>
      %117 = arith.divf %115, %116 : vector<8x128xf32>
      %118 = vector.extract_strided_slice %108 {offsets = [0, 128], sizes = [8, 128], strides = [1, 1]} : vector<8x384xf32> to vector<8x128xf32>
      %119 = vector.extract_strided_slice %109 {offsets = [0, 128], sizes = [8, 128], strides = [1, 1]} : vector<8x384xf32> to vector<8x128xf32>
      %120 = arith.addf %118, %119 : vector<8x128xf32>
      %121 = arith.negf %120 : vector<8x128xf32>
      %122 = math.exp %121 : vector<8x128xf32>
      %cst_48 = arith.constant 1.000000e+00 : f32
      %123 = vector.broadcast %cst_48 : f32 to vector<8x128xf32>
      %124 = arith.addf %123, %122 : vector<8x128xf32>
      %125 = arith.divf %123, %124 : vector<8x128xf32>
      %126 = vector.extract_strided_slice %108 {offsets = [0, 256], sizes = [8, 128], strides = [1, 1]} : vector<8x384xf32> to vector<8x128xf32>
      %127 = vector.extract_strided_slice %109 {offsets = [0, 256], sizes = [8, 128], strides = [1, 1]} : vector<8x384xf32> to vector<8x128xf32>
      %128 = arith.addf %127, %23 : vector<8x128xf32>
      %129 = arith.mulf %117, %128 : vector<8x128xf32>
      %130 = arith.addf %126, %129 : vector<8x128xf32>
      %131 = math.tanh %130 : vector<8x128xf32>
      %cst_49 = arith.constant 1.000000e+00 : f32
      %132 = vector.broadcast %cst_49 : f32 to vector<8x128xf32>
      %133 = arith.subf %132, %125 : vector<8x128xf32>
      %134 = arith.mulf %133, %131 : vector<8x128xf32>
      %135 = arith.mulf %125, %96 : vector<8x128xf32>
      %136 = arith.addf %134, %135 : vector<8x128xf32>
      %137 = arith.truncf %136 : vector<8x128xf32> to vector<8x128xbf16>
      %138 = arith.index_cast %106 : i32 to index
      %c0_50 = arith.constant 0 : index
      %139 = vector.load %arg13[%138, %c0_50] : memref<64x128xbf16, #tpu.memory_space<vmem>>, vector<8x128xbf16>
      tpu.vector_store %arg13[%138, %c0_50], %137 {strides = array<i32>} : memref<64x128xbf16, #tpu.memory_space<vmem>>, vector<8x128xbf16>,
      %c8_i32_51 = arith.constant 8 : i32
      %140 = arith.muli %arg0, %c8_i32_51 : i32
      %141 = arith.addi %140, %c2_i32 : i32
      %c7_i32_52 = arith.constant 7 : i32
      %142 = arith.cmpi eq, %141, %c7_i32_52 : i32
      %143 = arith.extui %142 : i1 to i32
      %c0_i32_53 = arith.constant 0 : i32
      %144 = arith.cmpi ne, %143, %c0_i32_53 : i32
      scf.if %144 {
        %c0_108 = arith.constant 0 : index
        %c0_109 = arith.constant 0 : index
        %346 = vector.load %arg11[%c0_108, %c0_109] : memref<8x128xf32, #tpu.memory_space<vmem>>, vector<8x128xf32>
        tpu.vector_store %arg11[%c0_108, %c0_109], %136 {strides = array<i32>} : memref<8x128xf32, #tpu.memory_space<vmem>>, vector<8x128xf32>,
      } else {
      }
      %c3_i32 = arith.constant 3 : i32
      %c8_i32_54 = arith.constant 8 : i32
      %145 = arith.muli %c3_i32, %c8_i32_54 : i32
      %146 = tpu.assume_multiple %145, 8 : i32
      %147 = arith.index_cast %146 : i32 to index
      %c0_55 = arith.constant 0 : index
      %148 = vector.load %arg14[%147, %c0_55] : memref<64x384xf32, #tpu.memory_space<vmem>>, vector<8x384xf32>
      %cst_56 = arith.constant dense<0.000000e+00> : vector<8x384xf32>
      %149 = tpu.matmul %136, %20, %cst_56 {dimension_numbers = #tpu.dot_dimension_numbers<[1], [0], [0], [1], [0, 0, 1, 1], [], []>} : vector<8x128xf32>, vector<128x384xf32>, vector<8x384xf32> -> vector<8x384xf32>
      %150 = vector.extract_strided_slice %148 {offsets = [0, 0], sizes = [8, 128], strides = [1, 1]} : vector<8x384xf32> to vector<8x128xf32>
      %151 = vector.extract_strided_slice %149 {offsets = [0, 0], sizes = [8, 128], strides = [1, 1]} : vector<8x384xf32> to vector<8x128xf32>
      %152 = arith.addf %150, %151 : vector<8x128xf32>
      %153 = arith.negf %152 : vector<8x128xf32>
      %154 = math.exp %153 : vector<8x128xf32>
      %cst_57 = arith.constant 1.000000e+00 : f32
      %155 = vector.broadcast %cst_57 : f32 to vector<8x128xf32>
      %156 = arith.addf %155, %154 : vector<8x128xf32>
      %157 = arith.divf %155, %156 : vector<8x128xf32>
      %158 = vector.extract_strided_slice %148 {offsets = [0, 128], sizes = [8, 128], strides = [1, 1]} : vector<8x384xf32> to vector<8x128xf32>
      %159 = vector.extract_strided_slice %149 {offsets = [0, 128], sizes = [8, 128], strides = [1, 1]} : vector<8x384xf32> to vector<8x128xf32>
      %160 = arith.addf %158, %159 : vector<8x128xf32>
      %161 = arith.negf %160 : vector<8x128xf32>
      %162 = math.exp %161 : vector<8x128xf32>
      %cst_58 = arith.constant 1.000000e+00 : f32
      %163 = vector.broadcast %cst_58 : f32 to vector<8x128xf32>
      %164 = arith.addf %163, %162 : vector<8x128xf32>
      %165 = arith.divf %163, %164 : vector<8x128xf32>
      %166 = vector.extract_strided_slice %148 {offsets = [0, 256], sizes = [8, 128], strides = [1, 1]} : vector<8x384xf32> to vector<8x128xf32>
      %167 = vector.extract_strided_slice %149 {offsets = [0, 256], sizes = [8, 128], strides = [1, 1]} : vector<8x384xf32> to vector<8x128xf32>
      %168 = arith.addf %167, %23 : vector<8x128xf32>
      %169 = arith.mulf %157, %168 : vector<8x128xf32>
      %170 = arith.addf %166, %169 : vector<8x128xf32>
      %171 = math.tanh %170 : vector<8x128xf32>
      %cst_59 = arith.constant 1.000000e+00 : f32
      %172 = vector.broadcast %cst_59 : f32 to vector<8x128xf32>
      %173 = arith.subf %172, %165 : vector<8x128xf32>
      %174 = arith.mulf %173, %171 : vector<8x128xf32>
      %175 = arith.mulf %165, %136 : vector<8x128xf32>
      %176 = arith.addf %174, %175 : vector<8x128xf32>
      %177 = arith.truncf %176 : vector<8x128xf32> to vector<8x128xbf16>
      %178 = arith.index_cast %146 : i32 to index
      %c0_60 = arith.constant 0 : index
      %179 = vector.load %arg13[%178, %c0_60] : memref<64x128xbf16, #tpu.memory_space<vmem>>, vector<8x128xbf16>
      tpu.vector_store %arg13[%178, %c0_60], %177 {strides = array<i32>} : memref<64x128xbf16, #tpu.memory_space<vmem>>, vector<8x128xbf16>,
      %c8_i32_61 = arith.constant 8 : i32
      %180 = arith.muli %arg0, %c8_i32_61 : i32
      %181 = arith.addi %180, %c3_i32 : i32
      %c7_i32_62 = arith.constant 7 : i32
      %182 = arith.cmpi eq, %181, %c7_i32_62 : i32
      %183 = arith.extui %182 : i1 to i32
      %c0_i32_63 = arith.constant 0 : i32
      %184 = arith.cmpi ne, %183, %c0_i32_63 : i32
      scf.if %184 {
        %c0_108 = arith.constant 0 : index
        %c0_109 = arith.constant 0 : index
        %346 = vector.load %arg11[%c0_108, %c0_109] : memref<8x128xf32, #tpu.memory_space<vmem>>, vector<8x128xf32>
        tpu.vector_store %arg11[%c0_108, %c0_109], %176 {strides = array<i32>} : memref<8x128xf32, #tpu.memory_space<vmem>>, vector<8x128xf32>,
      } else {
      }
      %c4_i32 = arith.constant 4 : i32
      %c8_i32_64 = arith.constant 8 : i32
      %185 = arith.muli %c4_i32, %c8_i32_64 : i32
      %186 = tpu.assume_multiple %185, 8 : i32
      %187 = arith.index_cast %186 : i32 to index
      %c0_65 = arith.constant 0 : index
      %188 = vector.load %arg14[%187, %c0_65] : memref<64x384xf32, #tpu.memory_space<vmem>>, vector<8x384xf32>
      %cst_66 = arith.constant dense<0.000000e+00> : vector<8x384xf32>
      %189 = tpu.matmul %176, %20, %cst_66 {dimension_numbers = #tpu.dot_dimension_numbers<[1], [0], [0], [1], [0, 0, 1, 1], [], []>} : vector<8x128xf32>, vector<128x384xf32>, vector<8x384xf32> -> vector<8x384xf32>
      %190 = vector.extract_strided_slice %188 {offsets = [0, 0], sizes = [8, 128], strides = [1, 1]} : vector<8x384xf32> to vector<8x128xf32>
      %191 = vector.extract_strided_slice %189 {offsets = [0, 0], sizes = [8, 128], strides = [1, 1]} : vector<8x384xf32> to vector<8x128xf32>
      %192 = arith.addf %190, %191 : vector<8x128xf32>
      %193 = arith.negf %192 : vector<8x128xf32>
      %194 = math.exp %193 : vector<8x128xf32>
      %cst_67 = arith.constant 1.000000e+00 : f32
      %195 = vector.broadcast %cst_67 : f32 to vector<8x128xf32>
      %196 = arith.addf %195, %194 : vector<8x128xf32>
      %197 = arith.divf %195, %196 : vector<8x128xf32>
      %198 = vector.extract_strided_slice %188 {offsets = [0, 128], sizes = [8, 128], strides = [1, 1]} : vector<8x384xf32> to vector<8x128xf32>
      %199 = vector.extract_strided_slice %189 {offsets = [0, 128], sizes = [8, 128], strides = [1, 1]} : vector<8x384xf32> to vector<8x128xf32>
      %200 = arith.addf %198, %199 : vector<8x128xf32>
      %201 = arith.negf %200 : vector<8x128xf32>
      %202 = math.exp %201 : vector<8x128xf32>
      %cst_68 = arith.constant 1.000000e+00 : f32
      %203 = vector.broadcast %cst_68 : f32 to vector<8x128xf32>
      %204 = arith.addf %203, %202 : vector<8x128xf32>
      %205 = arith.divf %203, %204 : vector<8x128xf32>
      %206 = vector.extract_strided_slice %188 {offsets = [0, 256], sizes = [8, 128], strides = [1, 1]} : vector<8x384xf32> to vector<8x128xf32>
      %207 = vector.extract_strided_slice %189 {offsets = [0, 256], sizes = [8, 128], strides = [1, 1]} : vector<8x384xf32> to vector<8x128xf32>
      %208 = arith.addf %207, %23 : vector<8x128xf32>
      %209 = arith.mulf %197, %208 : vector<8x128xf32>
      %210 = arith.addf %206, %209 : vector<8x128xf32>
      %211 = math.tanh %210 : vector<8x128xf32>
      %cst_69 = arith.constant 1.000000e+00 : f32
      %212 = vector.broadcast %cst_69 : f32 to vector<8x128xf32>
      %213 = arith.subf %212, %205 : vector<8x128xf32>
      %214 = arith.mulf %213, %211 : vector<8x128xf32>
      %215 = arith.mulf %205, %176 : vector<8x128xf32>
      %216 = arith.addf %214, %215 : vector<8x128xf32>
      %217 = arith.truncf %216 : vector<8x128xf32> to vector<8x128xbf16>
      %218 = arith.index_cast %186 : i32 to index
      %c0_70 = arith.constant 0 : index
      %219 = vector.load %arg13[%218, %c0_70] : memref<64x128xbf16, #tpu.memory_space<vmem>>, vector<8x128xbf16>
      tpu.vector_store %arg13[%218, %c0_70], %217 {strides = array<i32>} : memref<64x128xbf16, #tpu.memory_space<vmem>>, vector<8x128xbf16>,
      %c8_i32_71 = arith.constant 8 : i32
      %220 = arith.muli %arg0, %c8_i32_71 : i32
      %221 = arith.addi %220, %c4_i32 : i32
      %c7_i32_72 = arith.constant 7 : i32
      %222 = arith.cmpi eq, %221, %c7_i32_72 : i32
      %223 = arith.extui %222 : i1 to i32
      %c0_i32_73 = arith.constant 0 : i32
      %224 = arith.cmpi ne, %223, %c0_i32_73 : i32
      scf.if %224 {
        %c0_108 = arith.constant 0 : index
        %c0_109 = arith.constant 0 : index
        %346 = vector.load %arg11[%c0_108, %c0_109] : memref<8x128xf32, #tpu.memory_space<vmem>>, vector<8x128xf32>
        tpu.vector_store %arg11[%c0_108, %c0_109], %216 {strides = array<i32>} : memref<8x128xf32, #tpu.memory_space<vmem>>, vector<8x128xf32>,
      } else {
      }
      %c5_i32 = arith.constant 5 : i32
      %c8_i32_74 = arith.constant 8 : i32
      %225 = arith.muli %c5_i32, %c8_i32_74 : i32
      %226 = tpu.assume_multiple %225, 8 : i32
      %227 = arith.index_cast %226 : i32 to index
      %c0_75 = arith.constant 0 : index
      %228 = vector.load %arg14[%227, %c0_75] : memref<64x384xf32, #tpu.memory_space<vmem>>, vector<8x384xf32>
      %cst_76 = arith.constant dense<0.000000e+00> : vector<8x384xf32>
      %229 = tpu.matmul %216, %20, %cst_76 {dimension_numbers = #tpu.dot_dimension_numbers<[1], [0], [0], [1], [0, 0, 1, 1], [], []>} : vector<8x128xf32>, vector<128x384xf32>, vector<8x384xf32> -> vector<8x384xf32>
      %230 = vector.extract_strided_slice %228 {offsets = [0, 0], sizes = [8, 128], strides = [1, 1]} : vector<8x384xf32> to vector<8x128xf32>
      %231 = vector.extract_strided_slice %229 {offsets = [0, 0], sizes = [8, 128], strides = [1, 1]} : vector<8x384xf32> to vector<8x128xf32>
      %232 = arith.addf %230, %231 : vector<8x128xf32>
      %233 = arith.negf %232 : vector<8x128xf32>
      %234 = math.exp %233 : vector<8x128xf32>
      %cst_77 = arith.constant 1.000000e+00 : f32
      %235 = vector.broadcast %cst_77 : f32 to vector<8x128xf32>
      %236 = arith.addf %235, %234 : vector<8x128xf32>
      %237 = arith.divf %235, %236 : vector<8x128xf32>
      %238 = vector.extract_strided_slice %228 {offsets = [0, 128], sizes = [8, 128], strides = [1, 1]} : vector<8x384xf32> to vector<8x128xf32>
      %239 = vector.extract_strided_slice %229 {offsets = [0, 128], sizes = [8, 128], strides = [1, 1]} : vector<8x384xf32> to vector<8x128xf32>
      %240 = arith.addf %238, %239 : vector<8x128xf32>
      %241 = arith.negf %240 : vector<8x128xf32>
      %242 = math.exp %241 : vector<8x128xf32>
      %cst_78 = arith.constant 1.000000e+00 : f32
      %243 = vector.broadcast %cst_78 : f32 to vector<8x128xf32>
      %244 = arith.addf %243, %242 : vector<8x128xf32>
      %245 = arith.divf %243, %244 : vector<8x128xf32>
      %246 = vector.extract_strided_slice %228 {offsets = [0, 256], sizes = [8, 128], strides = [1, 1]} : vector<8x384xf32> to vector<8x128xf32>
      %247 = vector.extract_strided_slice %229 {offsets = [0, 256], sizes = [8, 128], strides = [1, 1]} : vector<8x384xf32> to vector<8x128xf32>
      %248 = arith.addf %247, %23 : vector<8x128xf32>
      %249 = arith.mulf %237, %248 : vector<8x128xf32>
      %250 = arith.addf %246, %249 : vector<8x128xf32>
      %251 = math.tanh %250 : vector<8x128xf32>
      %cst_79 = arith.constant 1.000000e+00 : f32
      %252 = vector.broadcast %cst_79 : f32 to vector<8x128xf32>
      %253 = arith.subf %252, %245 : vector<8x128xf32>
      %254 = arith.mulf %253, %251 : vector<8x128xf32>
      %255 = arith.mulf %245, %216 : vector<8x128xf32>
      %256 = arith.addf %254, %255 : vector<8x128xf32>
      %257 = arith.truncf %256 : vector<8x128xf32> to vector<8x128xbf16>
      %258 = arith.index_cast %226 : i32 to index
      %c0_80 = arith.constant 0 : index
      %259 = vector.load %arg13[%258, %c0_80] : memref<64x128xbf16, #tpu.memory_space<vmem>>, vector<8x128xbf16>
      tpu.vector_store %arg13[%258, %c0_80], %257 {strides = array<i32>} : memref<64x128xbf16, #tpu.memory_space<vmem>>, vector<8x128xbf16>,
      %c8_i32_81 = arith.constant 8 : i32
      %260 = arith.muli %arg0, %c8_i32_81 : i32
      %261 = arith.addi %260, %c5_i32 : i32
      %c7_i32_82 = arith.constant 7 : i32
      %262 = arith.cmpi eq, %261, %c7_i32_82 : i32
      %263 = arith.extui %262 : i1 to i32
      %c0_i32_83 = arith.constant 0 : i32
      %264 = arith.cmpi ne, %263, %c0_i32_83 : i32
      scf.if %264 {
        %c0_108 = arith.constant 0 : index
        %c0_109 = arith.constant 0 : index
        %346 = vector.load %arg11[%c0_108, %c0_109] : memref<8x128xf32, #tpu.memory_space<vmem>>, vector<8x128xf32>
        tpu.vector_store %arg11[%c0_108, %c0_109], %256 {strides = array<i32>} : memref<8x128xf32, #tpu.memory_space<vmem>>, vector<8x128xf32>,
      } else {
      }
      %c6_i32 = arith.constant 6 : i32
      %c8_i32_84 = arith.constant 8 : i32
      %265 = arith.muli %c6_i32, %c8_i32_84 : i32
      %266 = tpu.assume_multiple %265, 8 : i32
      %267 = arith.index_cast %266 : i32 to index
      %c0_85 = arith.constant 0 : index
      %268 = vector.load %arg14[%267, %c0_85] : memref<64x384xf32, #tpu.memory_space<vmem>>, vector<8x384xf32>
      %cst_86 = arith.constant dense<0.000000e+00> : vector<8x384xf32>
      %269 = tpu.matmul %256, %20, %cst_86 {dimension_numbers = #tpu.dot_dimension_numbers<[1], [0], [0], [1], [0, 0, 1, 1], [], []>} : vector<8x128xf32>, vector<128x384xf32>, vector<8x384xf32> -> vector<8x384xf32>
      %270 = vector.extract_strided_slice %268 {offsets = [0, 0], sizes = [8, 128], strides = [1, 1]} : vector<8x384xf32> to vector<8x128xf32>
      %271 = vector.extract_strided_slice %269 {offsets = [0, 0], sizes = [8, 128], strides = [1, 1]} : vector<8x384xf32> to vector<8x128xf32>
      %272 = arith.addf %270, %271 : vector<8x128xf32>
      %273 = arith.negf %272 : vector<8x128xf32>
      %274 = math.exp %273 : vector<8x128xf32>
      %cst_87 = arith.constant 1.000000e+00 : f32
      %275 = vector.broadcast %cst_87 : f32 to vector<8x128xf32>
      %276 = arith.addf %275, %274 : vector<8x128xf32>
      %277 = arith.divf %275, %276 : vector<8x128xf32>
      %278 = vector.extract_strided_slice %268 {offsets = [0, 128], sizes = [8, 128], strides = [1, 1]} : vector<8x384xf32> to vector<8x128xf32>
      %279 = vector.extract_strided_slice %269 {offsets = [0, 128], sizes = [8, 128], strides = [1, 1]} : vector<8x384xf32> to vector<8x128xf32>
      %280 = arith.addf %278, %279 : vector<8x128xf32>
      %281 = arith.negf %280 : vector<8x128xf32>
      %282 = math.exp %281 : vector<8x128xf32>
      %cst_88 = arith.constant 1.000000e+00 : f32
      %283 = vector.broadcast %cst_88 : f32 to vector<8x128xf32>
      %284 = arith.addf %283, %282 : vector<8x128xf32>
      %285 = arith.divf %283, %284 : vector<8x128xf32>
      %286 = vector.extract_strided_slice %268 {offsets = [0, 256], sizes = [8, 128], strides = [1, 1]} : vector<8x384xf32> to vector<8x128xf32>
      %287 = vector.extract_strided_slice %269 {offsets = [0, 256], sizes = [8, 128], strides = [1, 1]} : vector<8x384xf32> to vector<8x128xf32>
      %288 = arith.addf %287, %23 : vector<8x128xf32>
      %289 = arith.mulf %277, %288 : vector<8x128xf32>
      %290 = arith.addf %286, %289 : vector<8x128xf32>
      %291 = math.tanh %290 : vector<8x128xf32>
      %cst_89 = arith.constant 1.000000e+00 : f32
      %292 = vector.broadcast %cst_89 : f32 to vector<8x128xf32>
      %293 = arith.subf %292, %285 : vector<8x128xf32>
      %294 = arith.mulf %293, %291 : vector<8x128xf32>
      %295 = arith.mulf %285, %256 : vector<8x128xf32>
      %296 = arith.addf %294, %295 : vector<8x128xf32>
      %297 = arith.truncf %296 : vector<8x128xf32> to vector<8x128xbf16>
      %298 = arith.index_cast %266 : i32 to index
      %c0_90 = arith.constant 0 : index
      %299 = vector.load %arg13[%298, %c0_90] : memref<64x128xbf16, #tpu.memory_space<vmem>>, vector<8x128xbf16>
      tpu.vector_store %arg13[%298, %c0_90], %297 {strides = array<i32>} : memref<64x128xbf16, #tpu.memory_space<vmem>>, vector<8x128xbf16>,
      %c8_i32_91 = arith.constant 8 : i32
      %300 = arith.muli %arg0, %c8_i32_91 : i32
      %301 = arith.addi %300, %c6_i32 : i32
      %c7_i32_92 = arith.constant 7 : i32
      %302 = arith.cmpi eq, %301, %c7_i32_92 : i32
      %303 = arith.extui %302 : i1 to i32
      %c0_i32_93 = arith.constant 0 : i32
      %304 = arith.cmpi ne, %303, %c0_i32_93 : i32
      scf.if %304 {
        %c0_108 = arith.constant 0 : index
        %c0_109 = arith.constant 0 : index
        %346 = vector.load %arg11[%c0_108, %c0_109] : memref<8x128xf32, #tpu.memory_space<vmem>>, vector<8x128xf32>
        tpu.vector_store %arg11[%c0_108, %c0_109], %296 {strides = array<i32>} : memref<8x128xf32, #tpu.memory_space<vmem>>, vector<8x128xf32>,
      } else {
      }
      %c7_i32_94 = arith.constant 7 : i32
      %c8_i32_95 = arith.constant 8 : i32
      %305 = arith.muli %c7_i32_94, %c8_i32_95 : i32
      %306 = tpu.assume_multiple %305, 8 : i32
      %307 = arith.index_cast %306 : i32 to index
      %c0_96 = arith.constant 0 : index
      %308 = vector.load %arg14[%307, %c0_96] : memref<64x384xf32, #tpu.memory_space<vmem>>, vector<8x384xf32>
      %cst_97 = arith.constant dense<0.000000e+00> : vector<8x384xf32>
      %309 = tpu.matmul %296, %20, %cst_97 {dimension_numbers = #tpu.dot_dimension_numbers<[1], [0], [0], [1], [0, 0, 1, 1], [], []>} : vector<8x128xf32>, vector<128x384xf32>, vector<8x384xf32> -> vector<8x384xf32>
      %310 = vector.extract_strided_slice %308 {offsets = [0, 0], sizes = [8, 128], strides = [1, 1]} : vector<8x384xf32> to vector<8x128xf32>
      %311 = vector.extract_strided_slice %309 {offsets = [0, 0], sizes = [8, 128], strides = [1, 1]} : vector<8x384xf32> to vector<8x128xf32>
      %312 = arith.addf %310, %311 : vector<8x128xf32>
      %313 = arith.negf %312 : vector<8x128xf32>
      %314 = math.exp %313 : vector<8x128xf32>
      %cst_98 = arith.constant 1.000000e+00 : f32
      %315 = vector.broadcast %cst_98 : f32 to vector<8x128xf32>
      %316 = arith.addf %315, %314 : vector<8x128xf32>
      %317 = arith.divf %315, %316 : vector<8x128xf32>
      %318 = vector.extract_strided_slice %308 {offsets = [0, 128], sizes = [8, 128], strides = [1, 1]} : vector<8x384xf32> to vector<8x128xf32>
      %319 = vector.extract_strided_slice %309 {offsets = [0, 128], sizes = [8, 128], strides = [1, 1]} : vector<8x384xf32> to vector<8x128xf32>
      %320 = arith.addf %318, %319 : vector<8x128xf32>
      %321 = arith.negf %320 : vector<8x128xf32>
      %322 = math.exp %321 : vector<8x128xf32>
      %cst_99 = arith.constant 1.000000e+00 : f32
      %323 = vector.broadcast %cst_99 : f32 to vector<8x128xf32>
      %324 = arith.addf %323, %322 : vector<8x128xf32>
      %325 = arith.divf %323, %324 : vector<8x128xf32>
      %326 = vector.extract_strided_slice %308 {offsets = [0, 256], sizes = [8, 128], strides = [1, 1]} : vector<8x384xf32> to vector<8x128xf32>
      %327 = vector.extract_strided_slice %309 {offsets = [0, 256], sizes = [8, 128], strides = [1, 1]} : vector<8x384xf32> to vector<8x128xf32>
      %328 = arith.addf %327, %23 : vector<8x128xf32>
      %329 = arith.mulf %317, %328 : vector<8x128xf32>
      %330 = arith.addf %326, %329 : vector<8x128xf32>
      %331 = math.tanh %330 : vector<8x128xf32>
      %cst_100 = arith.constant 1.000000e+00 : f32
      %332 = vector.broadcast %cst_100 : f32 to vector<8x128xf32>
      %333 = arith.subf %332, %325 : vector<8x128xf32>
      %334 = arith.mulf %333, %331 : vector<8x128xf32>
      %335 = arith.mulf %325, %296 : vector<8x128xf32>
      %336 = arith.addf %334, %335 : vector<8x128xf32>
      %337 = arith.truncf %336 : vector<8x128xf32> to vector<8x128xbf16>
      %338 = arith.index_cast %306 : i32 to index
      %c0_101 = arith.constant 0 : index
      %339 = vector.load %arg13[%338, %c0_101] : memref<64x128xbf16, #tpu.memory_space<vmem>>, vector<8x128xbf16>
      tpu.vector_store %arg13[%338, %c0_101], %337 {strides = array<i32>} : memref<64x128xbf16, #tpu.memory_space<vmem>>, vector<8x128xbf16>,
      %c8_i32_102 = arith.constant 8 : i32
      %340 = arith.muli %arg0, %c8_i32_102 : i32
      %341 = arith.addi %340, %c7_i32_94 : i32
      %c7_i32_103 = arith.constant 7 : i32
      %342 = arith.cmpi eq, %341, %c7_i32_103 : i32
      %343 = arith.extui %342 : i1 to i32
      %c0_i32_104 = arith.constant 0 : i32
      %344 = arith.cmpi ne, %343, %c0_i32_104 : i32
      scf.if %344 {
        %c0_108 = arith.constant 0 : index
        %c0_109 = arith.constant 0 : index
        %346 = vector.load %arg11[%c0_108, %c0_109] : memref<8x128xf32, #tpu.memory_space<vmem>>, vector<8x128xf32>
        tpu.vector_store %arg11[%c0_108, %c0_109], %336 {strides = array<i32>} : memref<8x128xf32, #tpu.memory_space<vmem>>, vector<8x128xf32>,
      } else {
      }
      %c8_i32_105 = arith.constant 8 : i32
      %c0_106 = arith.constant 0 : index
      %c0_107 = arith.constant 0 : index
      %345 = vector.load %arg12[%c0_106, %c0_107] : memref<8x128xf32, #tpu.memory_space<vmem>>, vector<8x128xf32>
      tpu.vector_store %arg12[%c0_106, %c0_107], %336 {strides = array<i32>} : memref<8x128xf32, #tpu.memory_space<vmem>>, vector<8x128xf32>,
    } else {
    }
    %c0 = arith.constant 0 : index
    %c0_1 = arith.constant 0 : index
    %3 = vector.load %arg13[%c0, %c0_1] : memref<64x128xbf16, #tpu.memory_space<vmem>>, vector<64x128xbf16>
    %c0_2 = arith.constant 0 : index
    %c0_3 = arith.constant 0 : index
    %4 = vector.load %arg8[%c0_2, %c0_3] : memref<128x128xbf16, #tpu.memory_space<vmem>>, vector<128x128xbf16>
    %cst = arith.constant dense<0.000000e+00> : vector<64x128xf32>
    %5 = tpu.matmul %3, %4, %cst {dimension_numbers = #tpu.dot_dimension_numbers<[1], [0], [0], [1], [0, 0, 1, 1], [], []>} : vector<64x128xbf16>, vector<128x128xbf16>, vector<64x128xf32> -> vector<64x128xf32>
    %c0_4 = arith.constant 0 : index
    %c0_5 = arith.constant 0 : index
    %6 = vector.load %arg9[%c0_4, %c0_5] : memref<1x128xf32, #tpu.memory_space<vmem>>, vector<1x128xf32>
    %7 = vector.broadcast %6 : vector<1x128xf32> to vector<64x128xf32>
    %8 = arith.addf %5, %7 : vector<64x128xf32>
    %c0_6 = arith.constant 0 : index
    %c0_7 = arith.constant 0 : index
    %9 = vector.load %arg10[%c0_6, %c0_7] : memref<64x128xf32, #tpu.memory_space<vmem>>, vector<64x128xf32>
    tpu.vector_store %arg10[%c0_6, %c0_7], %8 {strides = array<i32>} : memref<64x128xf32, #tpu.memory_space<vmem>>, vector<64x128xf32>,
    return
  }
  func.func @transform_0(%arg0: i32, %arg1: i32) -> (i32, i32) {
    %c0_i32 = arith.constant 0 : i32
    %c0_i32_0 = arith.constant 0 : i32
    return %arg0, %c0_i32 : i32, i32
  }
  func.func @transform_1(%arg0: i32, %arg1: i32) -> (i32, i32) {
    %c0_i32 = arith.constant 0 : i32
    %c0_i32_0 = arith.constant 0 : i32
    %c0_i32_1 = arith.constant 0 : i32
    return %c0_i32, %c0_i32_0 : i32, i32
  }
  func.func @transform_2(%arg0: i32, %arg1: i32) -> (i32, i32) {
    %c0_i32 = arith.constant 0 : i32
    %c0_i32_0 = arith.constant 0 : i32
    %c0_i32_1 = arith.constant 0 : i32
    return %c0_i32, %c0_i32_0 : i32, i32
  }
  func.func @transform_3(%arg0: i32, %arg1: i32) -> (i32, i32) {
    %c0_i32 = arith.constant 0 : i32
    %c0_i32_0 = arith.constant 0 : i32
    %c0_i32_1 = arith.constant 0 : i32
    return %c0_i32, %c0_i32_0 : i32, i32
  }
  func.func @transform_4(%arg0: i32, %arg1: i32) -> (i32, i32) {
    %c0_i32 = arith.constant 0 : i32
    %c0_i32_0 = arith.constant 0 : i32
    %c0_i32_1 = arith.constant 0 : i32
    return %c0_i32, %c0_i32_0 : i32, i32
  }
  func.func @transform_5(%arg0: i32, %arg1: i32) -> (i32, i32) {
    %c0_i32 = arith.constant 0 : i32
    %c0_i32_0 = arith.constant 0 : i32
    %c0_i32_1 = arith.constant 0 : i32
    return %c0_i32, %c0_i32_0 : i32, i32
  }
  func.func @transform_6(%arg0: i32, %arg1: i32) -> (i32, i32) {
    %c0_i32 = arith.constant 0 : i32
    %c0_i32_0 = arith.constant 0 : i32
    return %c0_i32, %arg1 : i32, i32
  }
  func.func @transform_7(%arg0: i32, %arg1: i32) -> (i32, i32) {
    %c0_i32 = arith.constant 0 : i32
    %c0_i32_0 = arith.constant 0 : i32
    return %c0_i32, %arg1 : i32, i32
  }
  func.func @transform_8(%arg0: i32, %arg1: i32) -> (i32, i32) {
    %c0_i32 = arith.constant 0 : i32
    return %arg0, %arg1 : i32, i32
  }
  func.func @transform_9(%arg0: i32, %arg1: i32) -> (i32, i32) {
    %c0_i32 = arith.constant 0 : i32
    %c0_i32_0 = arith.constant 0 : i32
    %c0_i32_1 = arith.constant 0 : i32
    return %c0_i32, %c0_i32_0 : i32, i32
  }
}

</mosaic_0001>

<llo_original>
// kernel: text_generator_forward.1
$region0: #{text_generator_forward.1}
  #allocation0 [shape = 'u32[]', space=smem, size = 0x4, offset = 0x4, fixed_abs, tag = 'smem constant byte address 0x4 - core index']
  #allocation1 [shape = 'u32[72,128]{1,0:T(1,128)}', space=vmem, size = 0x9000, scoped, tag = 'internal scratch']
  #allocation2 [shape = 'f32[8,128]{1,0:T(8,128)}', space=vmem, size = 0x1000, scoped, tag = 'scratch operand']
  #allocation3 [shape = 'bf16[64,128]{1,0:T(8,128)(2,1)}', space=vmem, size = 0x4000, scoped, tag = 'scratch operand']
  #allocation4 [shape = 'f32[64,384]{1,0:T(8,128)}', space=vmem, size = 0x18000, scoped, tag = 'scratch operand']
  %s0 = inlined_call_operand.vmem [shape: bf16[64,16], index: 0, kind: input, shape index: {}]
  %s1 = inlined_call_operand.vmem [shape: f32[8,128], index: 1, kind: input, shape index: {}]
  %s2 = inlined_call_operand.vmem [shape: bf16[16,384], index: 2, kind: input, shape index: {}]
  %s3 = inlined_call_operand.vmem [shape: f32[128,384], index: 3, kind: input, shape index: {}]
  %s4 = inlined_call_operand.vmem [shape: f32[1,384], index: 4, kind: input, shape index: {}]
  %s5 = inlined_call_operand.vmem [shape: f32[1,128], index: 5, kind: input, shape index: {}]
  %s6 = inlined_call_operand.vmem [shape: bf16[128,128], index: 6, kind: input, shape index: {}]
  %s7 = inlined_call_operand.vmem [shape: f32[1,128], index: 7, kind: input, shape index: {}]
  %s8 = inlined_call_operand.vmem [shape: f32[64,128], index: 8, kind: output, shape index: {0}]
  %s9 = inlined_call_operand.vmem [shape: f32[8,128], index: 9, kind: output, shape index: {1}]
  %10 = xla_tuple %s8, %s9
  %s11 = sld [smem:[#allocation0]]
  $region90: #{text_generator_forward.1} parent=0
    _
  %s13 = ssub.s32 1, %s11
  %s14 = scalar_select 0, %s13, %s11
  // Predicated region
  $region2: #{text_generator_forward.1} parent=0 // pred_check
    _
  $region3: #{text_generator_forward.1} parent=0 // pred_check_branch
    %16 = sbr.rel (0) target = $region5
  $region4: #{text_generator_forward.1} parent=0 // pred_region
    _
  $region5: #{text_generator_forward.1} parent=0 // pred_fallthru
    _
  // Predicated region
  $region6: #{text_generator_forward.1} parent=0 // pred_check
    _
  $region7: #{text_generator_forward.1} parent=0 // pred_check_branch
    %18 = sbr.rel (0) target = $region9
  $region8: #{text_generator_forward.1} parent=0 // pred_region
    _
  $region9: #{text_generator_forward.1} parent=0 // pred_fallthru
    _
  // Predicated region
  $region10: #{text_generator_forward.1} parent=0 // pred_check
    _
  $region11: #{text_generator_forward.1} parent=0 // pred_check_branch
    %20 = sbr.rel (0) target = $region13
  $region12: #{text_generator_forward.1} parent=0 // pred_region
    _
  $region13: #{text_generator_forward.1} parent=0 // pred_fallthru
    _
  // Predicated region
  $region14: #{text_generator_forward.1} parent=0 // pred_check
    _
  $region15: #{text_generator_forward.1} parent=0 // pred_check_branch
    %22 = sbr.rel (0) target = $region17
  $region16: #{text_generator_forward.1} parent=0 // pred_region
    _
  $region17: #{text_generator_forward.1} parent=0 // pred_fallthru
    _
  // Predicated region
  $region18: #{text_generator_forward.1} parent=0 // pred_check
    _
  $region19: #{text_generator_forward.1} parent=0 // pred_check_branch
    %24 = sbr.rel (0) target = $region21
  $region20: #{text_generator_forward.1} parent=0 // pred_region
    _
  $region21: #{text_generator_forward.1} parent=0 // pred_fallthru
    _
  // Predicated region
  $region22: #{text_generator_forward.1} parent=0 // pred_check
    _
  $region23: #{text_generator_forward.1} parent=0 // pred_check_branch
    %26 = sbr.rel (0) target = $region25
  $region24: #{text_generator_forward.1} parent=0 // pred_region
    _
  $region25: #{text_generator_forward.1} parent=0 // pred_fallthru
    _
  // Predicated region
  $region26: #{text_generator_forward.1} parent=0 // pred_check
    _
  $region27: #{text_generator_forward.1} parent=0 // pred_check_branch
    %28 = sbr.rel (0) target = $region29
  $region28: #{text_generator_forward.1} parent=0 // pred_region
    _
  $region29: #{text_generator_forward.1} parent=0 // pred_fallthru
    _
  // Predicated region
  $region30: #{text_generator_forward.1} parent=0 // pred_check
    _
  $region31: #{text_generator_forward.1} parent=0 // pred_check_branch
    %30 = sbr.rel (0) target = $region33
  $region32: #{text_generator_forward.1} parent=0 // pred_region
    _
  $region33: #{text_generator_forward.1} parent=0 // pred_fallthru
    _
  %p32 = scmp.eq.s32.totalorder 0, 0
  // Predicated region
  $region34: #{text_generator_forward.1} parent=0 // pred_check
    %p33 = pneg %p32
  $region35: #{text_generator_forward.1} parent=0 // pred_check_branch
    %35 = sbr.rel (%p33) target = $region37
  $region36: #{text_generator_forward.1} parent=0 // pred_region
    %p36 = scmp.eq.s32.totalorder 0, 0
    // Predicated region
    $region38: #{text_generator_forward.1} parent=36 // pred_check
      %p37 = pneg %p36
    $region39: #{text_generator_forward.1} parent=36 // pred_check_branch
      %39 = sbr.rel (%p37) target = $region41
    $region40: #{text_generator_forward.1} parent=36 // pred_region
      %v40 = vld [vmem:[%s1] sm:$0xff]
      %41 = vst [vmem:[#allocation2] sm:$0xff] %v40
    $region41: #{text_generator_forward.1} parent=36 // pred_fallthru
      _
    %v42 = vld [vmem:[%s0] sm:$0xf]
    %v43 = vld [vmem:[%s0 + $0x4] sm:$0xf]
    %v44 = vld [vmem:[%s0 + $0x8] sm:$0xf]
    %v45 = vld [vmem:[%s0 + $0xc] sm:$0xf]
    %v46 = vld [vmem:[%s0 + $0x10] sm:$0xf]
    %v47 = vld [vmem:[%s0 + $0x14] sm:$0xf]
    %v48 = vld [vmem:[%s0 + $0x18] sm:$0xf]
    %v49 = vld [vmem:[%s0 + $0x1c] sm:$0xf]
    %v50 = vld [vmem:[%s2] sm:$0xff]
    %v51 = vld [vmem:[%s2 + $0x8] sm:$0xf]
    %v52 = vld [vmem:[%s2 + $0xc] sm:$0xff]
    %v53 = vld [vmem:[%s2 + $0x14] sm:$0xf]
    %v54 = vld [vmem:[%s4] sm:$0x7]
    %v56 = vperm.slane %v54, 0
    %v57 = vperm.slane %v54, 1
    %v58 = vperm.slane %v54, 2
    %v70 = vunpack.c.l.b16 %v42
    %v71 = vunpack.c.l.b16 %v43
    %v72 = vunpack.c.l.b16 %v44
    %v73 = vunpack.c.l.b16 %v45
    %v74 = vunpack.c.l.b16 %v46
    %v75 = vunpack.c.l.b16 %v47
    %v76 = vunpack.c.l.b16 %v48
    %v77 = vunpack.c.l.b16 %v49
    %v78 = vpack.c.b16 %v71, %v70
    %v79 = vpack.c.b16 %v73, %v72
    %v80 = vpack.c.b16 %v75, %v74
    %v81 = vpack.c.b16 %v77, %v76
    %v86 = vunpack.c.l.b16 %v50
    %v87 = vunpack.c.h.b16 %v50
    %v88 = vunpack.c.l.b16 %v51
    %v89 = vunpack.c.l.b16 %v52
    %v90 = vunpack.c.h.b16 %v52
    %v91 = vunpack.c.l.b16 %v53
    %v92 = vpack.c.b16 %v89, %v86
    %v93 = vpack.c.b16 %v90, %v87
    %v94 = vpack.c.b16 %v91, %v88
    %vm98 = vcmask 130048
    %v100 = vsel %vm98, %v78, 0
    %v103 = vsel %vm98, %v79, 0
    %v106 = vsel %vm98, %v80, 0
    %v109 = vsel %vm98, %v81, 0
    %111 = vmatpush.bf16.msra.mxu0 0
    %112 = vmatpush.bf16.msra.mxu0 0
    %113 = vmatpush.bf16.msra.mxu0 0
    %114 = vmatpush.bf16.msra.mxu0 0
    %115 = vmatpush.bf16.msra.mxu0 0
    %116 = vmatpush.bf16.msra.mxu0 0
    %117 = vmatpush.bf16.msra.mxu0 0
    %118 = vmatpush.bf16.msra.mxu0 %v92
    %119 = vmatmul.bf16.gmra.mxu0 %v100
    %v120 = vpop.f32.mrf.mxu0
    %v121 = vadd.f32 %v56, %v120
    %v122 = vpop.f32.mrf.mxu0
    %v123 = vadd.f32 %v56, %v122
    %124 = vmatmul.bf16.gmra.mxu0 %v103
    %v125 = vpop.f32.mrf.mxu0
    %v126 = vadd.f32 %v56, %v125
    %v127 = vpop.f32.mrf.mxu0
    %v128 = vadd.f32 %v56, %v127
    %129 = vmatmul.bf16.gmra.mxu0 %v106
    %v130 = vpop.f32.mrf.mxu0
    %v131 = vadd.f32 %v56, %v130
    %v132 = vpop.f32.mrf.mxu0
    %v133 = vadd.f32 %v56, %v132
    %134 = vmatmul.bf16.gmra.mxu0 %v109
    %v135 = vpop.f32.mrf.mxu0
    %v136 = vadd.f32 %v56, %v135
    %v137 = vpop.f32.mrf.mxu0
    %v138 = vadd.f32 %v56, %v137
    %139 = vdwg.mxu0
    %140 = vmatpush.bf16.msra.mxu0 0
    %141 = vmatpush.bf16.msra.mxu0 0
    %142 = vmatpush.bf16.msra.mxu0 0
    %143 = vmatpush.bf16.msra.mxu0 0
    %144 = vmatpush.bf16.msra.mxu0 0
    %145 = vmatpush.bf16.msra.mxu0 0
    %146 = vmatpush.bf16.msra.mxu0 0
    %147 = vmatpush.bf16.msra.mxu0 %v93
    %148 = vmatmul.bf16.gmra.mxu0 %v100
    %v149 = vpop.f32.mrf.mxu0
    %v150 = vadd.f32 %v57, %v149
    %v151 = vpop.f32.mrf.mxu0
    %v152 = vadd.f32 %v57, %v151
    %153 = vmatmul.bf16.gmra.mxu0 %v103
    %v154 = vpop.f32.mrf.mxu0
    %v155 = vadd.f32 %v57, %v154
    %v156 = vpop.f32.mrf.mxu0
    %v157 = vadd.f32 %v57, %v156
    %158 = vmatmul.bf16.gmra.mxu0 %v106
    %v159 = vpop.f32.mrf.mxu0
    %v160 = vadd.f32 %v57, %v159
    %v161 = vpop.f32.mrf.mxu0
    %v162 = vadd.f32 %v57, %v161
    %163 = vmatmul.bf16.gmra.mxu0 %v109
    %v164 = vpop.f32.mrf.mxu0
    %v165 = vadd.f32 %v57, %v164
    %v166 = vpop.f32.mrf.mxu0
    %v167 = vadd.f32 %v57, %v166
    %168 = vdwg.mxu0
    %169 = vmatpush.bf16.msra.mxu0 0
    %170 = vmatpush.bf16.msra.mxu0 0
    %171 = vmatpush.bf16.msra.mxu0 0
    %172 = vmatpush.bf16.msra.mxu0 0
    %173 = vmatpush.bf16.msra.mxu0 0
    %174 = vmatpush.bf16.msra.mxu0 0
    %175 = vmatpush.bf16.msra.mxu0 0
    %176 = vmatpush.bf16.msra.mxu0 %v94
    %177 = vmatmul.bf16.gmra.mxu0 %v100
    %v178 = vpop.f32.mrf.mxu0
    %v179 = vadd.f32 %v58, %v178
    %v180 = vpop.f32.mrf.mxu0
    %v181 = vadd.f32 %v58, %v180
    %182 = vmatmul.bf16.gmra.mxu0 %v103
    %v183 = vpop.f32.mrf.mxu0
    %v184 = vadd.f32 %v58, %v183
    %v185 = vpop.f32.mrf.mxu0
    %v186 = vadd.f32 %v58, %v185
    %187 = vmatmul.bf16.gmra.mxu0 %v106
    %v188 = vpop.f32.mrf.mxu0
    %v189 = vadd.f32 %v58, %v188
    %v190 = vpop.f32.mrf.mxu0
    %v191 = vadd.f32 %v58, %v190
    %192 = vmatmul.bf16.gmra.mxu0 %v109
    %v193 = vpop.f32.mrf.mxu0
    %v194 = vadd.f32 %v58, %v193
    %v195 = vpop.f32.mrf.mxu0
    %v196 = vadd.f32 %v58, %v195
    %197 = vdwg.mxu0
    %198 = vst [vmem:[#allocation4] sm:$0xff] %v121
    %199 = vst [vmem:[#allocation4 + $0x8] sm:$0xff] %v150
    %200 = vst [vmem:[#allocation4 + $0x10] sm:$0xff] %v179
    %201 = vst [vmem:[#allocation4 + $0x18] sm:$0xff] %v123
    %202 = vst [vmem:[#allocation4 + $0x20] sm:$0xff] %v152
    %203 = vst [vmem:[#allocation4 + $0x28] sm:$0xff] %v181
    %204 = vst [vmem:[#allocation4 + $0x30] sm:$0xff] %v126
    %205 = vst [vmem:[#allocation4 + $0x38] sm:$0xff] %v155
    %206 = vst [vmem:[#allocation4 + $0x40] sm:$0xff] %v184
    %207 = vst [vmem:[#allocation4 + $0x48] sm:$0xff] %v128
    %208 = vst [vmem:[#allocation4 + $0x50] sm:$0xff] %v157
    %209 = vst [vmem:[#allocation4 + $0x58] sm:$0xff] %v186
    %210 = vst [vmem:[#allocation4 + $0x60] sm:$0xff] %v131
    %211 = vst [vmem:[#allocation4 + $0x68] sm:$0xff] %v160
    %212 = vst [vmem:[#allocation4 + $0x70] sm:$0xff] %v189
    %213 = vst [vmem:[#allocation4 + $0x78] sm:$0xff] %v133
    %214 = vst [vmem:[#allocation4 + $0x80] sm:$0xff] %v162
    %215 = vst [vmem:[#allocation4 + $0x88] sm:$0xff] %v191
    %216 = vst [vmem:[#allocation4 + $0x90] sm:$0xff] %v136
    %217 = vst [vmem:[#allocation4 + $0x98] sm:$0xff] %v165
    %218 = vst [vmem:[#allocation4 + $0xa0] sm:$0xff] %v194
    %219 = vst [vmem:[#allocation4 + $0xa8] sm:$0xff] %v138
    %220 = vst [vmem:[#allocation4 + $0xb0] sm:$0xff] %v167
    %221 = vst [vmem:[#allocation4 + $0xb8] sm:$0xff] %v196
    %v222 = vld [vmem:[%s3] sm:$0xff]
    %v223 = vld [vmem:[%s3 + $0x8] sm:$0xff]
    %v224 = vld [vmem:[%s3 + $0x10] sm:$0xff]
    %v225 = vld [vmem:[%s3 + $0x18] sm:$0xff]
    %v226 = vld [vmem:[%s3 + $0x20] sm:$0xff]
    %v227 = vld [vmem:[%s3 + $0x28] sm:$0xff]
    %v228 = vld [vmem:[%s3 + $0x30] sm:$0xff]
    %v229 = vld [vmem:[%s3 + $0x38] sm:$0xff]
    %v230 = vld [vmem:[%s3 + $0x40] sm:$0xff]
    %v231 = vld [vmem:[%s3 + $0x48] sm:$0xff]
    %v232 = vld [vmem:[%s3 + $0x50] sm:$0xff]
    %v233 = vld [vmem:[%s3 + $0x58] sm:$0xff]
    %v234 = vld [vmem:[%s3 + $0x60] sm:$0xff]
    %v235 = vld [vmem:[%s3 + $0x68] sm:$0xff]
    %v236 = vld [vmem:[%s3 + $0x70] sm:$0xff]
    %v237 = vld [vmem:[%s3 + $0x78] sm:$0xff]
    %v238 = vld [vmem:[%s3 + $0x80] sm:$0xff]
    %v239 = vld [vmem:[%s3 + $0x88] sm:$0xff]
    %v240 = vld [vmem:[%s3 + $0x90] sm:$0xff]
    %v241 = vld [vmem:[%s3 + $0x98] sm:$0xff]
    %v242 = vld [vmem:[%s3 + $0xa0] sm:$0xff]
    %v243 = vld [vmem:[%s3 + $0xa8] sm:$0xff]
    %v244 = vld [vmem:[%s3 + $0xb0] sm:$0xff]
    %v245 = vld [vmem:[%s3 + $0xb8] sm:$0xff]
    %v246 = vld [vmem:[%s3 + $0xc0] sm:$0xff]
    %v247 = vld [vmem:[%s3 + $0xc8] sm:$0xff]
    %v248 = vld [vmem:[%s3 + $0xd0] sm:$0xff]
    %v249 = vld [vmem:[%s3 + $0xd8] sm:$0xff]
    %v250 = vld [vmem:[%s3 + $0xe0] sm:$0xff]
    %v251 = vld [vmem:[%s3 + $0xe8] sm:$0xff]
    %v252 = vld [vmem:[%s3 + $0xf0] sm:$0xff]
    %v253 = vld [vmem:[%s3 + $0xf8] sm:$0xff]
    %v254 = vld [vmem:[%s3 + $0x100] sm:$0xff]
    %v255 = vld [vmem:[%s3 + $0x108] sm:$0xff]
    %v256 = vld [vmem:[%s3 + $0x110] sm:$0xff]
    %v257 = vld [vmem:[%s3 + $0x118] sm:$0xff]
    %v258 = vld [vmem:[%s3 + $0x120] sm:$0xff]
    %v259 = vld [vmem:[%s3 + $0x128] sm:$0xff]
    %v260 = vld [vmem:[%s3 + $0x130] sm:$0xff]
    %v261 = vld [vmem:[%s3 + $0x138] sm:$0xff]
    %v262 = vld [vmem:[%s3 + $0x140] sm:$0xff]
    %v263 = vld [vmem:[%s3 + $0x148] sm:$0xff]
    %v264 = vld [vmem:[%s3 + $0x150] sm:$0xff]
    %v265 = vld [vmem:[%s3 + $0x158] sm:$0xff]
    %v266 = vld [vmem:[%s3 + $0x160] sm:$0xff]
    %v267 = vld [vmem:[%s3 + $0x168] sm:$0xff]
    %v268 = vld [vmem:[%s3 + $0x170] sm:$0xff]
    %v269 = vld [vmem:[%s3 + $0x178] sm:$0xff]
    %v270 = vld [vmem:[%s5] sm:$0x1]
    %v272 = vperm.slane %v270, 0
    %v274 = vld [vmem:[#allocation2] sm:$0xff]
    %s275 = smul.u32 0, 3
    %s276 = smul.addr %s275, 8
    %s277 = scalar_lea.vmem [#allocation4], %s276
    %v278 = vld [vmem:[%s277] sm:$0xff]
    %v279 = vld [vmem:[%s277 + $0x8] sm:$0xff]
    %v280 = vld [vmem:[%s277 + $0x10] sm:$0xff]
    %281 = vmatpush.msra.mxu0 %v267
    %282 = vmatpush.msra.mxu0 %v264
    %283 = vmatpush.msra.mxu0 %v261
    %284 = vmatpush.msra.mxu0 %v258
    %285 = vmatpush.msra.mxu0 %v255
    %286 = vmatpush.msra.mxu0 %v252
    %287 = vmatpush.msra.mxu0 %v249
    %288 = vmatpush.msra.mxu0 %v246
    %289 = vmatpush.msra.mxu0 %v243
    %290 = vmatpush.msra.mxu0 %v240
    %291 = vmatpush.msra.mxu0 %v237
    %292 = vmatpush.msra.mxu0 %v234
    %293 = vmatpush.msra.mxu0 %v231
    %294 = vmatpush.msra.mxu0 %v228
    %295 = vmatpush.msra.mxu0 %v225
    %296 = vmatpush.msra.mxu0 %v222
    %297 = vmatmul.f32.gmra.mxu0 %v274
    %v298 = vpop.f32.mrf.mxu0
    %v299 = vadd.f32 0.0, %v298
    %300 = vdwg.mxu0
    %301 = vmatpush.msra.mxu0 %v268
    %302 = vmatpush.msra.mxu0 %v265
    %303 = vmatpush.msra.mxu0 %v262
    %304 = vmatpush.msra.mxu0 %v259
    %305 = vmatpush.msra.mxu0 %v256
    %306 = vmatpush.msra.mxu0 %v253
    %307 = vmatpush.msra.mxu0 %v250
    %308 = vmatpush.msra.mxu0 %v247
    %309 = vmatpush.msra.mxu0 %v244
    %310 = vmatpush.msra.mxu0 %v241
    %311 = vmatpush.msra.mxu0 %v238
    %312 = vmatpush.msra.mxu0 %v235
    %313 = vmatpush.msra.mxu0 %v232
    %314 = vmatpush.msra.mxu0 %v229
    %315 = vmatpush.msra.mxu0 %v226
    %316 = vmatpush.msra.mxu0 %v223
    %317 = vmatmul.f32.gmra.mxu0 %v274
    %v318 = vpop.f32.mrf.mxu0
    %v319 = vadd.f32 0.0, %v318
    %320 = vdwg.mxu0
    %321 = vmatpush.msra.mxu0 %v269
    %322 = vmatpush.msra.mxu0 %v266
    %323 = vmatpush.msra.mxu0 %v263
    %324 = vmatpush.msra.mxu0 %v260
    %325 = vmatpush.msra.mxu0 %v257
    %326 = vmatpush.msra.mxu0 %v254
    %327 = vmatpush.msra.mxu0 %v251
    %328 = vmatpush.msra.mxu0 %v248
    %329 = vmatpush.msra.mxu0 %v245
    %330 = vmatpush.msra.mxu0 %v242
    %331 = vmatpush.msra.mxu0 %v239
    %332 = vmatpush.msra.mxu0 %v236
    %333 = vmatpush.msra.mxu0 %v233
    %334 = vmatpush.msra.mxu0 %v230
    %335 = vmatpush.msra.mxu0 %v227
    %336 = vmatpush.msra.mxu0 %v224
    %337 = vmatmul.f32.gmra.mxu0 %v274
    %v338 = vpop.f32.mrf.mxu0
    %v339 = vadd.f32 0.0, %v338
    %340 = vdwg.mxu0
    %v341 = vadd.f32 %v278, %v299
    %v342 = vxor.u32 %v341, 2147483648
    %v343 = vmul.f32 %v342, 1.442695
    %v344 = vpow.pop %v343
    %v345 = vadd.f32 %v344, 1.0
    %v346 = vrcp.pop %v345
    %v347 = vmul.f32 %v345, %v346
    %v348 = vsub.f32 1.0, %v347
    %v349 = vmul.f32 %v346, %v348
    %v350 = vadd.f32 %v346, %v349
    %vm351 = vweird.f32 %v345
    %vm352 = vweird.f32 %v346
    %vm353 = vmor %vm351, %vm352
    %v354 = vsel %vm353, %v346, %v350
    %v355 = vand.u32 2147483647, %v345
    %vm356 = vcmp.eq.f32.partialorder %v355, 8.507059e+37
    %v357 = vand.u32 %v345, 2147483648
    %v358 = vor.u32 1.1754944e-38, %v357
    %v359 = vsel %vm356, %v358, %v354
    %v360 = vmul.f32 1.0, %v359
    %v361 = vadd.f32 %v279, %v319
    %v362 = vxor.u32 %v361, 2147483648
    %v363 = vmul.f32 %v362, 1.442695
    %v364 = vpow.pop %v363
    %v365 = vadd.f32 %v364, 1.0
    %v366 = vrcp.pop %v365
    %v367 = vmul.f32 %v365, %v366
    %v368 = vsub.f32 1.0, %v367
    %v369 = vmul.f32 %v366, %v368
    %v370 = vadd.f32 %v366, %v369
    %vm371 = vweird.f32 %v365
    %vm372 = vweird.f32 %v366
    %vm373 = vmor %vm371, %vm372
    %v374 = vsel %vm373, %v366, %v370
    %v375 = vand.u32 2147483647, %v365
    %vm376 = vcmp.eq.f32.partialorder %v375, 8.507059e+37
    %v377 = vand.u32 %v365, 2147483648
    %v378 = vor.u32 1.1754944e-38, %v377
    %v379 = vsel %vm376, %v378, %v374
    %v380 = vmul.f32 1.0, %v379
    %v381 = vadd.f32 %v339, %v272
    %v382 = vmul.f32 %v360, %v381
    %v383 = vadd.f32 %v280, %v382
    %v384 = vtanh.pop %v383
    %v385 = vsub.f32 1.0, %v380
    %v386 = vmul.f32 %v385, %v384
    %v387 = vmul.f32 %v380, %v274
    %v388 = vadd.f32 %v386, %v387
    %v389 = vpack.c.bf16 %v388, %v388
    %390 = vst [vmem:[#allocation3] sm:$0xf] %v389
    %s391 = smul.u32 0, 8
    %p392 = scmp.eq.s32.totalorder %s391, 7
    // Predicated region
    $region42: #{text_generator_forward.1} parent=36 // pred_check
      %p393 = pneg %p392
    $region43: #{text_generator_forward.1} parent=36 // pred_check_branch
      %395 = sbr.rel (%p393) target = $region45
    $region44: #{text_generator_forward.1} parent=36 // pred_region
      %396 = vst [vmem:[%s9] sm:$0xff] %v388
    $region45: #{text_generator_forward.1} parent=36 // pred_fallthru
      _
    %s397 = smul.u32 1, 3
    %s398 = smul.addr %s397, 8
    %s399 = scalar_lea.vmem [#allocation4], %s398
    %v400 = vld [vmem:[%s399] sm:$0xff]
    %v401 = vld [vmem:[%s399 + $0x8] sm:$0xff]
    %v402 = vld [vmem:[%s399 + $0x10] sm:$0xff]
    %403 = vmatpush.msra.mxu0 %v267
    %404 = vmatpush.msra.mxu0 %v264
    %405 = vmatpush.msra.mxu0 %v261
    %406 = vmatpush.msra.mxu0 %v258
    %407 = vmatpush.msra.mxu0 %v255
    %408 = vmatpush.msra.mxu0 %v252
    %409 = vmatpush.msra.mxu0 %v249
    %410 = vmatpush.msra.mxu0 %v246
    %411 = vmatpush.msra.mxu0 %v243
    %412 = vmatpush.msra.mxu0 %v240
    %413 = vmatpush.msra.mxu0 %v237
    %414 = vmatpush.msra.mxu0 %v234
    %415 = vmatpush.msra.mxu0 %v231
    %416 = vmatpush.msra.mxu0 %v228
    %417 = vmatpush.msra.mxu0 %v225
    %418 = vmatpush.msra.mxu0 %v222
    %419 = vmatmul.f32.gmra.mxu0 %v388
    %v420 = vpop.f32.mrf.mxu0
    %v421 = vadd.f32 0.0, %v420
    %422 = vdwg.mxu0
    %423 = vmatpush.msra.mxu0 %v268
    %424 = vmatpush.msra.mxu0 %v265
    %425 = vmatpush.msra.mxu0 %v262
    %426 = vmatpush.msra.mxu0 %v259
    %427 = vmatpush.msra.mxu0 %v256
    %428 = vmatpush.msra.mxu0 %v253
    %429 = vmatpush.msra.mxu0 %v250
    %430 = vmatpush.msra.mxu0 %v247
    %431 = vmatpush.msra.mxu0 %v244
    %432 = vmatpush.msra.mxu0 %v241
    %433 = vmatpush.msra.mxu0 %v238
    %434 = vmatpush.msra.mxu0 %v235
    %435 = vmatpush.msra.mxu0 %v232
    %436 = vmatpush.msra.mxu0 %v229
    %437 = vmatpush.msra.mxu0 %v226
    %438 = vmatpush.msra.mxu0 %v223
    %439 = vmatmul.f32.gmra.mxu0 %v388
    %v440 = vpop.f32.mrf.mxu0
    %v441 = vadd.f32 0.0, %v440
    %442 = vdwg.mxu0
    %443 = vmatpush.msra.mxu0 %v269
    %444 = vmatpush.msra.mxu0 %v266
    %445 = vmatpush.msra.mxu0 %v263
    %446 = vmatpush.msra.mxu0 %v260
    %447 = vmatpush.msra.mxu0 %v257
    %448 = vmatpush.msra.mxu0 %v254
    %449 = vmatpush.msra.mxu0 %v251
    %450 = vmatpush.msra.mxu0 %v248
    %451 = vmatpush.msra.mxu0 %v245
    %452 = vmatpush.msra.mxu0 %v242
    %453 = vmatpush.msra.mxu0 %v239
    %454 = vmatpush.msra.mxu0 %v236
    %455 = vmatpush.msra.mxu0 %v233
    %456 = vmatpush.msra.mxu0 %v230
    %457 = vmatpush.msra.mxu0 %v227
    %458 = vmatpush.msra.mxu0 %v224
    %459 = vmatmul.f32.gmra.mxu0 %v388
    %v460 = vpop.f32.mrf.mxu0
    %v461 = vadd.f32 0.0, %v460
    %462 = vdwg.mxu0
    %v463 = vadd.f32 %v400, %v421
    %v464 = vxor.u32 %v463, 2147483648
    %v465 = vmul.f32 %v464, 1.442695
    %v466 = vpow.pop %v465
    %v467 = vadd.f32 %v466, 1.0
    %v468 = vrcp.pop %v467
    %v469 = vmul.f32 %v467, %v468
    %v470 = vsub.f32 1.0, %v469
    %v471 = vmul.f32 %v468, %v470
    %v472 = vadd.f32 %v468, %v471
    %vm473 = vweird.f32 %v467
    %vm474 = vweird.f32 %v468
    %vm475 = vmor %vm473, %vm474
    %v476 = vsel %vm475, %v468, %v472
    %v477 = vand.u32 2147483647, %v467
    %vm478 = vcmp.eq.f32.partialorder %v477, 8.507059e+37
    %v479 = vand.u32 %v467, 2147483648
    %v480 = vor.u32 1.1754944e-38, %v479
    %v481 = vsel %vm478, %v480, %v476
    %v482 = vmul.f32 1.0, %v481
    %v483 = vadd.f32 %v401, %v441
    %v484 = vxor.u32 %v483, 2147483648
    %v485 = vmul.f32 %v484, 1.442695
    %v486 = vpow.pop %v485
    %v487 = vadd.f32 %v486, 1.0
    %v488 = vrcp.pop %v487
    %v489 = vmul.f32 %v487, %v488
    %v490 = vsub.f32 1.0, %v489
    %v491 = vmul.f32 %v488, %v490
    %v492 = vadd.f32 %v488, %v491
    %vm493 = vweird.f32 %v487
    %vm494 = vweird.f32 %v488
    %vm495 = vmor %vm493, %vm494
    %v496 = vsel %vm495, %v488, %v492
    %v497 = vand.u32 2147483647, %v487
    %vm498 = vcmp.eq.f32.partialorder %v497, 8.507059e+37
    %v499 = vand.u32 %v487, 2147483648
    %v500 = vor.u32 1.1754944e-38, %v499
    %v501 = vsel %vm498, %v500, %v496
    %v502 = vmul.f32 1.0, %v501
    %v503 = vadd.f32 %v461, %v272
    %v504 = vmul.f32 %v482, %v503
    %v505 = vadd.f32 %v402, %v504
    %v506 = vtanh.pop %v505
    %v507 = vsub.f32 1.0, %v502
    %v508 = vmul.f32 %v507, %v506
    %v509 = vmul.f32 %v502, %v388
    %v510 = vadd.f32 %v508, %v509
    %v511 = vpack.c.bf16 %v510, %v510
    %s512 = scalar_lea.vmem [#allocation3], 4
    %513 = vst [vmem:[%s512] sm:$0xf] %v511
    %s514 = sadd.s32 %s391, 1
    %p515 = scmp.eq.s32.totalorder %s514, 7
    // Predicated region
    $region46: #{text_generator_forward.1} parent=36 // pred_check
      %p516 = pneg %p515
    $region47: #{text_generator_forward.1} parent=36 // pred_check_branch
      %518 = sbr.rel (%p516) target = $region49
    $region48: #{text_generator_forward.1} parent=36 // pred_region
      %519 = vst [vmem:[%s9] sm:$0xff] %v510
    $region49: #{text_generator_forward.1} parent=36 // pred_fallthru
      _
    %s520 = smul.u32 2, 3
    %s521 = smul.addr %s520, 8
    %s522 = scalar_lea.vmem [#allocation4], %s521
    %v523 = vld [vmem:[%s522] sm:$0xff]
    %v524 = vld [vmem:[%s522 + $0x8] sm:$0xff]
    %v525 = vld [vmem:[%s522 + $0x10] sm:$0xff]
    %526 = vmatpush.msra.mxu0 %v267
    %527 = vmatpush.msra.mxu0 %v264
    %528 = vmatpush.msra.mxu0 %v261
    %529 = vmatpush.msra.mxu0 %v258
    %530 = vmatpush.msra.mxu0 %v255
    %531 = vmatpush.msra.mxu0 %v252
    %532 = vmatpush.msra.mxu0 %v249
    %533 = vmatpush.msra.mxu0 %v246
    %534 = vmatpush.msra.mxu0 %v243
    %535 = vmatpush.msra.mxu0 %v240
    %536 = vmatpush.msra.mxu0 %v237
    %537 = vmatpush.msra.mxu0 %v234
    %538 = vmatpush.msra.mxu0 %v231
    %539 = vmatpush.msra.mxu0 %v228
    %540 = vmatpush.msra.mxu0 %v225
    %541 = vmatpush.msra.mxu0 %v222
    %542 = vmatmul.f32.gmra.mxu0 %v510
    %v543 = vpop.f32.mrf.mxu0
    %v544 = vadd.f32 0.0, %v543
    %545 = vdwg.mxu0
    %546 = vmatpush.msra.mxu0 %v268
    %547 = vmatpush.msra.mxu0 %v265
    %548 = vmatpush.msra.mxu0 %v262
    %549 = vmatpush.msra.mxu0 %v259
    %550 = vmatpush.msra.mxu0 %v256
    %551 = vmatpush.msra.mxu0 %v253
    %552 = vmatpush.msra.mxu0 %v250
    %553 = vmatpush.msra.mxu0 %v247
    %554 = vmatpush.msra.mxu0 %v244
    %555 = vmatpush.msra.mxu0 %v241
    %556 = vmatpush.msra.mxu0 %v238
    %557 = vmatpush.msra.mxu0 %v235
    %558 = vmatpush.msra.mxu0 %v232
    %559 = vmatpush.msra.mxu0 %v229
    %560 = vmatpush.msra.mxu0 %v226
    %561 = vmatpush.msra.mxu0 %v223
    %562 = vmatmul.f32.gmra.mxu0 %v510
    %v563 = vpop.f32.mrf.mxu0
    %v564 = vadd.f32 0.0, %v563
    %565 = vdwg.mxu0
    %566 = vmatpush.msra.mxu0 %v269
    %567 = vmatpush.msra.mxu0 %v266
    %568 = vmatpush.msra.mxu0 %v263
    %569 = vmatpush.msra.mxu0 %v260
    %570 = vmatpush.msra.mxu0 %v257
    %571 = vmatpush.msra.mxu0 %v254
    %572 = vmatpush.msra.mxu0 %v251
    %573 = vmatpush.msra.mxu0 %v248
    %574 = vmatpush.msra.mxu0 %v245
    %575 = vmatpush.msra.mxu0 %v242
    %576 = vmatpush.msra.mxu0 %v239
    %577 = vmatpush.msra.mxu0 %v236
    %578 = vmatpush.msra.mxu0 %v233
    %579 = vmatpush.msra.mxu0 %v230
    %580 = vmatpush.msra.mxu0 %v227
    %581 = vmatpush.msra.mxu0 %v224
    %582 = vmatmul.f32.gmra.mxu0 %v510
    %v583 = vpop.f32.mrf.mxu0
    %v584 = vadd.f32 0.0, %v583
    %585 = vdwg.mxu0
    %v586 = vadd.f32 %v523, %v544
    %v587 = vxor.u32 %v586, 2147483648
    %v588 = vmul.f32 %v587, 1.442695
    %v589 = vpow.pop %v588
    %v590 = vadd.f32 %v589, 1.0
    %v591 = vrcp.pop %v590
    %v592 = vmul.f32 %v590, %v591
    %v593 = vsub.f32 1.0, %v592
    %v594 = vmul.f32 %v591, %v593
    %v595 = vadd.f32 %v591, %v594
    %vm596 = vweird.f32 %v590
    %vm597 = vweird.f32 %v591
    %vm598 = vmor %vm596, %vm597
    %v599 = vsel %vm598, %v591, %v595
    %v600 = vand.u32 2147483647, %v590
    %vm601 = vcmp.eq.f32.partialorder %v600, 8.507059e+37
    %v602 = vand.u32 %v590, 2147483648
    %v603 = vor.u32 1.1754944e-38, %v602
    %v604 = vsel %vm601, %v603, %v599
    %v605 = vmul.f32 1.0, %v604
    %v606 = vadd.f32 %v524, %v564
    %v607 = vxor.u32 %v606, 2147483648
    %v608 = vmul.f32 %v607, 1.442695
    %v609 = vpow.pop %v608
    %v610 = vadd.f32 %v609, 1.0
    %v611 = vrcp.pop %v610
    %v612 = vmul.f32 %v610, %v611
    %v613 = vsub.f32 1.0, %v612
    %v614 = vmul.f32 %v611, %v613
    %v615 = vadd.f32 %v611, %v614
    %vm616 = vweird.f32 %v610
    %vm617 = vweird.f32 %v611
    %vm618 = vmor %vm616, %vm617
    %v619 = vsel %vm618, %v611, %v615
    %v620 = vand.u32 2147483647, %v610
    %vm621 = vcmp.eq.f32.partialorder %v620, 8.507059e+37
    %v622 = vand.u32 %v610, 2147483648
    %v623 = vor.u32 1.1754944e-38, %v622
    %v624 = vsel %vm621, %v623, %v619
    %v625 = vmul.f32 1.0, %v624
    %v626 = vadd.f32 %v584, %v272
    %v627 = vmul.f32 %v605, %v626
    %v628 = vadd.f32 %v525, %v627
    %v629 = vtanh.pop %v628
    %v630 = vsub.f32 1.0, %v625
    %v631 = vmul.f32 %v630, %v629
    %v632 = vmul.f32 %v625, %v510
    %v633 = vadd.f32 %v631, %v632
    %v634 = vpack.c.bf16 %v633, %v633
    %s635 = scalar_lea.vmem [#allocation3], 8
    %636 = vst [vmem:[%s635] sm:$0xf] %v634
    %s637 = sadd.s32 %s391, 2
    %p638 = scmp.eq.s32.totalorder %s637, 7
    // Predicated region
    $region50: #{text_generator_forward.1} parent=36 // pred_check
      %p639 = pneg %p638
    $region51: #{text_generator_forward.1} parent=36 // pred_check_branch
      %641 = sbr.rel (%p639) target = $region53
    $region52: #{text_generator_forward.1} parent=36 // pred_region
      %642 = vst [vmem:[%s9] sm:$0xff] %v633
    $region53: #{text_generator_forward.1} parent=36 // pred_fallthru
      _
    %s643 = smul.u32 3, 3
    %s644 = smul.addr %s643, 8
    %s645 = scalar_lea.vmem [#allocation4], %s644
    %v646 = vld [vmem:[%s645] sm:$0xff]
    %v647 = vld [vmem:[%s645 + $0x8] sm:$0xff]
    %v648 = vld [vmem:[%s645 + $0x10] sm:$0xff]
    %649 = vmatpush.msra.mxu0 %v267
    %650 = vmatpush.msra.mxu0 %v264
    %651 = vmatpush.msra.mxu0 %v261
    %652 = vmatpush.msra.mxu0 %v258
    %653 = vmatpush.msra.mxu0 %v255
    %654 = vmatpush.msra.mxu0 %v252
    %655 = vmatpush.msra.mxu0 %v249
    %656 = vmatpush.msra.mxu0 %v246
    %657 = vmatpush.msra.mxu0 %v243
    %658 = vmatpush.msra.mxu0 %v240
    %659 = vmatpush.msra.mxu0 %v237
    %660 = vmatpush.msra.mxu0 %v234
    %661 = vmatpush.msra.mxu0 %v231
    %662 = vmatpush.msra.mxu0 %v228
    %663 = vmatpush.msra.mxu0 %v225
    %664 = vmatpush.msra.mxu0 %v222
    %665 = vmatmul.f32.gmra.mxu0 %v633
    %v666 = vpop.f32.mrf.mxu0
    %v667 = vadd.f32 0.0, %v666
    %668 = vdwg.mxu0
    %669 = vmatpush.msra.mxu0 %v268
    %670 = vmatpush.msra.mxu0 %v265
    %671 = vmatpush.msra.mxu0 %v262
    %672 = vmatpush.msra.mxu0 %v259
    %673 = vmatpush.msra.mxu0 %v256
    %674 = vmatpush.msra.mxu0 %v253
    %675 = vmatpush.msra.mxu0 %v250
    %676 = vmatpush.msra.mxu0 %v247
    %677 = vmatpush.msra.mxu0 %v244
    %678 = vmatpush.msra.mxu0 %v241
    %679 = vmatpush.msra.mxu0 %v238
    %680 = vmatpush.msra.mxu0 %v235
    %681 = vmatpush.msra.mxu0 %v232
    %682 = vmatpush.msra.mxu0 %v229
    %683 = vmatpush.msra.mxu0 %v226
    %684 = vmatpush.msra.mxu0 %v223
    %685 = vmatmul.f32.gmra.mxu0 %v633
    %v686 = vpop.f32.mrf.mxu0
    %v687 = vadd.f32 0.0, %v686
    %688 = vdwg.mxu0
    %689 = vmatpush.msra.mxu0 %v269
    %690 = vmatpush.msra.mxu0 %v266
    %691 = vmatpush.msra.mxu0 %v263
    %692 = vmatpush.msra.mxu0 %v260
    %693 = vmatpush.msra.mxu0 %v257
    %694 = vmatpush.msra.mxu0 %v254
    %695 = vmatpush.msra.mxu0 %v251
    %696 = vmatpush.msra.mxu0 %v248
    %697 = vmatpush.msra.mxu0 %v245
    %698 = vmatpush.msra.mxu0 %v242
    %699 = vmatpush.msra.mxu0 %v239
    %700 = vmatpush.msra.mxu0 %v236
    %701 = vmatpush.msra.mxu0 %v233
    %702 = vmatpush.msra.mxu0 %v230
    %703 = vmatpush.msra.mxu0 %v227
    %704 = vmatpush.msra.mxu0 %v224
    %705 = vmatmul.f32.gmra.mxu0 %v633
    %v706 = vpop.f32.mrf.mxu0
    %v707 = vadd.f32 0.0, %v706
    %708 = vdwg.mxu0
    %v709 = vadd.f32 %v646, %v667
    %v710 = vxor.u32 %v709, 2147483648
    %v711 = vmul.f32 %v710, 1.442695
    %v712 = vpow.pop %v711
    %v713 = vadd.f32 %v712, 1.0
    %v714 = vrcp.pop %v713
    %v715 = vmul.f32 %v713, %v714
    %v716 = vsub.f32 1.0, %v715
    %v717 = vmul.f32 %v714, %v716
    %v718 = vadd.f32 %v714, %v717
    %vm719 = vweird.f32 %v713
    %vm720 = vweird.f32 %v714
    %vm721 = vmor %vm719, %vm720
    %v722 = vsel %vm721, %v714, %v718
    %v723 = vand.u32 2147483647, %v713
    %vm724 = vcmp.eq.f32.partialorder %v723, 8.507059e+37
    %v725 = vand.u32 %v713, 2147483648
    %v726 = vor.u32 1.1754944e-38, %v725
    %v727 = vsel %vm724, %v726, %v722
    %v728 = vmul.f32 1.0, %v727
    %v729 = vadd.f32 %v647, %v687
    %v730 = vxor.u32 %v729, 2147483648
    %v731 = vmul.f32 %v730, 1.442695
    %v732 = vpow.pop %v731
    %v733 = vadd.f32 %v732, 1.0
    %v734 = vrcp.pop %v733
    %v735 = vmul.f32 %v733, %v734
    %v736 = vsub.f32 1.0, %v735
    %v737 = vmul.f32 %v734, %v736
    %v738 = vadd.f32 %v734, %v737
    %vm739 = vweird.f32 %v733
    %vm740 = vweird.f32 %v734
    %vm741 = vmor %vm739, %vm740
    %v742 = vsel %vm741, %v734, %v738
    %v743 = vand.u32 2147483647, %v733
    %vm744 = vcmp.eq.f32.partialorder %v743, 8.507059e+37
    %v745 = vand.u32 %v733, 2147483648
    %v746 = vor.u32 1.1754944e-38, %v745
    %v747 = vsel %vm744, %v746, %v742
    %v748 = vmul.f32 1.0, %v747
    %v749 = vadd.f32 %v707, %v272
    %v750 = vmul.f32 %v728, %v749
    %v751 = vadd.f32 %v648, %v750
    %v752 = vtanh.pop %v751
    %v753 = vsub.f32 1.0, %v748
    %v754 = vmul.f32 %v753, %v752
    %v755 = vmul.f32 %v748, %v633
    %v756 = vadd.f32 %v754, %v755
    %v757 = vpack.c.bf16 %v756, %v756
    %s758 = scalar_lea.vmem [#allocation3], 12
    %759 = vst [vmem:[%s758] sm:$0xf] %v757
    %s760 = sadd.s32 %s391, 3
    %p761 = scmp.eq.s32.totalorder %s760, 7
    // Predicated region
    $region54: #{text_generator_forward.1} parent=36 // pred_check
      %p762 = pneg %p761
    $region55: #{text_generator_forward.1} parent=36 // pred_check_branch
      %764 = sbr.rel (%p762) target = $region57
    $region56: #{text_generator_forward.1} parent=36 // pred_region
      %765 = vst [vmem:[%s9] sm:$0xff] %v756
    $region57: #{text_generator_forward.1} parent=36 // pred_fallthru
      _
    %s766 = smul.u32 4, 3
    %s767 = smul.addr %s766, 8
    %s768 = scalar_lea.vmem [#allocation4], %s767
    %v769 = vld [vmem:[%s768] sm:$0xff]
    %v770 = vld [vmem:[%s768 + $0x8] sm:$0xff]
    %v771 = vld [vmem:[%s768 + $0x10] sm:$0xff]
    %772 = vmatpush.msra.mxu0 %v267
    %773 = vmatpush.msra.mxu0 %v264
    %774 = vmatpush.msra.mxu0 %v261
    %775 = vmatpush.msra.mxu0 %v258
    %776 = vmatpush.msra.mxu0 %v255
    %777 = vmatpush.msra.mxu0 %v252
    %778 = vmatpush.msra.mxu0 %v249
    %779 = vmatpush.msra.mxu0 %v246
    %780 = vmatpush.msra.mxu0 %v243
    %781 = vmatpush.msra.mxu0 %v240
    %782 = vmatpush.msra.mxu0 %v237
    %783 = vmatpush.msra.mxu0 %v234
    %784 = vmatpush.msra.mxu0 %v231
    %785 = vmatpush.msra.mxu0 %v228
    %786 = vmatpush.msra.mxu0 %v225
    %787 = vmatpush.msra.mxu0 %v222
    %788 = vmatmul.f32.gmra.mxu0 %v756
    %v789 = vpop.f32.mrf.mxu0
    %v790 = vadd.f32 0.0, %v789
    %791 = vdwg.mxu0
    %792 = vmatpush.msra.mxu0 %v268
    %793 = vmatpush.msra.mxu0 %v265
    %794 = vmatpush.msra.mxu0 %v262
    %795 = vmatpush.msra.mxu0 %v259
    %796 = vmatpush.msra.mxu0 %v256
    %797 = vmatpush.msra.mxu0 %v253
    %798 = vmatpush.msra.mxu0 %v250
    %799 = vmatpush.msra.mxu0 %v247
    %800 = vmatpush.msra.mxu0 %v244
    %801 = vmatpush.msra.mxu0 %v241
    %802 = vmatpush.msra.mxu0 %v238
    %803 = vmatpush.msra.mxu0 %v235
    %804 = vmatpush.msra.mxu0 %v232
    %805 = vmatpush.msra.mxu0 %v229
    %806 = vmatpush.msra.mxu0 %v226
    %807 = vmatpush.msra.mxu0 %v223
    %808 = vmatmul.f32.gmra.mxu0 %v756
    %v809 = vpop.f32.mrf.mxu0
    %v810 = vadd.f32 0.0, %v809
    %811 = vdwg.mxu0
    %812 = vmatpush.msra.mxu0 %v269
    %813 = vmatpush.msra.mxu0 %v266
    %814 = vmatpush.msra.mxu0 %v263
    %815 = vmatpush.msra.mxu0 %v260
    %816 = vmatpush.msra.mxu0 %v257
    %817 = vmatpush.msra.mxu0 %v254
    %818 = vmatpush.msra.mxu0 %v251
    %819 = vmatpush.msra.mxu0 %v248
    %820 = vmatpush.msra.mxu0 %v245
    %821 = vmatpush.msra.mxu0 %v242
    %822 = vmatpush.msra.mxu0 %v239
    %823 = vmatpush.msra.mxu0 %v236
    %824 = vmatpush.msra.mxu0 %v233
    %825 = vmatpush.msra.mxu0 %v230
    %826 = vmatpush.msra.mxu0 %v227
    %827 = vmatpush.msra.mxu0 %v224
    %828 = vmatmul.f32.gmra.mxu0 %v756
    %v829 = vpop.f32.mrf.mxu0
    %v830 = vadd.f32 0.0, %v829
    %831 = vdwg.mxu0
    %v832 = vadd.f32 %v769, %v790
    %v833 = vxor.u32 %v832, 2147483648
    %v834 = vmul.f32 %v833, 1.442695
    %v835 = vpow.pop %v834
    %v836 = vadd.f32 %v835, 1.0
    %v837 = vrcp.pop %v836
    %v838 = vmul.f32 %v836, %v837
    %v839 = vsub.f32 1.0, %v838
    %v840 = vmul.f32 %v837, %v839
    %v841 = vadd.f32 %v837, %v840
    %vm842 = vweird.f32 %v836
    %vm843 = vweird.f32 %v837
    %vm844 = vmor %vm842, %vm843
    %v845 = vsel %vm844, %v837, %v841
    %v846 = vand.u32 2147483647, %v836
    %vm847 = vcmp.eq.f32.partialorder %v846, 8.507059e+37
    %v848 = vand.u32 %v836, 2147483648
    %v849 = vor.u32 1.1754944e-38, %v848
    %v850 = vsel %vm847, %v849, %v845
    %v851 = vmul.f32 1.0, %v850
    %v852 = vadd.f32 %v770, %v810
    %v853 = vxor.u32 %v852, 2147483648
    %v854 = vmul.f32 %v853, 1.442695
    %v855 = vpow.pop %v854
    %v856 = vadd.f32 %v855, 1.0
    %v857 = vrcp.pop %v856
    %v858 = vmul.f32 %v856, %v857
    %v859 = vsub.f32 1.0, %v858
    %v860 = vmul.f32 %v857, %v859
    %v861 = vadd.f32 %v857, %v860
    %vm862 = vweird.f32 %v856
    %vm863 = vweird.f32 %v857
    %vm864 = vmor %vm862, %vm863
    %v865 = vsel %vm864, %v857, %v861
    %v866 = vand.u32 2147483647, %v856
    %vm867 = vcmp.eq.f32.partialorder %v866, 8.507059e+37
    %v868 = vand.u32 %v856, 2147483648
    %v869 = vor.u32 1.1754944e-38, %v868
    %v870 = vsel %vm867, %v869, %v865
    %v871 = vmul.f32 1.0, %v870
    %v872 = vadd.f32 %v830, %v272
    %v873 = vmul.f32 %v851, %v872
    %v874 = vadd.f32 %v771, %v873
    %v875 = vtanh.pop %v874
    %v876 = vsub.f32 1.0, %v871
    %v877 = vmul.f32 %v876, %v875
    %v878 = vmul.f32 %v871, %v756
    %v879 = vadd.f32 %v877, %v878
    %v880 = vpack.c.bf16 %v879, %v879
    %s881 = scalar_lea.vmem [#allocation3], 16
    %882 = vst [vmem:[%s881] sm:$0xf] %v880
    %s883 = sadd.s32 %s391, 4
    %p884 = scmp.eq.s32.totalorder %s883, 7
    // Predicated region
    $region58: #{text_generator_forward.1} parent=36 // pred_check
      %p885 = pneg %p884
    $region59: #{text_generator_forward.1} parent=36 // pred_check_branch
      %887 = sbr.rel (%p885) target = $region61
    $region60: #{text_generator_forward.1} parent=36 // pred_region
      %888 = vst [vmem:[%s9] sm:$0xff] %v879
    $region61: #{text_generator_forward.1} parent=36 // pred_fallthru
      _
    %s889 = smul.u32 5, 3
    %s890 = smul.addr %s889, 8
    %s891 = scalar_lea.vmem [#allocation4], %s890
    %v892 = vld [vmem:[%s891] sm:$0xff]
    %v893 = vld [vmem:[%s891 + $0x8] sm:$0xff]
    %v894 = vld [vmem:[%s891 + $0x10] sm:$0xff]
    %895 = vmatpush.msra.mxu0 %v267
    %896 = vmatpush.msra.mxu0 %v264
    %897 = vmatpush.msra.mxu0 %v261
    %898 = vmatpush.msra.mxu0 %v258
    %899 = vmatpush.msra.mxu0 %v255
    %900 = vmatpush.msra.mxu0 %v252
    %901 = vmatpush.msra.mxu0 %v249
    %902 = vmatpush.msra.mxu0 %v246
    %903 = vmatpush.msra.mxu0 %v243
    %904 = vmatpush.msra.mxu0 %v240
    %905 = vmatpush.msra.mxu0 %v237
    %906 = vmatpush.msra.mxu0 %v234
    %907 = vmatpush.msra.mxu0 %v231
    %908 = vmatpush.msra.mxu0 %v228
    %909 = vmatpush.msra.mxu0 %v225
    %910 = vmatpush.msra.mxu0 %v222
    %911 = vmatmul.f32.gmra.mxu0 %v879
    %v912 = vpop.f32.mrf.mxu0
    %v913 = vadd.f32 0.0, %v912
    %914 = vdwg.mxu0
    %915 = vmatpush.msra.mxu0 %v268
    %916 = vmatpush.msra.mxu0 %v265
    %917 = vmatpush.msra.mxu0 %v262
    %918 = vmatpush.msra.mxu0 %v259
    %919 = vmatpush.msra.mxu0 %v256
    %920 = vmatpush.msra.mxu0 %v253
    %921 = vmatpush.msra.mxu0 %v250
    %922 = vmatpush.msra.mxu0 %v247
    %923 = vmatpush.msra.mxu0 %v244
    %924 = vmatpush.msra.mxu0 %v241
    %925 = vmatpush.msra.mxu0 %v238
    %926 = vmatpush.msra.mxu0 %v235
    %927 = vmatpush.msra.mxu0 %v232
    %928 = vmatpush.msra.mxu0 %v229
    %929 = vmatpush.msra.mxu0 %v226
    %930 = vmatpush.msra.mxu0 %v223
    %931 = vmatmul.f32.gmra.mxu0 %v879
    %v932 = vpop.f32.mrf.mxu0
    %v933 = vadd.f32 0.0, %v932
    %934 = vdwg.mxu0
    %935 = vmatpush.msra.mxu0 %v269
    %936 = vmatpush.msra.mxu0 %v266
    %937 = vmatpush.msra.mxu0 %v263
    %938 = vmatpush.msra.mxu0 %v260
    %939 = vmatpush.msra.mxu0 %v257
    %940 = vmatpush.msra.mxu0 %v254
    %941 = vmatpush.msra.mxu0 %v251
    %942 = vmatpush.msra.mxu0 %v248
    %943 = vmatpush.msra.mxu0 %v245
    %944 = vmatpush.msra.mxu0 %v242
    %945 = vmatpush.msra.mxu0 %v239
    %946 = vmatpush.msra.mxu0 %v236
    %947 = vmatpush.msra.mxu0 %v233
    %948 = vmatpush.msra.mxu0 %v230
    %949 = vmatpush.msra.mxu0 %v227
    %950 = vmatpush.msra.mxu0 %v224
    %951 = vmatmul.f32.gmra.mxu0 %v879
    %v952 = vpop.f32.mrf.mxu0
    %v953 = vadd.f32 0.0, %v952
    %954 = vdwg.mxu0
    %v955 = vadd.f32 %v892, %v913
    %v956 = vxor.u32 %v955, 2147483648
    %v957 = vmul.f32 %v956, 1.442695
    %v958 = vpow.pop %v957
    %v959 = vadd.f32 %v958, 1.0
    %v960 = vrcp.pop %v959
    %v961 = vmul.f32 %v959, %v960
    %v962 = vsub.f32 1.0, %v961
    %v963 = vmul.f32 %v960, %v962
    %v964 = vadd.f32 %v960, %v963
    %vm965 = vweird.f32 %v959
    %vm966 = vweird.f32 %v960
    %vm967 = vmor %vm965, %vm966
    %v968 = vsel %vm967, %v960, %v964
    %v969 = vand.u32 2147483647, %v959
    %vm970 = vcmp.eq.f32.partialorder %v969, 8.507059e+37
    %v971 = vand.u32 %v959, 2147483648
    %v972 = vor.u32 1.1754944e-38, %v971
    %v973 = vsel %vm970, %v972, %v968
    %v974 = vmul.f32 1.0, %v973
    %v975 = vadd.f32 %v893, %v933
    %v976 = vxor.u32 %v975, 2147483648
    %v977 = vmul.f32 %v976, 1.442695
    %v978 = vpow.pop %v977
    %v979 = vadd.f32 %v978, 1.0
    %v980 = vrcp.pop %v979
    %v981 = vmul.f32 %v979, %v980
    %v982 = vsub.f32 1.0, %v981
    %v983 = vmul.f32 %v980, %v982
    %v984 = vadd.f32 %v980, %v983
    %vm985 = vweird.f32 %v979
    %vm986 = vweird.f32 %v980
    %vm987 = vmor %vm985, %vm986
    %v988 = vsel %vm987, %v980, %v984
    %v989 = vand.u32 2147483647, %v979
    %vm990 = vcmp.eq.f32.partialorder %v989, 8.507059e+37
    %v991 = vand.u32 %v979, 2147483648
    %v992 = vor.u32 1.1754944e-38, %v991
    %v993 = vsel %vm990, %v992, %v988
    %v994 = vmul.f32 1.0, %v993
    %v995 = vadd.f32 %v953, %v272
    %v996 = vmul.f32 %v974, %v995
    %v997 = vadd.f32 %v894, %v996
    %v998 = vtanh.pop %v997
    %v999 = vsub.f32 1.0, %v994
    %v1000 = vmul.f32 %v999, %v998
    %v1001 = vmul.f32 %v994, %v879
    %v1002 = vadd.f32 %v1000, %v1001
    %v1003 = vpack.c.bf16 %v1002, %v1002
    %s1004 = scalar_lea.vmem [#allocation3], 20
    %1005 = vst [vmem:[%s1004] sm:$0xf] %v1003
    %s1006 = sadd.s32 %s391, 5
    %p1007 = scmp.eq.s32.totalorder %s1006, 7
    // Predicated region
    $region62: #{text_generator_forward.1} parent=36 // pred_check
      %p1008 = pneg %p1007
    $region63: #{text_generator_forward.1} parent=36 // pred_check_branch
      %1010 = sbr.rel (%p1008) target = $region65
    $region64: #{text_generator_forward.1} parent=36 // pred_region
      %1011 = vst [vmem:[%s9] sm:$0xff] %v1002
    $region65: #{text_generator_forward.1} parent=36 // pred_fallthru
      _
    %s1012 = smul.u32 6, 3
    %s1013 = smul.addr %s1012, 8
    %s1014 = scalar_lea.vmem [#allocation4], %s1013
    %v1015 = vld [vmem:[%s1014] sm:$0xff]
    %v1016 = vld [vmem:[%s1014 + $0x8] sm:$0xff]
    %v1017 = vld [vmem:[%s1014 + $0x10] sm:$0xff]
    %1018 = vmatpush.msra.mxu0 %v267
    %1019 = vmatpush.msra.mxu0 %v264
    %1020 = vmatpush.msra.mxu0 %v261
    %1021 = vmatpush.msra.mxu0 %v258
    %1022 = vmatpush.msra.mxu0 %v255
    %1023 = vmatpush.msra.mxu0 %v252
    %1024 = vmatpush.msra.mxu0 %v249
    %1025 = vmatpush.msra.mxu0 %v246
    %1026 = vmatpush.msra.mxu0 %v243
    %1027 = vmatpush.msra.mxu0 %v240
    %1028 = vmatpush.msra.mxu0 %v237
    %1029 = vmatpush.msra.mxu0 %v234
    %1030 = vmatpush.msra.mxu0 %v231
    %1031 = vmatpush.msra.mxu0 %v228
    %1032 = vmatpush.msra.mxu0 %v225
    %1033 = vmatpush.msra.mxu0 %v222
    %1034 = vmatmul.f32.gmra.mxu0 %v1002
    %v1035 = vpop.f32.mrf.mxu0
    %v1036 = vadd.f32 0.0, %v1035
    %1037 = vdwg.mxu0
    %1038 = vmatpush.msra.mxu0 %v268
    %1039 = vmatpush.msra.mxu0 %v265
    %1040 = vmatpush.msra.mxu0 %v262
    %1041 = vmatpush.msra.mxu0 %v259
    %1042 = vmatpush.msra.mxu0 %v256
    %1043 = vmatpush.msra.mxu0 %v253
    %1044 = vmatpush.msra.mxu0 %v250
    %1045 = vmatpush.msra.mxu0 %v247
    %1046 = vmatpush.msra.mxu0 %v244
    %1047 = vmatpush.msra.mxu0 %v241
    %1048 = vmatpush.msra.mxu0 %v238
    %1049 = vmatpush.msra.mxu0 %v235
    %1050 = vmatpush.msra.mxu0 %v232
    %1051 = vmatpush.msra.mxu0 %v229
    %1052 = vmatpush.msra.mxu0 %v226
    %1053 = vmatpush.msra.mxu0 %v223
    %1054 = vmatmul.f32.gmra.mxu0 %v1002
    %v1055 = vpop.f32.mrf.mxu0
    %v1056 = vadd.f32 0.0, %v1055
    %1057 = vdwg.mxu0
    %1058 = vmatpush.msra.mxu0 %v269
    %1059 = vmatpush.msra.mxu0 %v266
    %1060 = vmatpush.msra.mxu0 %v263
    %1061 = vmatpush.msra.mxu0 %v260
    %1062 = vmatpush.msra.mxu0 %v257
    %1063 = vmatpush.msra.mxu0 %v254
    %1064 = vmatpush.msra.mxu0 %v251
    %1065 = vmatpush.msra.mxu0 %v248
    %1066 = vmatpush.msra.mxu0 %v245
    %1067 = vmatpush.msra.mxu0 %v242
    %1068 = vmatpush.msra.mxu0 %v239
    %1069 = vmatpush.msra.mxu0 %v236
    %1070 = vmatpush.msra.mxu0 %v233
    %1071 = vmatpush.msra.mxu0 %v230
    %1072 = vmatpush.msra.mxu0 %v227
    %1073 = vmatpush.msra.mxu0 %v224
    %1074 = vmatmul.f32.gmra.mxu0 %v1002
    %v1075 = vpop.f32.mrf.mxu0
    %v1076 = vadd.f32 0.0, %v1075
    %1077 = vdwg.mxu0
    %v1078 = vadd.f32 %v1015, %v1036
    %v1079 = vxor.u32 %v1078, 2147483648
    %v1080 = vmul.f32 %v1079, 1.442695
    %v1081 = vpow.pop %v1080
    %v1082 = vadd.f32 %v1081, 1.0
    %v1083 = vrcp.pop %v1082
    %v1084 = vmul.f32 %v1082, %v1083
    %v1085 = vsub.f32 1.0, %v1084
    %v1086 = vmul.f32 %v1083, %v1085
    %v1087 = vadd.f32 %v1083, %v1086
    %vm1088 = vweird.f32 %v1082
    %vm1089 = vweird.f32 %v1083
    %vm1090 = vmor %vm1088, %vm1089
    %v1091 = vsel %vm1090, %v1083, %v1087
    %v1092 = vand.u32 2147483647, %v1082
    %vm1093 = vcmp.eq.f32.partialorder %v1092, 8.507059e+37
    %v1094 = vand.u32 %v1082, 2147483648
    %v1095 = vor.u32 1.1754944e-38, %v1094
    %v1096 = vsel %vm1093, %v1095, %v1091
    %v1097 = vmul.f32 1.0, %v1096
    %v1098 = vadd.f32 %v1016, %v1056
    %v1099 = vxor.u32 %v1098, 2147483648
    %v1100 = vmul.f32 %v1099, 1.442695
    %v1101 = vpow.pop %v1100
    %v1102 = vadd.f32 %v1101, 1.0
    %v1103 = vrcp.pop %v1102
    %v1104 = vmul.f32 %v1102, %v1103
    %v1105 = vsub.f32 1.0, %v1104
    %v1106 = vmul.f32 %v1103, %v1105
    %v1107 = vadd.f32 %v1103, %v1106
    %vm1108 = vweird.f32 %v1102
    %vm1109 = vweird.f32 %v1103
    %vm1110 = vmor %vm1108, %vm1109
    %v1111 = vsel %vm1110, %v1103, %v1107
    %v1112 = vand.u32 2147483647, %v1102
    %vm1113 = vcmp.eq.f32.partialorder %v1112, 8.507059e+37
    %v1114 = vand.u32 %v1102, 2147483648
    %v1115 = vor.u32 1.1754944e-38, %v1114
    %v1116 = vsel %vm1113, %v1115, %v1111
    %v1117 = vmul.f32 1.0, %v1116
    %v1118 = vadd.f32 %v1076, %v272
    %v1119 = vmul.f32 %v1097, %v1118
    %v1120 = vadd.f32 %v1017, %v1119
    %v1121 = vtanh.pop %v1120
    %v1122 = vsub.f32 1.0, %v1117
    %v1123 = vmul.f32 %v1122, %v1121
    %v1124 = vmul.f32 %v1117, %v1002
    %v1125 = vadd.f32 %v1123, %v1124
    %v1126 = vpack.c.bf16 %v1125, %v1125
    %s1127 = scalar_lea.vmem [#allocation3], 24
    %1128 = vst [vmem:[%s1127] sm:$0xf] %v1126
    %s1129 = sadd.s32 %s391, 6
    %p1130 = scmp.eq.s32.totalorder %s1129, 7
    // Predicated region
    $region66: #{text_generator_forward.1} parent=36 // pred_check
      %p1131 = pneg %p1130
    $region67: #{text_generator_forward.1} parent=36 // pred_check_branch
      %1133 = sbr.rel (%p1131) target = $region69
    $region68: #{text_generator_forward.1} parent=36 // pred_region
      %1134 = vst [vmem:[%s9] sm:$0xff] %v1125
    $region69: #{text_generator_forward.1} parent=36 // pred_fallthru
      _
    %s1135 = smul.u32 7, 3
    %s1136 = smul.addr %s1135, 8
    %s1137 = scalar_lea.vmem [#allocation4], %s1136
    %v1138 = vld [vmem:[%s1137] sm:$0xff]
    %v1139 = vld [vmem:[%s1137 + $0x8] sm:$0xff]
    %v1140 = vld [vmem:[%s1137 + $0x10] sm:$0xff]
    %1141 = vmatpush.msra.mxu0 %v267
    %1142 = vmatpush.msra.mxu0 %v264
    %1143 = vmatpush.msra.mxu0 %v261
    %1144 = vmatpush.msra.mxu0 %v258
    %1145 = vmatpush.msra.mxu0 %v255
    %1146 = vmatpush.msra.mxu0 %v252
    %1147 = vmatpush.msra.mxu0 %v249
    %1148 = vmatpush.msra.mxu0 %v246
    %1149 = vmatpush.msra.mxu0 %v243
    %1150 = vmatpush.msra.mxu0 %v240
    %1151 = vmatpush.msra.mxu0 %v237
    %1152 = vmatpush.msra.mxu0 %v234
    %1153 = vmatpush.msra.mxu0 %v231
    %1154 = vmatpush.msra.mxu0 %v228
    %1155 = vmatpush.msra.mxu0 %v225
    %1156 = vmatpush.msra.mxu0 %v222
    %1157 = vmatmul.f32.gmra.mxu0 %v1125
    %v1158 = vpop.f32.mrf.mxu0
    %v1159 = vadd.f32 0.0, %v1158
    %1160 = vdwg.mxu0
    %1161 = vmatpush.msra.mxu0 %v268
    %1162 = vmatpush.msra.mxu0 %v265
    %1163 = vmatpush.msra.mxu0 %v262
    %1164 = vmatpush.msra.mxu0 %v259
    %1165 = vmatpush.msra.mxu0 %v256
    %1166 = vmatpush.msra.mxu0 %v253
    %1167 = vmatpush.msra.mxu0 %v250
    %1168 = vmatpush.msra.mxu0 %v247
    %1169 = vmatpush.msra.mxu0 %v244
    %1170 = vmatpush.msra.mxu0 %v241
    %1171 = vmatpush.msra.mxu0 %v238
    %1172 = vmatpush.msra.mxu0 %v235
    %1173 = vmatpush.msra.mxu0 %v232
    %1174 = vmatpush.msra.mxu0 %v229
    %1175 = vmatpush.msra.mxu0 %v226
    %1176 = vmatpush.msra.mxu0 %v223
    %1177 = vmatmul.f32.gmra.mxu0 %v1125
    %v1178 = vpop.f32.mrf.mxu0
    %v1179 = vadd.f32 0.0, %v1178
    %1180 = vdwg.mxu0
    %1181 = vmatpush.msra.mxu0 %v269
    %1182 = vmatpush.msra.mxu0 %v266
    %1183 = vmatpush.msra.mxu0 %v263
    %1184 = vmatpush.msra.mxu0 %v260
    %1185 = vmatpush.msra.mxu0 %v257
    %1186 = vmatpush.msra.mxu0 %v254
    %1187 = vmatpush.msra.mxu0 %v251
    %1188 = vmatpush.msra.mxu0 %v248
    %1189 = vmatpush.msra.mxu0 %v245
    %1190 = vmatpush.msra.mxu0 %v242
    %1191 = vmatpush.msra.mxu0 %v239
    %1192 = vmatpush.msra.mxu0 %v236
    %1193 = vmatpush.msra.mxu0 %v233
    %1194 = vmatpush.msra.mxu0 %v230
    %1195 = vmatpush.msra.mxu0 %v227
    %1196 = vmatpush.msra.mxu0 %v224
    %1197 = vmatmul.f32.gmra.mxu0 %v1125
    %v1198 = vpop.f32.mrf.mxu0
    %v1199 = vadd.f32 0.0, %v1198
    %1200 = vdwg.mxu0
    %v1201 = vadd.f32 %v1138, %v1159
    %v1202 = vxor.u32 %v1201, 2147483648
    %v1203 = vmul.f32 %v1202, 1.442695
    %v1204 = vpow.pop %v1203
    %v1205 = vadd.f32 %v1204, 1.0
    %v1206 = vrcp.pop %v1205
    %v1207 = vmul.f32 %v1205, %v1206
    %v1208 = vsub.f32 1.0, %v1207
    %v1209 = vmul.f32 %v1206, %v1208
    %v1210 = vadd.f32 %v1206, %v1209
    %vm1211 = vweird.f32 %v1205
    %vm1212 = vweird.f32 %v1206
    %vm1213 = vmor %vm1211, %vm1212
    %v1214 = vsel %vm1213, %v1206, %v1210
    %v1215 = vand.u32 2147483647, %v1205
    %vm1216 = vcmp.eq.f32.partialorder %v1215, 8.507059e+37
    %v1217 = vand.u32 %v1205, 2147483648
    %v1218 = vor.u32 1.1754944e-38, %v1217
    %v1219 = vsel %vm1216, %v1218, %v1214
    %v1220 = vmul.f32 1.0, %v1219
    %v1221 = vadd.f32 %v1139, %v1179
    %v1222 = vxor.u32 %v1221, 2147483648
    %v1223 = vmul.f32 %v1222, 1.442695
    %v1224 = vpow.pop %v1223
    %v1225 = vadd.f32 %v1224, 1.0
    %v1226 = vrcp.pop %v1225
    %v1227 = vmul.f32 %v1225, %v1226
    %v1228 = vsub.f32 1.0, %v1227
    %v1229 = vmul.f32 %v1226, %v1228
    %v1230 = vadd.f32 %v1226, %v1229
    %vm1231 = vweird.f32 %v1225
    %vm1232 = vweird.f32 %v1226
    %vm1233 = vmor %vm1231, %vm1232
    %v1234 = vsel %vm1233, %v1226, %v1230
    %v1235 = vand.u32 2147483647, %v1225
    %vm1236 = vcmp.eq.f32.partialorder %v1235, 8.507059e+37
    %v1237 = vand.u32 %v1225, 2147483648
    %v1238 = vor.u32 1.1754944e-38, %v1237
    %v1239 = vsel %vm1236, %v1238, %v1234
    %v1240 = vmul.f32 1.0, %v1239
    %v1241 = vadd.f32 %v1199, %v272
    %v1242 = vmul.f32 %v1220, %v1241
    %v1243 = vadd.f32 %v1140, %v1242
    %v1244 = vtanh.pop %v1243
    %v1245 = vsub.f32 1.0, %v1240
    %v1246 = vmul.f32 %v1245, %v1244
    %v1247 = vmul.f32 %v1240, %v1125
    %v1248 = vadd.f32 %v1246, %v1247
    %v1249 = vpack.c.bf16 %v1248, %v1248
    %s1250 = scalar_lea.vmem [#allocation3], 28
    %1251 = vst [vmem:[%s1250] sm:$0xf] %v1249
    %s1252 = sadd.s32 %s391, 7
    %p1253 = scmp.eq.s32.totalorder %s1252, 7
    // Predicated region
    $region70: #{text_generator_forward.1} parent=36 // pred_check
      %p1254 = pneg %p1253
    $region71: #{text_generator_forward.1} parent=36 // pred_check_branch
      %1256 = sbr.rel (%p1254) target = $region73
    $region72: #{text_generator_forward.1} parent=36 // pred_region
      %1257 = vst [vmem:[%s9] sm:$0xff] %v1248
    $region73: #{text_generator_forward.1} parent=36 // pred_fallthru
      _
    %1258 = vst [vmem:[#allocation2] sm:$0xff] %v1248
  $region37: #{text_generator_forward.1} parent=0 // pred_fallthru
    _
  %v1259 = vld [vmem:[#allocation3] sm:$0xf]
  %v1260 = vld [vmem:[#allocation3 + $0x4] sm:$0xf]
  %v1261 = vld [vmem:[#allocation3 + $0x8] sm:$0xf]
  %v1262 = vld [vmem:[#allocation3 + $0xc] sm:$0xf]
  %v1263 = vld [vmem:[#allocation3 + $0x10] sm:$0xf]
  %v1264 = vld [vmem:[#allocation3 + $0x14] sm:$0xf]
  %v1265 = vld [vmem:[#allocation3 + $0x18] sm:$0xf]
  %v1266 = vld [vmem:[#allocation3 + $0x1c] sm:$0xf]
  %v1267 = vld [vmem:[%s6] sm:$0xf]
  %v1268 = vld [vmem:[%s6 + $0x4] sm:$0xf]
  %v1269 = vld [vmem:[%s6 + $0x8] sm:$0xf]
  %v1270 = vld [vmem:[%s6 + $0xc] sm:$0xf]
  %v1271 = vld [vmem:[%s6 + $0x10] sm:$0xf]
  %v1272 = vld [vmem:[%s6 + $0x14] sm:$0xf]
  %v1273 = vld [vmem:[%s6 + $0x18] sm:$0xf]
  %v1274 = vld [vmem:[%s6 + $0x1c] sm:$0xf]
  %v1275 = vld [vmem:[%s6 + $0x20] sm:$0xf]
  %v1276 = vld [vmem:[%s6 + $0x24] sm:$0xf]
  %v1277 = vld [vmem:[%s6 + $0x28] sm:$0xf]
  %v1278 = vld [vmem:[%s6 + $0x2c] sm:$0xf]
  %v1279 = vld [vmem:[%s6 + $0x30] sm:$0xf]
  %v1280 = vld [vmem:[%s6 + $0x34] sm:$0xf]
  %v1281 = vld [vmem:[%s6 + $0x38] sm:$0xf]
  %v1282 = vld [vmem:[%s6 + $0x3c] sm:$0xf]
  %v1283 = vld [vmem:[%s7] sm:$0x1]
  %v1285 = vperm.slane %v1283, 0
  %v1295 = vunpack.c.l.b16 %v1259
  %v1296 = vunpack.c.l.b16 %v1260
  %v1297 = vunpack.c.l.b16 %v1261
  %v1298 = vunpack.c.l.b16 %v1262
  %v1299 = vunpack.c.l.b16 %v1263
  %v1300 = vunpack.c.l.b16 %v1264
  %v1301 = vunpack.c.l.b16 %v1265
  %v1302 = vunpack.c.l.b16 %v1266
  %v1303 = vpack.c.b16 %v1296, %v1295
  %v1304 = vpack.c.b16 %v1298, %v1297
  %v1305 = vpack.c.b16 %v1300, %v1299
  %v1306 = vpack.c.b16 %v1302, %v1301
  %v1327 = vunpack.c.l.b16 %v1267
  %v1328 = vunpack.c.l.b16 %v1268
  %v1329 = vunpack.c.l.b16 %v1269
  %v1330 = vunpack.c.l.b16 %v1270
  %v1331 = vunpack.c.l.b16 %v1271
  %v1332 = vunpack.c.l.b16 %v1272
  %v1333 = vunpack.c.l.b16 %v1273
  %v1334 = vunpack.c.l.b16 %v1274
  %v1335 = vunpack.c.l.b16 %v1275
  %v1336 = vunpack.c.l.b16 %v1276
  %v1337 = vunpack.c.l.b16 %v1277
  %v1338 = vunpack.c.l.b16 %v1278
  %v1339 = vunpack.c.l.b16 %v1279
  %v1340 = vunpack.c.l.b16 %v1280
  %v1341 = vunpack.c.l.b16 %v1281
  %v1342 = vunpack.c.l.b16 %v1282
  %v1343 = vpack.c.b16 %v1328, %v1327
  %v1344 = vpack.c.b16 %v1330, %v1329
  %v1345 = vpack.c.b16 %v1332, %v1331
  %v1346 = vpack.c.b16 %v1334, %v1333
  %v1347 = vpack.c.b16 %v1336, %v1335
  %v1348 = vpack.c.b16 %v1338, %v1337
  %v1349 = vpack.c.b16 %v1340, %v1339
  %v1350 = vpack.c.b16 %v1342, %v1341
  %1359 = vmatpush.bf16.msra.mxu0 %v1350
  %1360 = vmatpush.bf16.msra.mxu0 %v1349
  %1361 = vmatpush.bf16.msra.mxu0 %v1348
  %1362 = vmatpush.bf16.msra.mxu0 %v1347
  %1363 = vmatpush.bf16.msra.mxu0 %v1346
  %1364 = vmatpush.bf16.msra.mxu0 %v1345
  %1365 = vmatpush.bf16.msra.mxu0 %v1344
  %1366 = vmatpush.bf16.msra.mxu0 %v1343
  %1367 = vmatmul.bf16.gmra.mxu0 %v1303
  %v1368 = vpop.f32.mrf.mxu0
  %v1369 = vadd.f32 %v1285, %v1368
  %v1370 = vpop.f32.mrf.mxu0
  %v1371 = vadd.f32 %v1285, %v1370
  %1372 = vmatmul.bf16.gmra.mxu0 %v1304
  %v1373 = vpop.f32.mrf.mxu0
  %v1374 = vadd.f32 %v1285, %v1373
  %v1375 = vpop.f32.mrf.mxu0
  %v1376 = vadd.f32 %v1285, %v1375
  %1377 = vmatmul.bf16.gmra.mxu0 %v1305
  %v1378 = vpop.f32.mrf.mxu0
  %v1379 = vadd.f32 %v1285, %v1378
  %v1380 = vpop.f32.mrf.mxu0
  %v1381 = vadd.f32 %v1285, %v1380
  %1382 = vmatmul.bf16.gmra.mxu0 %v1306
  %v1383 = vpop.f32.mrf.mxu0
  %v1384 = vadd.f32 %v1285, %v1383
  %v1385 = vpop.f32.mrf.mxu0
  %v1386 = vadd.f32 %v1285, %v1385
  %1387 = vdwg.mxu0
  %1388 = vst [vmem:[%s8] sm:$0xff] %v1369
  %1389 = vst [vmem:[%s8 + $0x8] sm:$0xff] %v1371
  %1390 = vst [vmem:[%s8 + $0x10] sm:$0xff] %v1374
  %1391 = vst [vmem:[%s8 + $0x18] sm:$0xff] %v1376
  %1392 = vst [vmem:[%s8 + $0x20] sm:$0xff] %v1379
  %1393 = vst [vmem:[%s8 + $0x28] sm:$0xff] %v1381
  %1394 = vst [vmem:[%s8 + $0x30] sm:$0xff] %v1384
  %1395 = vst [vmem:[%s8 + $0x38] sm:$0xff] %v1386
  // Predicated region
  $region74: #{text_generator_forward.1} parent=0 // pred_check
    _
  $region75: #{text_generator_forward.1} parent=0 // pred_check_branch
    %1397 = sbr.rel (0) target = $region77
  $region76: #{text_generator_forward.1} parent=0 // pred_region
    _
  $region77: #{text_generator_forward.1} parent=0 // pred_fallthru
    _
  // Predicated region
  $region78: #{text_generator_forward.1} parent=0 // pred_check
    _
  $region79: #{text_generator_forward.1} parent=0 // pred_check_branch
    %1399 = sbr.rel (0) target = $region81
  $region80: #{text_generator_forward.1} parent=0 // pred_region
    _
  $region81: #{text_generator_forward.1} parent=0 // pred_fallthru
    _
  // Predicated region
  $region82: #{text_generator_forward.1} parent=0 // pred_check
    _
  $region83: #{text_generator_forward.1} parent=0 // pred_check_branch
    %1401 = sbr.rel (0) target = $region85
  $region84: #{text_generator_forward.1} parent=0 // pred_region
    _
  $region85: #{text_generator_forward.1} parent=0 // pred_fallthru
    _
  // Predicated region
  $region86: #{text_generator_forward.1} parent=0 // pred_check
    _
  $region87: #{text_generator_forward.1} parent=0 // pred_check_branch
    %1403 = sbr.rel (0) target = $region89
  $region88: #{text_generator_forward.1} parent=0 // pred_region
    _
  $region89: #{text_generator_forward.1} parent=0 // pred_fallthru
    _

// kernel: text_generator_forward.1
$region0: #{text_generator_forward.1}
  #allocation0 [shape = 'u32[]', space=smem, size = 0x4, offset = 0x4, fixed_abs, tag = 'smem constant byte address 0x4 - core index']
  #allocation1 [shape = 'u32[72,128]{1,0:T(1,128)}', space=vmem, size = 0x9000, scoped, tag = 'internal scratch']
  #allocation2 [shape = 'f32[8,128]{1,0:T(8,128)}', space=vmem, size = 0x1000, scoped, tag = 'scratch operand']
  #allocation3 [shape = 'bf16[64,128]{1,0:T(8,128)(2,1)}', space=vmem, size = 0x4000, scoped, tag = 'scratch operand']
  #allocation4 [shape = 'f32[64,384]{1,0:T(8,128)}', space=vmem, size = 0x18000, scoped, tag = 'scratch operand']
  %s0 = inlined_call_operand.vmem [shape: bf16[64,16], index: 0, kind: input, shape index: {}]
  %s1 = inlined_call_operand.vmem [shape: f32[8,128], index: 1, kind: input, shape index: {}]
  %s2 = inlined_call_operand.vmem [shape: bf16[16,384], index: 2, kind: input, shape index: {}]
  %s3 = inlined_call_operand.vmem [shape: f32[128,384], index: 3, kind: input, shape index: {}]
  %s4 = inlined_call_operand.vmem [shape: f32[1,384], index: 4, kind: input, shape index: {}]
  %s5 = inlined_call_operand.vmem [shape: f32[1,128], index: 5, kind: input, shape index: {}]
  %s6 = inlined_call_operand.vmem [shape: bf16[128,128], index: 6, kind: input, shape index: {}]
  %s7 = inlined_call_operand.vmem [shape: f32[1,128], index: 7, kind: input, shape index: {}]
  %s8 = inlined_call_operand.vmem [shape: f32[64,128], index: 8, kind: output, shape index: {0}]
  %s9 = inlined_call_operand.vmem [shape: f32[8,128], index: 9, kind: output, shape index: {1}]
  %10 = xla_tuple %s8, %s9
  %s11 = sld [smem:[#allocation0]]
  $region90: #{text_generator_forward.1} parent=0
    _
  %s13 = ssub.s32 1, %s11
  %s14 = scalar_select 0, %s13, %s11
  // Predicated region
  $region2: #{text_generator_forward.1} parent=0 // pred_check
    _
  $region3: #{text_generator_forward.1} parent=0 // pred_check_branch
    %16 = sbr.rel (0) target = $region5
  $region4: #{text_generator_forward.1} parent=0 // pred_region
    _
  $region5: #{text_generator_forward.1} parent=0 // pred_fallthru
    _
  // Predicated region
  $region6: #{text_generator_forward.1} parent=0 // pred_check
    _
  $region7: #{text_generator_forward.1} parent=0 // pred_check_branch
    %18 = sbr.rel (0) target = $region9
  $region8: #{text_generator_forward.1} parent=0 // pred_region
    _
  $region9: #{text_generator_forward.1} parent=0 // pred_fallthru
    _
  // Predicated region
  $region10: #{text_generator_forward.1} parent=0 // pred_check
    _
  $region11: #{text_generator_forward.1} parent=0 // pred_check_branch
    %20 = sbr.rel (0) target = $region13
  $region12: #{text_generator_forward.1} parent=0 // pred_region
    _
  $region13: #{text_generator_forward.1} parent=0 // pred_fallthru
    _
  // Predicated region
  $region14: #{text_generator_forward.1} parent=0 // pred_check
    _
  $region15: #{text_generator_forward.1} parent=0 // pred_check_branch
    %22 = sbr.rel (0) target = $region17
  $region16: #{text_generator_forward.1} parent=0 // pred_region
    _
  $region17: #{text_generator_forward.1} parent=0 // pred_fallthru
    _
  // Predicated region
  $region18: #{text_generator_forward.1} parent=0 // pred_check
    _
  $region19: #{text_generator_forward.1} parent=0 // pred_check_branch
    %24 = sbr.rel (0) target = $region21
  $region20: #{text_generator_forward.1} parent=0 // pred_region
    _
  $region21: #{text_generator_forward.1} parent=0 // pred_fallthru
    _
  // Predicated region
  $region22: #{text_generator_forward.1} parent=0 // pred_check
    _
  $region23: #{text_generator_forward.1} parent=0 // pred_check_branch
    %26 = sbr.rel (0) target = $region25
  $region24: #{text_generator_forward.1} parent=0 // pred_region
    _
  $region25: #{text_generator_forward.1} parent=0 // pred_fallthru
    _
  // Predicated region
  $region26: #{text_generator_forward.1} parent=0 // pred_check
    _
  $region27: #{text_generator_forward.1} parent=0 // pred_check_branch
    %28 = sbr.rel (0) target = $region29
  $region28: #{text_generator_forward.1} parent=0 // pred_region
    _
  $region29: #{text_generator_forward.1} parent=0 // pred_fallthru
    _
  // Predicated region
  $region30: #{text_generator_forward.1} parent=0 // pred_check
    _
  $region31: #{text_generator_forward.1} parent=0 // pred_check_branch
    %30 = sbr.rel (0) target = $region33
  $region32: #{text_generator_forward.1} parent=0 // pred_region
    _
  $region33: #{text_generator_forward.1} parent=0 // pred_fallthru
    _
  %p32 = scmp.eq.s32.totalorder 0, 0
  // Predicated region
  $region34: #{text_generator_forward.1} parent=0 // pred_check
    %p33 = pneg %p32
  $region35: #{text_generator_forward.1} parent=0 // pred_check_branch
    %35 = sbr.rel (%p33) target = $region37
  $region36: #{text_generator_forward.1} parent=0 // pred_region
    %p36 = scmp.eq.s32.totalorder 0, 0
    // Predicated region
    $region38: #{text_generator_forward.1} parent=36 // pred_check
      %p37 = pneg %p36
    $region39: #{text_generator_forward.1} parent=36 // pred_check_branch
      %39 = sbr.rel (%p37) target = $region41
    $region40: #{text_generator_forward.1} parent=36 // pred_region
      %v40 = vld [vmem:[%s1] sm:$0xff]
      %41 = vst [vmem:[#allocation2] sm:$0xff] %v40
    $region41: #{text_generator_forward.1} parent=36 // pred_fallthru
      _
    %v42 = vld [vmem:[%s0] sm:$0xf]
    %v43 = vld [vmem:[%s0 + $0x4] sm:$0xf]
    %v44 = vld [vmem:[%s0 + $0x8] sm:$0xf]
    %v45 = vld [vmem:[%s0 + $0xc] sm:$0xf]
    %v46 = vld [vmem:[%s0 + $0x10] sm:$0xf]
    %v47 = vld [vmem:[%s0 + $0x14] sm:$0xf]
    %v48 = vld [vmem:[%s0 + $0x18] sm:$0xf]
    %v49 = vld [vmem:[%s0 + $0x1c] sm:$0xf]
    %v50 = vld [vmem:[%s2] sm:$0xff]
    %v51 = vld [vmem:[%s2 + $0x8] sm:$0xf]
    %v52 = vld [vmem:[%s2 + $0xc] sm:$0xff]
    %v53 = vld [vmem:[%s2 + $0x14] sm:$0xf]
    %v54 = vld [vmem:[%s4] sm:$0x7]
    %v56 = vperm.slane %v54, 0
    %v57 = vperm.slane %v54, 1
    %v58 = vperm.slane %v54, 2
    %v70 = vunpack.c.l.b16 %v42
    %v71 = vunpack.c.l.b16 %v43
    %v72 = vunpack.c.l.b16 %v44
    %v73 = vunpack.c.l.b16 %v45
    %v74 = vunpack.c.l.b16 %v46
    %v75 = vunpack.c.l.b16 %v47
    %v76 = vunpack.c.l.b16 %v48
    %v77 = vunpack.c.l.b16 %v49
    %v78 = vpack.c.b16 %v71, %v70
    %v79 = vpack.c.b16 %v73, %v72
    %v80 = vpack.c.b16 %v75, %v74
    %v81 = vpack.c.b16 %v77, %v76
    %v86 = vunpack.c.l.b16 %v50
    %v87 = vunpack.c.h.b16 %v50
    %v88 = vunpack.c.l.b16 %v51
    %v89 = vunpack.c.l.b16 %v52
    %v90 = vunpack.c.h.b16 %v52
    %v91 = vunpack.c.l.b16 %v53
    %v92 = vpack.c.b16 %v89, %v86
    %v93 = vpack.c.b16 %v90, %v87
    %v94 = vpack.c.b16 %v91, %v88
    %vm98 = vcmask 130048
    %v100 = vsel %vm98, %v78, 0
    %v103 = vsel %vm98, %v79, 0
    %v106 = vsel %vm98, %v80, 0
    %v109 = vsel %vm98, %v81, 0
    %111 = vmatpush.bf16.msra.mxu0 0
    %112 = vmatpush.bf16.msra.mxu0 0
    %113 = vmatpush.bf16.msra.mxu0 0
    %114 = vmatpush.bf16.msra.mxu0 0
    %115 = vmatpush.bf16.msra.mxu0 0
    %116 = vmatpush.bf16.msra.mxu0 0
    %117 = vmatpush.bf16.msra.mxu0 0
    %118 = vmatpush.bf16.msra.mxu0 %v92
    %119 = vmatmul.bf16.gmra.mxu0 %v100
    %v120 = vpop.f32.mrf.mxu0
    %v121 = vadd.f32 %v56, %v120
    %v122 = vpop.f32.mrf.mxu0
    %v123 = vadd.f32 %v56, %v122
    %124 = vmatmul.bf16.gmra.mxu0 %v103
    %v125 = vpop.f32.mrf.mxu0
    %v126 = vadd.f32 %v56, %v125
    %v127 = vpop.f32.mrf.mxu0
    %v128 = vadd.f32 %v56, %v127
    %129 = vmatmul.bf16.gmra.mxu0 %v106
    %v130 = vpop.f32.mrf.mxu0
    %v131 = vadd.f32 %v56, %v130
    %v132 = vpop.f32.mrf.mxu0
    %v133 = vadd.f32 %v56, %v132
    %134 = vmatmul.bf16.gmra.mxu0 %v109
    %v135 = vpop.f32.mrf.mxu0
    %v136 = vadd.f32 %v56, %v135
    %v137 = vpop.f32.mrf.mxu0
    %v138 = vadd.f32 %v56, %v137
    %139 = vdwg.mxu0
    %140 = vmatpush.bf16.msra.mxu0 0
    %141 = vmatpush.bf16.msra.mxu0 0
    %142 = vmatpush.bf16.msra.mxu0 0
    %143 = vmatpush.bf16.msra.mxu0 0
    %144 = vmatpush.bf16.msra.mxu0 0
    %145 = vmatpush.bf16.msra.mxu0 0
    %146 = vmatpush.bf16.msra.mxu0 0
    %147 = vmatpush.bf16.msra.mxu0 %v93
    %148 = vmatmul.bf16.gmra.mxu0 %v100
    %v149 = vpop.f32.mrf.mxu0
    %v150 = vadd.f32 %v57, %v149
    %v151 = vpop.f32.mrf.mxu0
    %v152 = vadd.f32 %v57, %v151
    %153 = vmatmul.bf16.gmra.mxu0 %v103
    %v154 = vpop.f32.mrf.mxu0
    %v155 = vadd.f32 %v57, %v154
    %v156 = vpop.f32.mrf.mxu0
    %v157 = vadd.f32 %v57, %v156
    %158 = vmatmul.bf16.gmra.mxu0 %v106
    %v159 = vpop.f32.mrf.mxu0
    %v160 = vadd.f32 %v57, %v159
    %v161 = vpop.f32.mrf.mxu0
    %v162 = vadd.f32 %v57, %v161
    %163 = vmatmul.bf16.gmra.mxu0 %v109
    %v164 = vpop.f32.mrf.mxu0
    %v165 = vadd.f32 %v57, %v164
    %v166 = vpop.f32.mrf.mxu0
    %v167 = vadd.f32 %v57, %v166
    %168 = vdwg.mxu0
    %169 = vmatpush.bf16.msra.mxu0 0
    %170 = vmatpush.bf16.msra.mxu0 0
    %171 = vmatpush.bf16.msra.mxu0 0
    %172 = vmatpush.bf16.msra.mxu0 0
    %173 = vmatpush.bf16.msra.mxu0 0
    %174 = vmatpush.bf16.msra.mxu0 0
    %175 = vmatpush.bf16.msra.mxu0 0
    %176 = vmatpush.bf16.msra.mxu0 %v94
    %177 = vmatmul.bf16.gmra.mxu0 %v100
    %v178 = vpop.f32.mrf.mxu0
    %v179 = vadd.f32 %v58, %v178
    %v180 = vpop.f32.mrf.mxu0
    %v181 = vadd.f32 %v58, %v180
    %182 = vmatmul.bf16.gmra.mxu0 %v103
    %v183 = vpop.f32.mrf.mxu0
    %v184 = vadd.f32 %v58, %v183
    %v185 = vpop.f32.mrf.mxu0
    %v186 = vadd.f32 %v58, %v185
    %187 = vmatmul.bf16.gmra.mxu0 %v106
    %v188 = vpop.f32.mrf.mxu0
    %v189 = vadd.f32 %v58, %v188
    %v190 = vpop.f32.mrf.mxu0
    %v191 = vadd.f32 %v58, %v190
    %192 = vmatmul.bf16.gmra.mxu0 %v109
    %v193 = vpop.f32.mrf.mxu0
    %v194 = vadd.f32 %v58, %v193
    %v195 = vpop.f32.mrf.mxu0
    %v196 = vadd.f32 %v58, %v195
    %197 = vdwg.mxu0
    %198 = vst [vmem:[#allocation4] sm:$0xff] %v121
    %199 = vst [vmem:[#allocation4 + $0x8] sm:$0xff] %v150
    %200 = vst [vmem:[#allocation4 + $0x10] sm:$0xff] %v179
    %201 = vst [vmem:[#allocation4 + $0x18] sm:$0xff] %v123
    %202 = vst [vmem:[#allocation4 + $0x20] sm:$0xff] %v152
    %203 = vst [vmem:[#allocation4 + $0x28] sm:$0xff] %v181
    %204 = vst [vmem:[#allocation4 + $0x30] sm:$0xff] %v126
    %205 = vst [vmem:[#allocation4 + $0x38] sm:$0xff] %v155
    %206 = vst [vmem:[#allocation4 + $0x40] sm:$0xff] %v184
    %207 = vst [vmem:[#allocation4 + $0x48] sm:$0xff] %v128
    %208 = vst [vmem:[#allocation4 + $0x50] sm:$0xff] %v157
    %209 = vst [vmem:[#allocation4 + $0x58] sm:$0xff] %v186
    %210 = vst [vmem:[#allocation4 + $0x60] sm:$0xff] %v131
    %211 = vst [vmem:[#allocation4 + $0x68] sm:$0xff] %v160
    %212 = vst [vmem:[#allocation4 + $0x70] sm:$0xff] %v189
    %213 = vst [vmem:[#allocation4 + $0x78] sm:$0xff] %v133
    %214 = vst [vmem:[#allocation4 + $0x80] sm:$0xff] %v162
    %215 = vst [vmem:[#allocation4 + $0x88] sm:$0xff] %v191
    %216 = vst [vmem:[#allocation4 + $0x90] sm:$0xff] %v136
    %217 = vst [vmem:[#allocation4 + $0x98] sm:$0xff] %v165
    %218 = vst [vmem:[#allocation4 + $0xa0] sm:$0xff] %v194
    %219 = vst [vmem:[#allocation4 + $0xa8] sm:$0xff] %v138
    %220 = vst [vmem:[#allocation4 + $0xb0] sm:$0xff] %v167
    %221 = vst [vmem:[#allocation4 + $0xb8] sm:$0xff] %v196
    %v222 = vld [vmem:[%s3] sm:$0xff]
    %v223 = vld [vmem:[%s3 + $0x8] sm:$0xff]
    %v224 = vld [vmem:[%s3 + $0x10] sm:$0xff]
    %v225 = vld [vmem:[%s3 + $0x18] sm:$0xff]
    %v226 = vld [vmem:[%s3 + $0x20] sm:$0xff]
    %v227 = vld [vmem:[%s3 + $0x28] sm:$0xff]
    %v228 = vld [vmem:[%s3 + $0x30] sm:$0xff]
    %v229 = vld [vmem:[%s3 + $0x38] sm:$0xff]
    %v230 = vld [vmem:[%s3 + $0x40] sm:$0xff]
    %v231 = vld [vmem:[%s3 + $0x48] sm:$0xff]
    %v232 = vld [vmem:[%s3 + $0x50] sm:$0xff]
    %v233 = vld [vmem:[%s3 + $0x58] sm:$0xff]
    %v234 = vld [vmem:[%s3 + $0x60] sm:$0xff]
    %v235 = vld [vmem:[%s3 + $0x68] sm:$0xff]
    %v236 = vld [vmem:[%s3 + $0x70] sm:$0xff]
    %v237 = vld [vmem:[%s3 + $0x78] sm:$0xff]
    %v238 = vld [vmem:[%s3 + $0x80] sm:$0xff]
    %v239 = vld [vmem:[%s3 + $0x88] sm:$0xff]
    %v240 = vld [vmem:[%s3 + $0x90] sm:$0xff]
    %v241 = vld [vmem:[%s3 + $0x98] sm:$0xff]
    %v242 = vld [vmem:[%s3 + $0xa0] sm:$0xff]
    %v243 = vld [vmem:[%s3 + $0xa8] sm:$0xff]
    %v244 = vld [vmem:[%s3 + $0xb0] sm:$0xff]
    %v245 = vld [vmem:[%s3 + $0xb8] sm:$0xff]
    %v246 = vld [vmem:[%s3 + $0xc0] sm:$0xff]
    %v247 = vld [vmem:[%s3 + $0xc8] sm:$0xff]
    %v248 = vld [vmem:[%s3 + $0xd0] sm:$0xff]
    %v249 = vld [vmem:[%s3 + $0xd8] sm:$0xff]
    %v250 = vld [vmem:[%s3 + $0xe0] sm:$0xff]
    %v251 = vld [vmem:[%s3 + $0xe8] sm:$0xff]
    %v252 = vld [vmem:[%s3 + $0xf0] sm:$0xff]
    %v253 = vld [vmem:[%s3 + $0xf8] sm:$0xff]
    %v254 = vld [vmem:[%s3 + $0x100] sm:$0xff]
    %v255 = vld [vmem:[%s3 + $0x108] sm:$0xff]
    %v256 = vld [vmem:[%s3 + $0x110] sm:$0xff]
    %v257 = vld [vmem:[%s3 + $0x118] sm:$0xff]
    %v258 = vld [vmem:[%s3 + $0x120] sm:$0xff]
    %v259 = vld [vmem:[%s3 + $0x128] sm:$0xff]
    %v260 = vld [vmem:[%s3 + $0x130] sm:$0xff]
    %v261 = vld [vmem:[%s3 + $0x138] sm:$0xff]
    %v262 = vld [vmem:[%s3 + $0x140] sm:$0xff]
    %v263 = vld [vmem:[%s3 + $0x148] sm:$0xff]
    %v264 = vld [vmem:[%s3 + $0x150] sm:$0xff]
    %v265 = vld [vmem:[%s3 + $0x158] sm:$0xff]
    %v266 = vld [vmem:[%s3 + $0x160] sm:$0xff]
    %v267 = vld [vmem:[%s3 + $0x168] sm:$0xff]
    %v268 = vld [vmem:[%s3 + $0x170] sm:$0xff]
    %v269 = vld [vmem:[%s3 + $0x178] sm:$0xff]
    %v270 = vld [vmem:[%s5] sm:$0x1]
    %v272 = vperm.slane %v270, 0
    %v274 = vld [vmem:[#allocation2] sm:$0xff]
    %s275 = smul.u32 0, 3
    %s276 = smul.addr %s275, 8
    %s277 = scalar_lea.vmem [#allocation4], %s276
    %v278 = vld [vmem:[%s277] sm:$0xff]
    %v279 = vld [vmem:[%s277 + $0x8] sm:$0xff]
    %v280 = vld [vmem:[%s277 + $0x10] sm:$0xff]
    %281 = vmatpush.msra.mxu0 %v267
    %282 = vmatpush.msra.mxu0 %v264
    %283 = vmatpush.msra.mxu0 %v261
    %284 = vmatpush.msra.mxu0 %v258
    %285 = vmatpush.msra.mxu0 %v255
    %286 = vmatpush.msra.mxu0 %v252
    %287 = vmatpush.msra.mxu0 %v249
    %288 = vmatpush.msra.mxu0 %v246
    %289 = vmatpush.msra.mxu0 %v243
    %290 = vmatpush.msra.mxu0 %v240
    %291 = vmatpush.msra.mxu0 %v237
    %292 = vmatpush.msra.mxu0 %v234
    %293 = vmatpush.msra.mxu0 %v231
    %294 = vmatpush.msra.mxu0 %v228
    %295 = vmatpush.msra.mxu0 %v225
    %296 = vmatpush.msra.mxu0 %v222
    %297 = vmatmul.f32.gmra.mxu0 %v274
    %v298 = vpop.f32.mrf.mxu0
    %v299 = vadd.f32 0.0, %v298
    %300 = vdwg.mxu0
    %301 = vmatpush.msra.mxu0 %v268
    %302 = vmatpush.msra.mxu0 %v265
    %303 = vmatpush.msra.mxu0 %v262
    %304 = vmatpush.msra.mxu0 %v259
    %305 = vmatpush.msra.mxu0 %v256
    %306 = vmatpush.msra.mxu0 %v253
    %307 = vmatpush.msra.mxu0 %v250
    %308 = vmatpush.msra.mxu0 %v247
    %309 = vmatpush.msra.mxu0 %v244
    %310 = vmatpush.msra.mxu0 %v241
    %311 = vmatpush.msra.mxu0 %v238
    %312 = vmatpush.msra.mxu0 %v235
    %313 = vmatpush.msra.mxu0 %v232
    %314 = vmatpush.msra.mxu0 %v229
    %315 = vmatpush.msra.mxu0 %v226
    %316 = vmatpush.msra.mxu0 %v223
    %317 = vmatmul.f32.gmra.mxu0 %v274
    %v318 = vpop.f32.mrf.mxu0
    %v319 = vadd.f32 0.0, %v318
    %320 = vdwg.mxu0
    %321 = vmatpush.msra.mxu0 %v269
    %322 = vmatpush.msra.mxu0 %v266
    %323 = vmatpush.msra.mxu0 %v263
    %324 = vmatpush.msra.mxu0 %v260
    %325 = vmatpush.msra.mxu0 %v257
    %326 = vmatpush.msra.mxu0 %v254
    %327 = vmatpush.msra.mxu0 %v251
    %328 = vmatpush.msra.mxu0 %v248
    %329 = vmatpush.msra.mxu0 %v245
    %330 = vmatpush.msra.mxu0 %v242
    %331 = vmatpush.msra.mxu0 %v239
    %332 = vmatpush.msra.mxu0 %v236
    %333 = vmatpush.msra.mxu0 %v233
    %334 = vmatpush.msra.mxu0 %v230
    %335 = vmatpush.msra.mxu0 %v227
    %336 = vmatpush.msra.mxu0 %v224
    %337 = vmatmul.f32.gmra.mxu0 %v274
    %v338 = vpop.f32.mrf.mxu0
    %v339 = vadd.f32 0.0, %v338
    %340 = vdwg.mxu0
    %v341 = vadd.f32 %v278, %v299
    %v342 = vxor.u32 %v341, 2147483648
    %v343 = vmul.f32 %v342, 1.442695
    %v344 = vpow.pop %v343
    %v345 = vadd.f32 %v344, 1.0
    %v346 = vrcp.pop %v345
    %v347 = vmul.f32 %v345, %v346
    %v348 = vsub.f32 1.0, %v347
    %v349 = vmul.f32 %v346, %v348
    %v350 = vadd.f32 %v346, %v349
    %vm351 = vweird.f32 %v345
    %vm352 = vweird.f32 %v346
    %vm353 = vmor %vm351, %vm352
    %v354 = vsel %vm353, %v346, %v350
    %v355 = vand.u32 2147483647, %v345
    %vm356 = vcmp.eq.f32.partialorder %v355, 8.507059e+37
    %v357 = vand.u32 %v345, 2147483648
    %v358 = vor.u32 1.1754944e-38, %v357
    %v359 = vsel %vm356, %v358, %v354
    %v360 = vmul.f32 1.0, %v359
    %v361 = vadd.f32 %v279, %v319
    %v362 = vxor.u32 %v361, 2147483648
    %v363 = vmul.f32 %v362, 1.442695
    %v364 = vpow.pop %v363
    %v365 = vadd.f32 %v364, 1.0
    %v366 = vrcp.pop %v365
    %v367 = vmul.f32 %v365, %v366
    %v368 = vsub.f32 1.0, %v367
    %v369 = vmul.f32 %v366, %v368
    %v370 = vadd.f32 %v366, %v369
    %vm371 = vweird.f32 %v365
    %vm372 = vweird.f32 %v366
    %vm373 = vmor %vm371, %vm372
    %v374 = vsel %vm373, %v366, %v370
    %v375 = vand.u32 2147483647, %v365
    %vm376 = vcmp.eq.f32.partialorder %v375, 8.507059e+37
    %v377 = vand.u32 %v365, 2147483648
    %v378 = vor.u32 1.1754944e-38, %v377
    %v379 = vsel %vm376, %v378, %v374
    %v380 = vmul.f32 1.0, %v379
    %v381 = vadd.f32 %v339, %v272
    %v382 = vmul.f32 %v360, %v381
    %v383 = vadd.f32 %v280, %v382
    %v384 = vtanh.pop %v383
    %v385 = vsub.f32 1.0, %v380
    %v386 = vmul.f32 %v385, %v384
    %v387 = vmul.f32 %v380, %v274
    %v388 = vadd.f32 %v386, %v387
    %v389 = vpack.c.bf16 %v388, %v388
    %390 = vst [vmem:[#allocation3] sm:$0xf] %v389
    %s391 = smul.u32 0, 8
    %p392 = scmp.eq.s32.totalorder %s391, 7
    // Predicated region
    $region42: #{text_generator_forward.1} parent=36 // pred_check
      %p393 = pneg %p392
    $region43: #{text_generator_forward.1} parent=36 // pred_check_branch
      %395 = sbr.rel (%p393) target = $region45
    $region44: #{text_generator_forward.1} parent=36 // pred_region
      %396 = vst [vmem:[%s9] sm:$0xff] %v388
    $region45: #{text_generator_forward.1} parent=36 // pred_fallthru
      _
    %s397 = smul.u32 1, 3
    %s398 = smul.addr %s397, 8
    %s399 = scalar_lea.vmem [#allocation4], %s398
    %v400 = vld [vmem:[%s399] sm:$0xff]
    %v401 = vld [vmem:[%s399 + $0x8] sm:$0xff]
    %v402 = vld [vmem:[%s399 + $0x10] sm:$0xff]
    %403 = vmatpush.msra.mxu0 %v267
    %404 = vmatpush.msra.mxu0 %v264
    %405 = vmatpush.msra.mxu0 %v261
    %406 = vmatpush.msra.mxu0 %v258
    %407 = vmatpush.msra.mxu0 %v255
    %408 = vmatpush.msra.mxu0 %v252
    %409 = vmatpush.msra.mxu0 %v249
    %410 = vmatpush.msra.mxu0 %v246
    %411 = vmatpush.msra.mxu0 %v243
    %412 = vmatpush.msra.mxu0 %v240
    %413 = vmatpush.msra.mxu0 %v237
    %414 = vmatpush.msra.mxu0 %v234
    %415 = vmatpush.msra.mxu0 %v231
    %416 = vmatpush.msra.mxu0 %v228
    %417 = vmatpush.msra.mxu0 %v225
    %418 = vmatpush.msra.mxu0 %v222
    %419 = vmatmul.f32.gmra.mxu0 %v388
    %v420 = vpop.f32.mrf.mxu0
    %v421 = vadd.f32 0.0, %v420
    %422 = vdwg.mxu0
    %423 = vmatpush.msra.mxu0 %v268
    %424 = vmatpush.msra.mxu0 %v265
    %425 = vmatpush.msra.mxu0 %v262
    %426 = vmatpush.msra.mxu0 %v259
    %427 = vmatpush.msra.mxu0 %v256
    %428 = vmatpush.msra.mxu0 %v253
    %429 = vmatpush.msra.mxu0 %v250
    %430 = vmatpush.msra.mxu0 %v247
    %431 = vmatpush.msra.mxu0 %v244
    %432 = vmatpush.msra.mxu0 %v241
    %433 = vmatpush.msra.mxu0 %v238
    %434 = vmatpush.msra.mxu0 %v235
    %435 = vmatpush.msra.mxu0 %v232
    %436 = vmatpush.msra.mxu0 %v229
    %437 = vmatpush.msra.mxu0 %v226
    %438 = vmatpush.msra.mxu0 %v223
    %439 = vmatmul.f32.gmra.mxu0 %v388
    %v440 = vpop.f32.mrf.mxu0
    %v441 = vadd.f32 0.0, %v440
    %442 = vdwg.mxu0
    %443 = vmatpush.msra.mxu0 %v269
    %444 = vmatpush.msra.mxu0 %v266
    %445 = vmatpush.msra.mxu0 %v263
    %446 = vmatpush.msra.mxu0 %v260
    %447 = vmatpush.msra.mxu0 %v257
    %448 = vmatpush.msra.mxu0 %v254
    %449 = vmatpush.msra.mxu0 %v251
    %450 = vmatpush.msra.mxu0 %v248
    %451 = vmatpush.msra.mxu0 %v245
    %452 = vmatpush.msra.mxu0 %v242
    %453 = vmatpush.msra.mxu0 %v239
    %454 = vmatpush.msra.mxu0 %v236
    %455 = vmatpush.msra.mxu0 %v233
    %456 = vmatpush.msra.mxu0 %v230
    %457 = vmatpush.msra.mxu0 %v227
    %458 = vmatpush.msra.mxu0 %v224
    %459 = vmatmul.f32.gmra.mxu0 %v388
    %v460 = vpop.f32.mrf.mxu0
    %v461 = vadd.f32 0.0, %v460
    %462 = vdwg.mxu0
    %v463 = vadd.f32 %v400, %v421
    %v464 = vxor.u32 %v463, 2147483648
    %v465 = vmul.f32 %v464, 1.442695
    %v466 = vpow.pop %v465
    %v467 = vadd.f32 %v466, 1.0
    %v468 = vrcp.pop %v467
    %v469 = vmul.f32 %v467, %v468
    %v470 = vsub.f32 1.0, %v469
    %v471 = vmul.f32 %v468, %v470
    %v472 = vadd.f32 %v468, %v471
    %vm473 = vweird.f32 %v467
    %vm474 = vweird.f32 %v468
    %vm475 = vmor %vm473, %vm474
    %v476 = vsel %vm475, %v468, %v472
    %v477 = vand.u32 2147483647, %v467
    %vm478 = vcmp.eq.f32.partialorder %v477, 8.507059e+37
    %v479 = vand.u32 %v467, 2147483648
    %v480 = vor.u32 1.1754944e-38, %v479
    %v481 = vsel %vm478, %v480, %v476
    %v482 = vmul.f32 1.0, %v481
    %v483 = vadd.f32 %v401, %v441
    %v484 = vxor.u32 %v483, 2147483648
    %v485 = vmul.f32 %v484, 1.442695
    %v486 = vpow.pop %v485
    %v487 = vadd.f32 %v486, 1.0
    %v488 = vrcp.pop %v487
    %v489 = vmul.f32 %v487, %v488
    %v490 = vsub.f32 1.0, %v489
    %v491 = vmul.f32 %v488, %v490
    %v492 = vadd.f32 %v488, %v491
    %vm493 = vweird.f32 %v487
    %vm494 = vweird.f32 %v488
    %vm495 = vmor %vm493, %vm494
    %v496 = vsel %vm495, %v488, %v492
    %v497 = vand.u32 2147483647, %v487
    %vm498 = vcmp.eq.f32.partialorder %v497, 8.507059e+37
    %v499 = vand.u32 %v487, 2147483648
    %v500 = vor.u32 1.1754944e-38, %v499
    %v501 = vsel %vm498, %v500, %v496
    %v502 = vmul.f32 1.0, %v501
    %v503 = vadd.f32 %v461, %v272
    %v504 = vmul.f32 %v482, %v503
    %v505 = vadd.f32 %v402, %v504
    %v506 = vtanh.pop %v505
    %v507 = vsub.f32 1.0, %v502
    %v508 = vmul.f32 %v507, %v506
    %v509 = vmul.f32 %v502, %v388
    %v510 = vadd.f32 %v508, %v509
    %v511 = vpack.c.bf16 %v510, %v510
    %s512 = scalar_lea.vmem [#allocation3], 4
    %513 = vst [vmem:[%s512] sm:$0xf] %v511
    %s514 = sadd.s32 %s391, 1
    %p515 = scmp.eq.s32.totalorder %s514, 7
    // Predicated region
    $region46: #{text_generator_forward.1} parent=36 // pred_check
      %p516 = pneg %p515
    $region47: #{text_generator_forward.1} parent=36 // pred_check_branch
      %518 = sbr.rel (%p516) target = $region49
    $region48: #{text_generator_forward.1} parent=36 // pred_region
      %519 = vst [vmem:[%s9] sm:$0xff] %v510
    $region49: #{text_generator_forward.1} parent=36 // pred_fallthru
      _
    %s520 = smul.u32 2, 3
    %s521 = smul.addr %s520, 8
    %s522 = scalar_lea.vmem [#allocation4], %s521
    %v523 = vld [vmem:[%s522] sm:$0xff]
    %v524 = vld [vmem:[%s522 + $0x8] sm:$0xff]
    %v525 = vld [vmem:[%s522 + $0x10] sm:$0xff]
    %526 = vmatpush.msra.mxu0 %v267
    %527 = vmatpush.msra.mxu0 %v264
    %528 = vmatpush.msra.mxu0 %v261
    %529 = vmatpush.msra.mxu0 %v258
    %530 = vmatpush.msra.mxu0 %v255
    %531 = vmatpush.msra.mxu0 %v252
    %532 = vmatpush.msra.mxu0 %v249
    %533 = vmatpush.msra.mxu0 %v246
    %534 = vmatpush.msra.mxu0 %v243
    %535 = vmatpush.msra.mxu0 %v240
    %536 = vmatpush.msra.mxu0 %v237
    %537 = vmatpush.msra.mxu0 %v234
    %538 = vmatpush.msra.mxu0 %v231
    %539 = vmatpush.msra.mxu0 %v228
    %540 = vmatpush.msra.mxu0 %v225
    %541 = vmatpush.msra.mxu0 %v222
    %542 = vmatmul.f32.gmra.mxu0 %v510
    %v543 = vpop.f32.mrf.mxu0
    %v544 = vadd.f32 0.0, %v543
    %545 = vdwg.mxu0
    %546 = vmatpush.msra.mxu0 %v268
    %547 = vmatpush.msra.mxu0 %v265
    %548 = vmatpush.msra.mxu0 %v262
    %549 = vmatpush.msra.mxu0 %v259
    %550 = vmatpush.msra.mxu0 %v256
    %551 = vmatpush.msra.mxu0 %v253
    %552 = vmatpush.msra.mxu0 %v250
    %553 = vmatpush.msra.mxu0 %v247
    %554 = vmatpush.msra.mxu0 %v244
    %555 = vmatpush.msra.mxu0 %v241
    %556 = vmatpush.msra.mxu0 %v238
    %557 = vmatpush.msra.mxu0 %v235
    %558 = vmatpush.msra.mxu0 %v232
    %559 = vmatpush.msra.mxu0 %v229
    %560 = vmatpush.msra.mxu0 %v226
    %561 = vmatpush.msra.mxu0 %v223
    %562 = vmatmul.f32.gmra.mxu0 %v510
    %v563 = vpop.f32.mrf.mxu0
    %v564 = vadd.f32 0.0, %v563
    %565 = vdwg.mxu0
    %566 = vmatpush.msra.mxu0 %v269
    %567 = vmatpush.msra.mxu0 %v266
    %568 = vmatpush.msra.mxu0 %v263
    %569 = vmatpush.msra.mxu0 %v260
    %570 = vmatpush.msra.mxu0 %v257
    %571 = vmatpush.msra.mxu0 %v254
    %572 = vmatpush.msra.mxu0 %v251
    %573 = vmatpush.msra.mxu0 %v248
    %574 = vmatpush.msra.mxu0 %v245
    %575 = vmatpush.msra.mxu0 %v242
    %576 = vmatpush.msra.mxu0 %v239
    %577 = vmatpush.msra.mxu0 %v236
    %578 = vmatpush.msra.mxu0 %v233
    %579 = vmatpush.msra.mxu0 %v230
    %580 = vmatpush.msra.mxu0 %v227
    %581 = vmatpush.msra.mxu0 %v224
    %582 = vmatmul.f32.gmra.mxu0 %v510
    %v583 = vpop.f32.mrf.mxu0
    %v584 = vadd.f32 0.0, %v583
    %585 = vdwg.mxu0
    %v586 = vadd.f32 %v523, %v544
    %v587 = vxor.u32 %v586, 2147483648
    %v588 = vmul.f32 %v587, 1.442695
    %v589 = vpow.pop %v588
    %v590 = vadd.f32 %v589, 1.0
    %v591 = vrcp.pop %v590
    %v592 = vmul.f32 %v590, %v591
    %v593 = vsub.f32 1.0, %v592
    %v594 = vmul.f32 %v591, %v593
    %v595 = vadd.f32 %v591, %v594
    %vm596 = vweird.f32 %v590
    %vm597 = vweird.f32 %v591
    %vm598 = vmor %vm596, %vm597
    %v599 = vsel %vm598, %v591, %v595
    %v600 = vand.u32 2147483647, %v590
    %vm601 = vcmp.eq.f32.partialorder %v600, 8.507059e+37
    %v602 = vand.u32 %v590, 2147483648
    %v603 = vor.u32 1.1754944e-38, %v602
    %v604 = vsel %vm601, %v603, %v599
    %v605 = vmul.f32 1.0, %v604
    %v606 = vadd.f32 %v524, %v564
    %v607 = vxor.u32 %v606, 2147483648
    %v608 = vmul.f32 %v607, 1.442695
    %v609 = vpow.pop %v608
    %v610 = vadd.f32 %v609, 1.0
    %v611 = vrcp.pop %v610
    %v612 = vmul.f32 %v610, %v611
    %v613 = vsub.f32 1.0, %v612
    %v614 = vmul.f32 %v611, %v613
    %v615 = vadd.f32 %v611, %v614
    %vm616 = vweird.f32 %v610
    %vm617 = vweird.f32 %v611
    %vm618 = vmor %vm616, %vm617
    %v619 = vsel %vm618, %v611, %v615
    %v620 = vand.u32 2147483647, %v610
    %vm621 = vcmp.eq.f32.partialorder %v620, 8.507059e+37
    %v622 = vand.u32 %v610, 2147483648
    %v623 = vor.u32 1.1754944e-38, %v622
    %v624 = vsel %vm621, %v623, %v619
    %v625 = vmul.f32 1.0, %v624
    %v626 = vadd.f32 %v584, %v272
    %v627 = vmul.f32 %v605, %v626
    %v628 = vadd.f32 %v525, %v627
    %v629 = vtanh.pop %v628
    %v630 = vsub.f32 1.0, %v625
    %v631 = vmul.f32 %v630, %v629
    %v632 = vmul.f32 %v625, %v510
    %v633 = vadd.f32 %v631, %v632
    %v634 = vpack.c.bf16 %v633, %v633
    %s635 = scalar_lea.vmem [#allocation3], 8
    %636 = vst [vmem:[%s635] sm:$0xf] %v634
    %s637 = sadd.s32 %s391, 2
    %p638 = scmp.eq.s32.totalorder %s637, 7
    // Predicated region
    $region50: #{text_generator_forward.1} parent=36 // pred_check
      %p639 = pneg %p638
    $region51: #{text_generator_forward.1} parent=36 // pred_check_branch
      %641 = sbr.rel (%p639) target = $region53
    $region52: #{text_generator_forward.1} parent=36 // pred_region
      %642 = vst [vmem:[%s9] sm:$0xff] %v633
    $region53: #{text_generator_forward.1} parent=36 // pred_fallthru
      _
    %s643 = smul.u32 3, 3
    %s644 = smul.addr %s643, 8
    %s645 = scalar_lea.vmem [#allocation4], %s644
    %v646 = vld [vmem:[%s645] sm:$0xff]
    %v647 = vld [vmem:[%s645 + $0x8] sm:$0xff]
    %v648 = vld [vmem:[%s645 + $0x10] sm:$0xff]
    %649 = vmatpush.msra.mxu0 %v267
    %650 = vmatpush.msra.mxu0 %v264
    %651 = vmatpush.msra.mxu0 %v261
    %652 = vmatpush.msra.mxu0 %v258
    %653 = vmatpush.msra.mxu0 %v255
    %654 = vmatpush.msra.mxu0 %v252
    %655 = vmatpush.msra.mxu0 %v249
    %656 = vmatpush.msra.mxu0 %v246
    %657 = vmatpush.msra.mxu0 %v243
    %658 = vmatpush.msra.mxu0 %v240
    %659 = vmatpush.msra.mxu0 %v237
    %660 = vmatpush.msra.mxu0 %v234
    %661 = vmatpush.msra.mxu0 %v231
    %662 = vmatpush.msra.mxu0 %v228
    %663 = vmatpush.msra.mxu0 %v225
    %664 = vmatpush.msra.mxu0 %v222
    %665 = vmatmul.f32.gmra.mxu0 %v633
    %v666 = vpop.f32.mrf.mxu0
    %v667 = vadd.f32 0.0, %v666
    %668 = vdwg.mxu0
    %669 = vmatpush.msra.mxu0 %v268
    %670 = vmatpush.msra.mxu0 %v265
    %671 = vmatpush.msra.mxu0 %v262
    %672 = vmatpush.msra.mxu0 %v259
    %673 = vmatpush.msra.mxu0 %v256
    %674 = vmatpush.msra.mxu0 %v253
    %675 = vmatpush.msra.mxu0 %v250
    %676 = vmatpush.msra.mxu0 %v247
    %677 = vmatpush.msra.mxu0 %v244
    %678 = vmatpush.msra.mxu0 %v241
    %679 = vmatpush.msra.mxu0 %v238
    %680 = vmatpush.msra.mxu0 %v235
    %681 = vmatpush.msra.mxu0 %v232
    %682 = vmatpush.msra.mxu0 %v229
    %683 = vmatpush.msra.mxu0 %v226
    %684 = vmatpush.msra.mxu0 %v223
    %685 = vmatmul.f32.gmra.mxu0 %v633
    %v686 = vpop.f32.mrf.mxu0
    %v687 = vadd.f32 0.0, %v686
    %688 = vdwg.mxu0
    %689 = vmatpush.msra.mxu0 %v269
    %690 = vmatpush.msra.mxu0 %v266
    %691 = vmatpush.msra.mxu0 %v263
    %692 = vmatpush.msra.mxu0 %v260
    %693 = vmatpush.msra.mxu0 %v257
    %694 = vmatpush.msra.mxu0 %v254
    %695 = vmatpush.msra.mxu0 %v251
    %696 = vmatpush.msra.mxu0 %v248
    %697 = vmatpush.msra.mxu0 %v245
    %698 = vmatpush.msra.mxu0 %v242
    %699 = vmatpush.msra.mxu0 %v239
    %700 = vmatpush.msra.mxu0 %v236
    %701 = vmatpush.msra.mxu0 %v233
    %702 = vmatpush.msra.mxu0 %v230
    %703 = vmatpush.msra.mxu0 %v227
    %704 = vmatpush.msra.mxu0 %v224
    %705 = vmatmul.f32.gmra.mxu0 %v633
    %v706 = vpop.f32.mrf.mxu0
    %v707 = vadd.f32 0.0, %v706
    %708 = vdwg.mxu0
    %v709 = vadd.f32 %v646, %v667
    %v710 = vxor.u32 %v709, 2147483648
    %v711 = vmul.f32 %v710, 1.442695
    %v712 = vpow.pop %v711
    %v713 = vadd.f32 %v712, 1.0
    %v714 = vrcp.pop %v713
    %v715 = vmul.f32 %v713, %v714
    %v716 = vsub.f32 1.0, %v715
    %v717 = vmul.f32 %v714, %v716
    %v718 = vadd.f32 %v714, %v717
    %vm719 = vweird.f32 %v713
    %vm720 = vweird.f32 %v714
    %vm721 = vmor %vm719, %vm720
    %v722 = vsel %vm721, %v714, %v718
    %v723 = vand.u32 2147483647, %v713
    %vm724 = vcmp.eq.f32.partialorder %v723, 8.507059e+37
    %v725 = vand.u32 %v713, 2147483648
    %v726 = vor.u32 1.1754944e-38, %v725
    %v727 = vsel %vm724, %v726, %v722
    %v728 = vmul.f32 1.0, %v727
    %v729 = vadd.f32 %v647, %v687
    %v730 = vxor.u32 %v729, 2147483648
    %v731 = vmul.f32 %v730, 1.442695
    %v732 = vpow.pop %v731
    %v733 = vadd.f32 %v732, 1.0
    %v734 = vrcp.pop %v733
    %v735 = vmul.f32 %v733, %v734
    %v736 = vsub.f32 1.0, %v735
    %v737 = vmul.f32 %v734, %v736
    %v738 = vadd.f32 %v734, %v737
    %vm739 = vweird.f32 %v733
    %vm740 = vweird.f32 %v734
    %vm741 = vmor %vm739, %vm740
    %v742 = vsel %vm741, %v734, %v738
    %v743 = vand.u32 2147483647, %v733
    %vm744 = vcmp.eq.f32.partialorder %v743, 8.507059e+37
    %v745 = vand.u32 %v733, 2147483648
    %v746 = vor.u32 1.1754944e-38, %v745
    %v747 = vsel %vm744, %v746, %v742
    %v748 = vmul.f32 1.0, %v747
    %v749 = vadd.f32 %v707, %v272
    %v750 = vmul.f32 %v728, %v749
    %v751 = vadd.f32 %v648, %v750
    %v752 = vtanh.pop %v751
    %v753 = vsub.f32 1.0, %v748
    %v754 = vmul.f32 %v753, %v752
    %v755 = vmul.f32 %v748, %v633
    %v756 = vadd.f32 %v754, %v755
    %v757 = vpack.c.bf16 %v756, %v756
    %s758 = scalar_lea.vmem [#allocation3], 12
    %759 = vst [vmem:[%s758] sm:$0xf] %v757
    %s760 = sadd.s32 %s391, 3
    %p761 = scmp.eq.s32.totalorder %s760, 7
    // Predicated region
    $region54: #{text_generator_forward.1} parent=36 // pred_check
      %p762 = pneg %p761
    $region55: #{text_generator_forward.1} parent=36 // pred_check_branch
      %764 = sbr.rel (%p762) target = $region57
    $region56: #{text_generator_forward.1} parent=36 // pred_region
      %765 = vst [vmem:[%s9] sm:$0xff] %v756
    $region57: #{text_generator_forward.1} parent=36 // pred_fallthru
      _
    %s766 = smul.u32 4, 3
    %s767 = smul.addr %s766, 8
    %s768 = scalar_lea.vmem [#allocation4], %s767
    %v769 = vld [vmem:[%s768] sm:$0xff]
    %v770 = vld [vmem:[%s768 + $0x8] sm:$0xff]
    %v771 = vld [vmem:[%s768 + $0x10] sm:$0xff]
    %772 = vmatpush.msra.mxu0 %v267
    %773 = vmatpush.msra.mxu0 %v264
    %774 = vmatpush.msra.mxu0 %v261
    %775 = vmatpush.msra.mxu0 %v258
    %776 = vmatpush.msra.mxu0 %v255
    %777 = vmatpush.msra.mxu0 %v252
    %778 = vmatpush.msra.mxu0 %v249
    %779 = vmatpush.msra.mxu0 %v246
    %780 = vmatpush.msra.mxu0 %v243
    %781 = vmatpush.msra.mxu0 %v240
    %782 = vmatpush.msra.mxu0 %v237
    %783 = vmatpush.msra.mxu0 %v234
    %784 = vmatpush.msra.mxu0 %v231
    %785 = vmatpush.msra.mxu0 %v228
    %786 = vmatpush.msra.mxu0 %v225
    %787 = vmatpush.msra.mxu0 %v222
    %788 = vmatmul.f32.gmra.mxu0 %v756
    %v789 = vpop.f32.mrf.mxu0
    %v790 = vadd.f32 0.0, %v789
    %791 = vdwg.mxu0
    %792 = vmatpush.msra.mxu0 %v268
    %793 = vmatpush.msra.mxu0 %v265
    %794 = vmatpush.msra.mxu0 %v262
    %795 = vmatpush.msra.mxu0 %v259
    %796 = vmatpush.msra.mxu0 %v256
    %797 = vmatpush.msra.mxu0 %v253
    %798 = vmatpush.msra.mxu0 %v250
    %799 = vmatpush.msra.mxu0 %v247
    %800 = vmatpush.msra.mxu0 %v244
    %801 = vmatpush.msra.mxu0 %v241
    %802 = vmatpush.msra.mxu0 %v238
    %803 = vmatpush.msra.mxu0 %v235
    %804 = vmatpush.msra.mxu0 %v232
    %805 = vmatpush.msra.mxu0 %v229
    %806 = vmatpush.msra.mxu0 %v226
    %807 = vmatpush.msra.mxu0 %v223
    %808 = vmatmul.f32.gmra.mxu0 %v756
    %v809 = vpop.f32.mrf.mxu0
    %v810 = vadd.f32 0.0, %v809
    %811 = vdwg.mxu0
    %812 = vmatpush.msra.mxu0 %v269
    %813 = vmatpush.msra.mxu0 %v266
    %814 = vmatpush.msra.mxu0 %v263
    %815 = vmatpush.msra.mxu0 %v260
    %816 = vmatpush.msra.mxu0 %v257
    %817 = vmatpush.msra.mxu0 %v254
    %818 = vmatpush.msra.mxu0 %v251
    %819 = vmatpush.msra.mxu0 %v248
    %820 = vmatpush.msra.mxu0 %v245
    %821 = vmatpush.msra.mxu0 %v242
    %822 = vmatpush.msra.mxu0 %v239
    %823 = vmatpush.msra.mxu0 %v236
    %824 = vmatpush.msra.mxu0 %v233
    %825 = vmatpush.msra.mxu0 %v230
    %826 = vmatpush.msra.mxu0 %v227
    %827 = vmatpush.msra.mxu0 %v224
    %828 = vmatmul.f32.gmra.mxu0 %v756
    %v829 = vpop.f32.mrf.mxu0
    %v830 = vadd.f32 0.0, %v829
    %831 = vdwg.mxu0
    %v832 = vadd.f32 %v769, %v790
    %v833 = vxor.u32 %v832, 2147483648
    %v834 = vmul.f32 %v833, 1.442695
    %v835 = vpow.pop %v834
    %v836 = vadd.f32 %v835, 1.0
    %v837 = vrcp.pop %v836
    %v838 = vmul.f32 %v836, %v837
    %v839 = vsub.f32 1.0, %v838
    %v840 = vmul.f32 %v837, %v839
    %v841 = vadd.f32 %v837, %v840
    %vm842 = vweird.f32 %v836
    %vm843 = vweird.f32 %v837
    %vm844 = vmor %vm842, %vm843
    %v845 = vsel %vm844, %v837, %v841
    %v846 = vand.u32 2147483647, %v836
    %vm847 = vcmp.eq.f32.partialorder %v846, 8.507059e+37
    %v848 = vand.u32 %v836, 2147483648
    %v849 = vor.u32 1.1754944e-38, %v848
    %v850 = vsel %vm847, %v849, %v845
    %v851 = vmul.f32 1.0, %v850
    %v852 = vadd.f32 %v770, %v810
    %v853 = vxor.u32 %v852, 2147483648
    %v854 = vmul.f32 %v853, 1.442695
    %v855 = vpow.pop %v854
    %v856 = vadd.f32 %v855, 1.0
    %v857 = vrcp.pop %v856
    %v858 = vmul.f32 %v856, %v857
    %v859 = vsub.f32 1.0, %v858
    %v860 = vmul.f32 %v857, %v859
    %v861 = vadd.f32 %v857, %v860
    %vm862 = vweird.f32 %v856
    %vm863 = vweird.f32 %v857
    %vm864 = vmor %vm862, %vm863
    %v865 = vsel %vm864, %v857, %v861
    %v866 = vand.u32 2147483647, %v856
    %vm867 = vcmp.eq.f32.partialorder %v866, 8.507059e+37
    %v868 = vand.u32 %v856, 2147483648
    %v869 = vor.u32 1.1754944e-38, %v868
    %v870 = vsel %vm867, %v869, %v865
    %v871 = vmul.f32 1.0, %v870
    %v872 = vadd.f32 %v830, %v272
    %v873 = vmul.f32 %v851, %v872
    %v874 = vadd.f32 %v771, %v873
    %v875 = vtanh.pop %v874
    %v876 = vsub.f32 1.0, %v871
    %v877 = vmul.f32 %v876, %v875
    %v878 = vmul.f32 %v871, %v756
    %v879 = vadd.f32 %v877, %v878
    %v880 = vpack.c.bf16 %v879, %v879
    %s881 = scalar_lea.vmem [#allocation3], 16
    %882 = vst [vmem:[%s881] sm:$0xf] %v880
    %s883 = sadd.s32 %s391, 4
    %p884 = scmp.eq.s32.totalorder %s883, 7
    // Predicated region
    $region58: #{text_generator_forward.1} parent=36 // pred_check
      %p885 = pneg %p884
    $region59: #{text_generator_forward.1} parent=36 // pred_check_branch
      %887 = sbr.rel (%p885) target = $region61
    $region60: #{text_generator_forward.1} parent=36 // pred_region
      %888 = vst [vmem:[%s9] sm:$0xff] %v879
    $region61: #{text_generator_forward.1} parent=36 // pred_fallthru
      _
    %s889 = smul.u32 5, 3
    %s890 = smul.addr %s889, 8
    %s891 = scalar_lea.vmem [#allocation4], %s890
    %v892 = vld [vmem:[%s891] sm:$0xff]
    %v893 = vld [vmem:[%s891 + $0x8] sm:$0xff]
    %v894 = vld [vmem:[%s891 + $0x10] sm:$0xff]
    %895 = vmatpush.msra.mxu0 %v267
    %896 = vmatpush.msra.mxu0 %v264
    %897 = vmatpush.msra.mxu0 %v261
    %898 = vmatpush.msra.mxu0 %v258
    %899 = vmatpush.msra.mxu0 %v255
    %900 = vmatpush.msra.mxu0 %v252
    %901 = vmatpush.msra.mxu0 %v249
    %902 = vmatpush.msra.mxu0 %v246
    %903 = vmatpush.msra.mxu0 %v243
    %904 = vmatpush.msra.mxu0 %v240
    %905 = vmatpush.msra.mxu0 %v237
    %906 = vmatpush.msra.mxu0 %v234
    %907 = vmatpush.msra.mxu0 %v231
    %908 = vmatpush.msra.mxu0 %v228
    %909 = vmatpush.msra.mxu0 %v225
    %910 = vmatpush.msra.mxu0 %v222
    %911 = vmatmul.f32.gmra.mxu0 %v879
    %v912 = vpop.f32.mrf.mxu0
    %v913 = vadd.f32 0.0, %v912
    %914 = vdwg.mxu0
    %915 = vmatpush.msra.mxu0 %v268
    %916 = vmatpush.msra.mxu0 %v265
    %917 = vmatpush.msra.mxu0 %v262
    %918 = vmatpush.msra.mxu0 %v259
    %919 = vmatpush.msra.mxu0 %v256
    %920 = vmatpush.msra.mxu0 %v253
    %921 = vmatpush.msra.mxu0 %v250
    %922 = vmatpush.msra.mxu0 %v247
    %923 = vmatpush.msra.mxu0 %v244
    %924 = vmatpush.msra.mxu0 %v241
    %925 = vmatpush.msra.mxu0 %v238
    %926 = vmatpush.msra.mxu0 %v235
    %927 = vmatpush.msra.mxu0 %v232
    %928 = vmatpush.msra.mxu0 %v229
    %929 = vmatpush.msra.mxu0 %v226
    %930 = vmatpush.msra.mxu0 %v223
    %931 = vmatmul.f32.gmra.mxu0 %v879
    %v932 = vpop.f32.mrf.mxu0
    %v933 = vadd.f32 0.0, %v932
    %934 = vdwg.mxu0
    %935 = vmatpush.msra.mxu0 %v269
    %936 = vmatpush.msra.mxu0 %v266
    %937 = vmatpush.msra.mxu0 %v263
    %938 = vmatpush.msra.mxu0 %v260
    %939 = vmatpush.msra.mxu0 %v257
    %940 = vmatpush.msra.mxu0 %v254
    %941 = vmatpush.msra.mxu0 %v251
    %942 = vmatpush.msra.mxu0 %v248
    %943 = vmatpush.msra.mxu0 %v245
    %944 = vmatpush.msra.mxu0 %v242
    %945 = vmatpush.msra.mxu0 %v239
    %946 = vmatpush.msra.mxu0 %v236
    %947 = vmatpush.msra.mxu0 %v233
    %948 = vmatpush.msra.mxu0 %v230
    %949 = vmatpush.msra.mxu0 %v227
    %950 = vmatpush.msra.mxu0 %v224
    %951 = vmatmul.f32.gmra.mxu0 %v879
    %v952 = vpop.f32.mrf.mxu0
    %v953 = vadd.f32 0.0, %v952
    %954 = vdwg.mxu0
    %v955 = vadd.f32 %v892, %v913
    %v956 = vxor.u32 %v955, 2147483648
    %v957 = vmul.f32 %v956, 1.442695
    %v958 = vpow.pop %v957
    %v959 = vadd.f32 %v958, 1.0
    %v960 = vrcp.pop %v959
    %v961 = vmul.f32 %v959, %v960
    %v962 = vsub.f32 1.0, %v961
    %v963 = vmul.f32 %v960, %v962
    %v964 = vadd.f32 %v960, %v963
    %vm965 = vweird.f32 %v959
    %vm966 = vweird.f32 %v960
    %vm967 = vmor %vm965, %vm966
    %v968 = vsel %vm967, %v960, %v964
    %v969 = vand.u32 2147483647, %v959
    %vm970 = vcmp.eq.f32.partialorder %v969, 8.507059e+37
    %v971 = vand.u32 %v959, 2147483648
    %v972 = vor.u32 1.1754944e-38, %v971
    %v973 = vsel %vm970, %v972, %v968
    %v974 = vmul.f32 1.0, %v973
    %v975 = vadd.f32 %v893, %v933
    %v976 = vxor.u32 %v975, 2147483648
    %v977 = vmul.f32 %v976, 1.442695
    %v978 = vpow.pop %v977
    %v979 = vadd.f32 %v978, 1.0
    %v980 = vrcp.pop %v979
    %v981 = vmul.f32 %v979, %v980
    %v982 = vsub.f32 1.0, %v981
    %v983 = vmul.f32 %v980, %v982
    %v984 = vadd.f32 %v980, %v983
    %vm985 = vweird.f32 %v979
    %vm986 = vweird.f32 %v980
    %vm987 = vmor %vm985, %vm986
    %v988 = vsel %vm987, %v980, %v984
    %v989 = vand.u32 2147483647, %v979
    %vm990 = vcmp.eq.f32.partialorder %v989, 8.507059e+37
    %v991 = vand.u32 %v979, 2147483648
    %v992 = vor.u32 1.1754944e-38, %v991
    %v993 = vsel %vm990, %v992, %v988
    %v994 = vmul.f32 1.0, %v993
    %v995 = vadd.f32 %v953, %v272
    %v996 = vmul.f32 %v974, %v995
    %v997 = vadd.f32 %v894, %v996
    %v998 = vtanh.pop %v997
    %v999 = vsub.f32 1.0, %v994
    %v1000 = vmul.f32 %v999, %v998
    %v1001 = vmul.f32 %v994, %v879
    %v1002 = vadd.f32 %v1000, %v1001
    %v1003 = vpack.c.bf16 %v1002, %v1002
    %s1004 = scalar_lea.vmem [#allocation3], 20
    %1005 = vst [vmem:[%s1004] sm:$0xf] %v1003
    %s1006 = sadd.s32 %s391, 5
    %p1007 = scmp.eq.s32.totalorder %s1006, 7
    // Predicated region
    $region62: #{text_generator_forward.1} parent=36 // pred_check
      %p1008 = pneg %p1007
    $region63: #{text_generator_forward.1} parent=36 // pred_check_branch
      %1010 = sbr.rel (%p1008) target = $region65
    $region64: #{text_generator_forward.1} parent=36 // pred_region
      %1011 = vst [vmem:[%s9] sm:$0xff] %v1002
    $region65: #{text_generator_forward.1} parent=36 // pred_fallthru
      _
    %s1012 = smul.u32 6, 3
    %s1013 = smul.addr %s1012, 8
    %s1014 = scalar_lea.vmem [#allocation4], %s1013
    %v1015 = vld [vmem:[%s1014] sm:$0xff]
    %v1016 = vld [vmem:[%s1014 + $0x8] sm:$0xff]
    %v1017 = vld [vmem:[%s1014 + $0x10] sm:$0xff]
    %1018 = vmatpush.msra.mxu0 %v267
    %1019 = vmatpush.msra.mxu0 %v264
    %1020 = vmatpush.msra.mxu0 %v261
    %1021 = vmatpush.msra.mxu0 %v258
    %1022 = vmatpush.msra.mxu0 %v255
    %1023 = vmatpush.msra.mxu0 %v252
    %1024 = vmatpush.msra.mxu0 %v249
    %1025 = vmatpush.msra.mxu0 %v246
    %1026 = vmatpush.msra.mxu0 %v243
    %1027 = vmatpush.msra.mxu0 %v240
    %1028 = vmatpush.msra.mxu0 %v237
    %1029 = vmatpush.msra.mxu0 %v234
    %1030 = vmatpush.msra.mxu0 %v231
    %1031 = vmatpush.msra.mxu0 %v228
    %1032 = vmatpush.msra.mxu0 %v225
    %1033 = vmatpush.msra.mxu0 %v222
    %1034 = vmatmul.f32.gmra.mxu0 %v1002
    %v1035 = vpop.f32.mrf.mxu0
    %v1036 = vadd.f32 0.0, %v1035
    %1037 = vdwg.mxu0
    %1038 = vmatpush.msra.mxu0 %v268
    %1039 = vmatpush.msra.mxu0 %v265
    %1040 = vmatpush.msra.mxu0 %v262
    %1041 = vmatpush.msra.mxu0 %v259
    %1042 = vmatpush.msra.mxu0 %v256
    %1043 = vmatpush.msra.mxu0 %v253
    %1044 = vmatpush.msra.mxu0 %v250
    %1045 = vmatpush.msra.mxu0 %v247
    %1046 = vmatpush.msra.mxu0 %v244
    %1047 = vmatpush.msra.mxu0 %v241
    %1048 = vmatpush.msra.mxu0 %v238
    %1049 = vmatpush.msra.mxu0 %v235
    %1050 = vmatpush.msra.mxu0 %v232
    %1051 = vmatpush.msra.mxu0 %v229
    %1052 = vmatpush.msra.mxu0 %v226
    %1053 = vmatpush.msra.mxu0 %v223
    %1054 = vmatmul.f32.gmra.mxu0 %v1002
    %v1055 = vpop.f32.mrf.mxu0
    %v1056 = vadd.f32 0.0, %v1055
    %1057 = vdwg.mxu0
    %1058 = vmatpush.msra.mxu0 %v269
    %1059 = vmatpush.msra.mxu0 %v266
    %1060 = vmatpush.msra.mxu0 %v263
    %1061 = vmatpush.msra.mxu0 %v260
    %1062 = vmatpush.msra.mxu0 %v257
    %1063 = vmatpush.msra.mxu0 %v254
    %1064 = vmatpush.msra.mxu0 %v251
    %1065 = vmatpush.msra.mxu0 %v248
    %1066 = vmatpush.msra.mxu0 %v245
    %1067 = vmatpush.msra.mxu0 %v242
    %1068 = vmatpush.msra.mxu0 %v239
    %1069 = vmatpush.msra.mxu0 %v236
    %1070 = vmatpush.msra.mxu0 %v233
    %1071 = vmatpush.msra.mxu0 %v230
    %1072 = vmatpush.msra.mxu0 %v227
    %1073 = vmatpush.msra.mxu0 %v224
    %1074 = vmatmul.f32.gmra.mxu0 %v1002
    %v1075 = vpop.f32.mrf.mxu0
    %v1076 = vadd.f32 0.0, %v1075
    %1077 = vdwg.mxu0
    %v1078 = vadd.f32 %v1015, %v1036
    %v1079 = vxor.u32 %v1078, 2147483648
    %v1080 = vmul.f32 %v1079, 1.442695
    %v1081 = vpow.pop %v1080
    %v1082 = vadd.f32 %v1081, 1.0
    %v1083 = vrcp.pop %v1082
    %v1084 = vmul.f32 %v1082, %v1083
    %v1085 = vsub.f32 1.0, %v1084
    %v1086 = vmul.f32 %v1083, %v1085
    %v1087 = vadd.f32 %v1083, %v1086
    %vm1088 = vweird.f32 %v1082
    %vm1089 = vweird.f32 %v1083
    %vm1090 = vmor %vm1088, %vm1089
    %v1091 = vsel %vm1090, %v1083, %v1087
    %v1092 = vand.u32 2147483647, %v1082
    %vm1093 = vcmp.eq.f32.partialorder %v1092, 8.507059e+37
    %v1094 = vand.u32 %v1082, 2147483648
    %v1095 = vor.u32 1.1754944e-38, %v1094
    %v1096 = vsel %vm1093, %v1095, %v1091
    %v1097 = vmul.f32 1.0, %v1096
    %v1098 = vadd.f32 %v1016, %v1056
    %v1099 = vxor.u32 %v1098, 2147483648
    %v1100 = vmul.f32 %v1099, 1.442695
    %v1101 = vpow.pop %v1100
    %v1102 = vadd.f32 %v1101, 1.0
    %v1103 = vrcp.pop %v1102
    %v1104 = vmul.f32 %v1102, %v1103
    %v1105 = vsub.f32 1.0, %v1104
    %v1106 = vmul.f32 %v1103, %v1105
    %v1107 = vadd.f32 %v1103, %v1106
    %vm1108 = vweird.f32 %v1102
    %vm1109 = vweird.f32 %v1103
    %vm1110 = vmor %vm1108, %vm1109
    %v1111 = vsel %vm1110, %v1103, %v1107
    %v1112 = vand.u32 2147483647, %v1102
    %vm1113 = vcmp.eq.f32.partialorder %v1112, 8.507059e+37
    %v1114 = vand.u32 %v1102, 2147483648
    %v1115 = vor.u32 1.1754944e-38, %v1114
    %v1116 = vsel %vm1113, %v1115, %v1111
    %v1117 = vmul.f32 1.0, %v1116
    %v1118 = vadd.f32 %v1076, %v272
    %v1119 = vmul.f32 %v1097, %v1118
    %v1120 = vadd.f32 %v1017, %v1119
    %v1121 = vtanh.pop %v1120
    %v1122 = vsub.f32 1.0, %v1117
    %v1123 = vmul.f32 %v1122, %v1121
    %v1124 = vmul.f32 %v1117, %v1002
    %v1125 = vadd.f32 %v1123, %v1124
    %v1126 = vpack.c.bf16 %v1125, %v1125
    %s1127 = scalar_lea.vmem [#allocation3], 24
    %1128 = vst [vmem:[%s1127] sm:$0xf] %v1126
    %s1129 = sadd.s32 %s391, 6
    %p1130 = scmp.eq.s32.totalorder %s1129, 7
    // Predicated region
    $region66: #{text_generator_forward.1} parent=36 // pred_check
      %p1131 = pneg %p1130
    $region67: #{text_generator_forward.1} parent=36 // pred_check_branch
      %1133 = sbr.rel (%p1131) target = $region69
    $region68: #{text_generator_forward.1} parent=36 // pred_region
      %1134 = vst [vmem:[%s9] sm:$0xff] %v1125
    $region69: #{text_generator_forward.1} parent=36 // pred_fallthru
      _
    %s1135 = smul.u32 7, 3
    %s1136 = smul.addr %s1135, 8
    %s1137 = scalar_lea.vmem [#allocation4], %s1136
    %v1138 = vld [vmem:[%s1137] sm:$0xff]
    %v1139 = vld [vmem:[%s1137 + $0x8] sm:$0xff]
    %v1140 = vld [vmem:[%s1137 + $0x10] sm:$0xff]
    %1141 = vmatpush.msra.mxu0 %v267
    %1142 = vmatpush.msra.mxu0 %v264
    %1143 = vmatpush.msra.mxu0 %v261
    %1144 = vmatpush.msra.mxu0 %v258
    %1145 = vmatpush.msra.mxu0 %v255
    %1146 = vmatpush.msra.mxu0 %v252
    %1147 = vmatpush.msra.mxu0 %v249
    %1148 = vmatpush.msra.mxu0 %v246
    %1149 = vmatpush.msra.mxu0 %v243
    %1150 = vmatpush.msra.mxu0 %v240
    %1151 = vmatpush.msra.mxu0 %v237
    %1152 = vmatpush.msra.mxu0 %v234
    %1153 = vmatpush.msra.mxu0 %v231
    %1154 = vmatpush.msra.mxu0 %v228
    %1155 = vmatpush.msra.mxu0 %v225
    %1156 = vmatpush.msra.mxu0 %v222
    %1157 = vmatmul.f32.gmra.mxu0 %v1125
    %v1158 = vpop.f32.mrf.mxu0
    %v1159 = vadd.f32 0.0, %v1158
    %1160 = vdwg.mxu0
    %1161 = vmatpush.msra.mxu0 %v268
    %1162 = vmatpush.msra.mxu0 %v265
    %1163 = vmatpush.msra.mxu0 %v262
    %1164 = vmatpush.msra.mxu0 %v259
    %1165 = vmatpush.msra.mxu0 %v256
    %1166 = vmatpush.msra.mxu0 %v253
    %1167 = vmatpush.msra.mxu0 %v250
    %1168 = vmatpush.msra.mxu0 %v247
    %1169 = vmatpush.msra.mxu0 %v244
    %1170 = vmatpush.msra.mxu0 %v241
    %1171 = vmatpush.msra.mxu0 %v238
    %1172 = vmatpush.msra.mxu0 %v235
    %1173 = vmatpush.msra.mxu0 %v232
    %1174 = vmatpush.msra.mxu0 %v229
    %1175 = vmatpush.msra.mxu0 %v226
    %1176 = vmatpush.msra.mxu0 %v223
    %1177 = vmatmul.f32.gmra.mxu0 %v1125
    %v1178 = vpop.f32.mrf.mxu0
    %v1179 = vadd.f32 0.0, %v1178
    %1180 = vdwg.mxu0
    %1181 = vmatpush.msra.mxu0 %v269
    %1182 = vmatpush.msra.mxu0 %v266
    %1183 = vmatpush.msra.mxu0 %v263
    %1184 = vmatpush.msra.mxu0 %v260
    %1185 = vmatpush.msra.mxu0 %v257
    %1186 = vmatpush.msra.mxu0 %v254
    %1187 = vmatpush.msra.mxu0 %v251
    %1188 = vmatpush.msra.mxu0 %v248
    %1189 = vmatpush.msra.mxu0 %v245
    %1190 = vmatpush.msra.mxu0 %v242
    %1191 = vmatpush.msra.mxu0 %v239
    %1192 = vmatpush.msra.mxu0 %v236
    %1193 = vmatpush.msra.mxu0 %v233
    %1194 = vmatpush.msra.mxu0 %v230
    %1195 = vmatpush.msra.mxu0 %v227
    %1196 = vmatpush.msra.mxu0 %v224
    %1197 = vmatmul.f32.gmra.mxu0 %v1125
    %v1198 = vpop.f32.mrf.mxu0
    %v1199 = vadd.f32 0.0, %v1198
    %1200 = vdwg.mxu0
    %v1201 = vadd.f32 %v1138, %v1159
    %v1202 = vxor.u32 %v1201, 2147483648
    %v1203 = vmul.f32 %v1202, 1.442695
    %v1204 = vpow.pop %v1203
    %v1205 = vadd.f32 %v1204, 1.0
    %v1206 = vrcp.pop %v1205
    %v1207 = vmul.f32 %v1205, %v1206
    %v1208 = vsub.f32 1.0, %v1207
    %v1209 = vmul.f32 %v1206, %v1208
    %v1210 = vadd.f32 %v1206, %v1209
    %vm1211 = vweird.f32 %v1205
    %vm1212 = vweird.f32 %v1206
    %vm1213 = vmor %vm1211, %vm1212
    %v1214 = vsel %vm1213, %v1206, %v1210
    %v1215 = vand.u32 2147483647, %v1205
    %vm1216 = vcmp.eq.f32.partialorder %v1215, 8.507059e+37
    %v1217 = vand.u32 %v1205, 2147483648
    %v1218 = vor.u32 1.1754944e-38, %v1217
    %v1219 = vsel %vm1216, %v1218, %v1214
    %v1220 = vmul.f32 1.0, %v1219
    %v1221 = vadd.f32 %v1139, %v1179
    %v1222 = vxor.u32 %v1221, 2147483648
    %v1223 = vmul.f32 %v1222, 1.442695
    %v1224 = vpow.pop %v1223
    %v1225 = vadd.f32 %v1224, 1.0
    %v1226 = vrcp.pop %v1225
    %v1227 = vmul.f32 %v1225, %v1226
    %v1228 = vsub.f32 1.0, %v1227
    %v1229 = vmul.f32 %v1226, %v1228
    %v1230 = vadd.f32 %v1226, %v1229
    %vm1231 = vweird.f32 %v1225
    %vm1232 = vweird.f32 %v1226
    %vm1233 = vmor %vm1231, %vm1232
    %v1234 = vsel %vm1233, %v1226, %v1230
    %v1235 = vand.u32 2147483647, %v1225
    %vm1236 = vcmp.eq.f32.partialorder %v1235, 8.507059e+37
    %v1237 = vand.u32 %v1225, 2147483648
    %v1238 = vor.u32 1.1754944e-38, %v1237
    %v1239 = vsel %vm1236, %v1238, %v1234
    %v1240 = vmul.f32 1.0, %v1239
    %v1241 = vadd.f32 %v1199, %v272
    %v1242 = vmul.f32 %v1220, %v1241
    %v1243 = vadd.f32 %v1140, %v1242
    %v1244 = vtanh.pop %v1243
    %v1245 = vsub.f32 1.0, %v1240
    %v1246 = vmul.f32 %v1245, %v1244
    %v1247 = vmul.f32 %v1240, %v1125
    %v1248 = vadd.f32 %v1246, %v1247
    %v1249 = vpack.c.bf16 %v1248, %v1248
    %s1250 = scalar_lea.vmem [#allocation3], 28
    %1251 = vst [vmem:[%s1250] sm:$0xf] %v1249
    %s1252 = sadd.s32 %s391, 7
    %p1253 = scmp.eq.s32.totalorder %s1252, 7
    // Predicated region
    $region70: #{text_generator_forward.1} parent=36 // pred_check
      %p1254 = pneg %p1253
    $region71: #{text_generator_forward.1} parent=36 // pred_check_branch
      %1256 = sbr.rel (%p1254) target = $region73
    $region72: #{text_generator_forward.1} parent=36 // pred_region
      %1257 = vst [vmem:[%s9] sm:$0xff] %v1248
    $region73: #{text_generator_forward.1} parent=36 // pred_fallthru
      _
    %1258 = vst [vmem:[#allocation2] sm:$0xff] %v1248
  $region37: #{text_generator_forward.1} parent=0 // pred_fallthru
    _
  %v1259 = vld [vmem:[#allocation3] sm:$0xf]
  %v1260 = vld [vmem:[#allocation3 + $0x4] sm:$0xf]
  %v1261 = vld [vmem:[#allocation3 + $0x8] sm:$0xf]
  %v1262 = vld [vmem:[#allocation3 + $0xc] sm:$0xf]
  %v1263 = vld [vmem:[#allocation3 + $0x10] sm:$0xf]
  %v1264 = vld [vmem:[#allocation3 + $0x14] sm:$0xf]
  %v1265 = vld [vmem:[#allocation3 + $0x18] sm:$0xf]
  %v1266 = vld [vmem:[#allocation3 + $0x1c] sm:$0xf]
  %v1267 = vld [vmem:[%s6] sm:$0xf]
  %v1268 = vld [vmem:[%s6 + $0x4] sm:$0xf]
  %v1269 = vld [vmem:[%s6 + $0x8] sm:$0xf]
  %v1270 = vld [vmem:[%s6 + $0xc] sm:$0xf]
  %v1271 = vld [vmem:[%s6 + $0x10] sm:$0xf]
  %v1272 = vld [vmem:[%s6 + $0x14] sm:$0xf]
  %v1273 = vld [vmem:[%s6 + $0x18] sm:$0xf]
  %v1274 = vld [vmem:[%s6 + $0x1c] sm:$0xf]
  %v1275 = vld [vmem:[%s6 + $0x20] sm:$0xf]
  %v1276 = vld [vmem:[%s6 + $0x24] sm:$0xf]
  %v1277 = vld [vmem:[%s6 + $0x28] sm:$0xf]
  %v1278 = vld [vmem:[%s6 + $0x2c] sm:$0xf]
  %v1279 = vld [vmem:[%s6 + $0x30] sm:$0xf]
  %v1280 = vld [vmem:[%s6 + $0x34] sm:$0xf]
  %v1281 = vld [vmem:[%s6 + $0x38] sm:$0xf]
  %v1282 = vld [vmem:[%s6 + $0x3c] sm:$0xf]
  %v1283 = vld [vmem:[%s7] sm:$0x1]
  %v1285 = vperm.slane %v1283, 0
  %v1295 = vunpack.c.l.b16 %v1259
  %v1296 = vunpack.c.l.b16 %v1260
  %v1297 = vunpack.c.l.b16 %v1261
  %v1298 = vunpack.c.l.b16 %v1262
  %v1299 = vunpack.c.l.b16 %v1263
  %v1300 = vunpack.c.l.b16 %v1264
  %v1301 = vunpack.c.l.b16 %v1265
  %v1302 = vunpack.c.l.b16 %v1266
  %v1303 = vpack.c.b16 %v1296, %v1295
  %v1304 = vpack.c.b16 %v1298, %v1297
  %v1305 = vpack.c.b16 %v1300, %v1299
  %v1306 = vpack.c.b16 %v1302, %v1301
  %v1327 = vunpack.c.l.b16 %v1267
  %v1328 = vunpack.c.l.b16 %v1268
  %v1329 = vunpack.c.l.b16 %v1269
  %v1330 = vunpack.c.l.b16 %v1270
  %v1331 = vunpack.c.l.b16 %v1271
  %v1332 = vunpack.c.l.b16 %v1272
  %v1333 = vunpack.c.l.b16 %v1273
  %v1334 = vunpack.c.l.b16 %v1274
  %v1335 = vunpack.c.l.b16 %v1275
  %v1336 = vunpack.c.l.b16 %v1276
  %v1337 = vunpack.c.l.b16 %v1277
  %v1338 = vunpack.c.l.b16 %v1278
  %v1339 = vunpack.c.l.b16 %v1279
  %v1340 = vunpack.c.l.b16 %v1280
  %v1341 = vunpack.c.l.b16 %v1281
  %v1342 = vunpack.c.l.b16 %v1282
  %v1343 = vpack.c.b16 %v1328, %v1327
  %v1344 = vpack.c.b16 %v1330, %v1329
  %v1345 = vpack.c.b16 %v1332, %v1331
  %v1346 = vpack.c.b16 %v1334, %v1333
  %v1347 = vpack.c.b16 %v1336, %v1335
  %v1348 = vpack.c.b16 %v1338, %v1337
  %v1349 = vpack.c.b16 %v1340, %v1339
  %v1350 = vpack.c.b16 %v1342, %v1341
  %1359 = vmatpush.bf16.msra.mxu0 %v1350
  %1360 = vmatpush.bf16.msra.mxu0 %v1349
  %1361 = vmatpush.bf16.msra.mxu0 %v1348
  %1362 = vmatpush.bf16.msra.mxu0 %v1347
  %1363 = vmatpush.bf16.msra.mxu0 %v1346
  %1364 = vmatpush.bf16.msra.mxu0 %v1345
  %1365 = vmatpush.bf16.msra.mxu0 %v1344
  %1366 = vmatpush.bf16.msra.mxu0 %v1343
  %1367 = vmatmul.bf16.gmra.mxu0 %v1303
  %v1368 = vpop.f32.mrf.mxu0
  %v1369 = vadd.f32 %v1285, %v1368
  %v1370 = vpop.f32.mrf.mxu0
  %v1371 = vadd.f32 %v1285, %v1370
  %1372 = vmatmul.bf16.gmra.mxu0 %v1304
  %v1373 = vpop.f32.mrf.mxu0
  %v1374 = vadd.f32 %v1285, %v1373
  %v1375 = vpop.f32.mrf.mxu0
  %v1376 = vadd.f32 %v1285, %v1375
  %1377 = vmatmul.bf16.gmra.mxu0 %v1305
  %v1378 = vpop.f32.mrf.mxu0
  %v1379 = vadd.f32 %v1285, %v1378
  %v1380 = vpop.f32.mrf.mxu0
  %v1381 = vadd.f32 %v1285, %v1380
  %1382 = vmatmul.bf16.gmra.mxu0 %v1306
  %v1383 = vpop.f32.mrf.mxu0
  %v1384 = vadd.f32 %v1285, %v1383
  %v1385 = vpop.f32.mrf.mxu0
  %v1386 = vadd.f32 %v1285, %v1385
  %1387 = vdwg.mxu0
  %1388 = vst [vmem:[%s8] sm:$0xff] %v1369
  %1389 = vst [vmem:[%s8 + $0x8] sm:$0xff] %v1371
  %1390 = vst [vmem:[%s8 + $0x10] sm:$0xff] %v1374
  %1391 = vst [vmem:[%s8 + $0x18] sm:$0xff] %v1376
  %1392 = vst [vmem:[%s8 + $0x20] sm:$0xff] %v1379
  %1393 = vst [vmem:[%s8 + $0x28] sm:$0xff] %v1381
  %1394 = vst [vmem:[%s8 + $0x30] sm:$0xff] %v1384
  %1395 = vst [vmem:[%s8 + $0x38] sm:$0xff] %v1386
  // Predicated region
  $region74: #{text_generator_forward.1} parent=0 // pred_check
    _
  $region75: #{text_generator_forward.1} parent=0 // pred_check_branch
    %1397 = sbr.rel (0) target = $region77
  $region76: #{text_generator_forward.1} parent=0 // pred_region
    _
  $region77: #{text_generator_forward.1} parent=0 // pred_fallthru
    _
  // Predicated region
  $region78: #{text_generator_forward.1} parent=0 // pred_check
    _
  $region79: #{text_generator_forward.1} parent=0 // pred_check_branch
    %1399 = sbr.rel (0) target = $region81
  $region80: #{text_generator_forward.1} parent=0 // pred_region
    _
  $region81: #{text_generator_forward.1} parent=0 // pred_fallthru
    _
  // Predicated region
  $region82: #{text_generator_forward.1} parent=0 // pred_check
    _
  $region83: #{text_generator_forward.1} parent=0 // pred_check_branch
    %1401 = sbr.rel (0) target = $region85
  $region84: #{text_generator_forward.1} parent=0 // pred_region
    _
  $region85: #{text_generator_forward.1} parent=0 // pred_fallthru
    _
  // Predicated region
  $region86: #{text_generator_forward.1} parent=0 // pred_check
    _
  $region87: #{text_generator_forward.1} parent=0 // pred_check_branch
    %1403 = sbr.rel (0) target = $region89
  $region88: #{text_generator_forward.1} parent=0 // pred_region
    _
  $region89: #{text_generator_forward.1} parent=0 // pred_fallthru
    _

</llo_original>
